<compile_context>
chip_gen: v5e
topology: v5e:2x2
jax: 0.10.0
libtpu: 0.0.40
codegen_flags: <defaults>
</compile_context>

<pallas_src>
from functools import partial

import jax
import jax.numpy as jnp
from jax import lax
from jax.experimental import pallas as pl
from jax.experimental.pallas import tpu as pltpu

LN_EPS = 1e-5          # nn.LayerNorm default eps
F32 = jnp.float32
BF16 = jnp.bfloat16


# ----------------------- Kernel A: K / V projections (head-major, bf16) -----------------------
def _kv_proj_kernel(c_ref, wk_ref, wv_ref, k_ref, v_ref):
    c = c_ref[0].astype(BF16)                                   # (tm, Dc)
    H = k_ref.shape[1]
    for h in range(H):                                          # per-head weight slabs -> MXU emits
        k_ref[0, h] = jnp.dot(c, wk_ref[h],                     # the (tm, Dh) layout directly
                              preferred_element_type=F32).astype(k_ref.dtype)
        v_ref[0, h] = jnp.dot(c, wv_ref[h],
                              preferred_element_type=F32).astype(v_ref.dtype)


# ------- Kernel B: fused LayerNorm + Q-proj + flash attention + fused output projection -------
def _attn_kernel(x_ref, g_ref, b_ref, wq_ref, k_ref, v_ref, wo_ref, o_ref,
                 q_sc, m_sc, l_sc, acc_sc, *, eps, kv_valid, mask_kv):
    ki = pl.program_id(2)

    @pl.when(ki == 0)
    def _init():
        # LayerNorm + Q projection, once per (b, q-tile); scale already folded into Wq.
        x = x_ref[0].astype(F32)                                # (tq, D)
        mu = jnp.mean(x, axis=-1, keepdims=True)
        xc = x - mu
        var = jnp.mean(xc * xc, axis=-1, keepdims=True)         # biased var (torch LN)
        xn = xc * lax.rsqrt(var + eps) * g_ref[...] + b_ref[...]
        qf = jnp.dot(xn.astype(BF16), wq_ref[...],
                     preferred_element_type=F32)                # (tq, H*Dh)
        H, Dh = q_sc.shape[0], q_sc.shape[2]
        for h in range(H):                                      # head split once per q tile
            q_sc[h] = qf[:, h * Dh:(h + 1) * Dh].astype(q_sc.dtype)
        m_sc[...] = jnp.full_like(m_sc, -jnp.inf)
        l_sc[...] = jnp.zeros_like(l_sc)
        acc_sc[...] = jnp.zeros_like(acc_sc)

    q = q_sc[...]                                               # (H, tq, Dh) bf16
    k = k_ref[0]                                                # (H, tk, Dh) bf16
    v = v_ref[0]                                                # (H, tk, Dh) bf16

    s = jnp.einsum('hqd,hkd->hqk', q, k, preferred_element_type=F32)   # (H, tq, tk) f32
    if mask_kv:                                                 # static flag: only when J padded
        tk = k.shape[1]
        col = ki * tk + lax.broadcasted_iota(jnp.int32, (1, tk), 1)
        s = jnp.where(col < kv_valid, s, -1e30)

    m_prev = m_sc[...]
    m_new = jnp.maximum(m_prev, jnp.max(s, axis=-1, keepdims=True))
    alpha = jnp.exp(m_prev - m_new)
    p = jnp.exp(s - m_new)
    l_sc[...] = alpha * l_sc[...] + jnp.sum(p, axis=-1, keepdims=True)
    acc_sc[...] = alpha * acc_sc[...] + jnp.einsum(
        'hqk,hkd->hqd', p.astype(BF16), v, preferred_element_type=F32)
    m_sc[...] = m_new

    @pl.when(ki == pl.num_programs(2) - 1)
    def _finalize():
        out = acc_sc[...] * pl.reciprocal(l_sc[...], approx=True)       # (H, tq, Dh) f32
        H = out.shape[0]
        res = jnp.zeros(o_ref.shape[1:], F32)                           # (tq, D) lane-dense
        for h in range(H):                                              # fused Wo: sum_h out_h @ Wo_h
            res = res + jnp.dot(out[h].astype(BF16), wo_ref[h],
                                preferred_element_type=F32)
        o_ref[0] = res.astype(o_ref.dtype)


# -------------------------------------------- Wrapper --------------------------------------------
def _round_up(n, m):
    return ((n + m - 1) // m) * m


def _choose_tile(n, target):
    target = max(8, (target // 8) * 8)
    if n >= target:
        return target
    return _round_up(n, 8)


def _pad_to(a, axis, new_len):
    pad = new_len - a.shape[axis]
    if pad == 0:
        return a
    widths = [(0, 0)] * a.ndim
    widths[axis] = (0, pad)
    return jnp.pad(a, widths)


def attention_forward(x, ln_g, ln_b, wq, wkv, wo, null_kv, *, heads, dim_head,
                      context=None, mask=None, causal=False, q_tile=256, kv_tile=256):
    """x: (B, N, D).  Weights in PyTorch layout: wq (inner, D), wkv (2*inner, Dc),
    wo (D, inner), null_kv (H, 2*num_null_kv, Dh)."""
    if mask is not None or causal:
        # TODO(synk): padding-mask / causal-mask variants not implemented in the Pallas path.
        raise NotImplementedError("mask/causal not supported in this Pallas kernel")

    B, N, D = x.shape
    inner = heads * dim_head
    kv_src = x if context is None else context                  # NOTE: raw (un-normalized) x
    M, Dc = kv_src.shape[1], kv_src.shape[2]
    scale = dim_head ** -0.5

    x = x.astype(F32)
    kv_src = kv_src.astype(F32)

    # One-time weight prep: softmax scale folded into Wq; bf16 MXU operands; head-major slabs.
    wq_t = (wq.T.astype(F32) * scale).astype(BF16)                                   # (D, inner)
    wk3 = wkv[:inner].T.astype(F32).reshape(Dc, heads, dim_head).transpose(1, 0, 2).astype(BF16)
    wv3 = wkv[inner:].T.astype(F32).reshape(Dc, heads, dim_head).transpose(1, 0, 2).astype(BF16)
    wo3 = wo.T.astype(F32).reshape(heads, dim_head, D).astype(BF16)                  # (H, Dh, D)
    g2 = ln_g.reshape(1, D).astype(F32)
    b2 = ln_b.reshape(1, D).astype(F32)

    # ---- tile selection + padding (keeps the aligned pipelined path for awkward N / M) ----
    tn = _choose_tile(N, q_tile)
    N_pad = _round_up(N, tn)
    x_p = _pad_to(x, 1, N_pad)

    tm = _choose_tile(M, kv_tile)
    M_pad = _round_up(M, tm)
    kv_p = _pad_to(kv_src, 1, M_pad)

    # ---- Kernel A: K / V projections, head-major bf16 intermediates ----
    k, v = pl.pallas_call(
        _kv_proj_kernel,
        out_shape=(jax.ShapeDtypeStruct((B, heads, M_pad, dim_head), BF16),
                   jax.ShapeDtypeStruct((B, heads, M_pad, dim_head), BF16)),
        grid=(B, M_pad // tm),
        in_specs=[
            pl.BlockSpec((1, tm, Dc), lambda b, i: (b, i, 0)),
            pl.BlockSpec((heads, Dc, dim_head), lambda b, i: (0, 0, 0)),
            pl.BlockSpec((heads, Dc, dim_head), lambda b, i: (0, 0, 0)),
        ],
        out_specs=(pl.BlockSpec((1, heads, tm, dim_head), lambda b, i: (b, 0, i, 0)),
                   pl.BlockSpec((1, heads, tm, dim_head), lambda b, i: (b, 0, i, 0))),
        compiler_params=pltpu.CompilerParams(
            dimension_semantics=("parallel", "parallel")),
    )(kv_p, wk3, wv3)

    # ---- prepend null k/v (tiny wrapper-side concat; num_null_kv defaults to 0) ----
    nn = null_kv.shape[1] // 2
    if nn > 0:
        nk = jnp.broadcast_to(null_kv[:, 0::2, :].astype(BF16)[None],
                              (B, heads, nn, dim_head))
        nv = jnp.broadcast_to(null_kv[:, 1::2, :].astype(BF16)[None],
                              (B, heads, nn, dim_head))
        k = jnp.concatenate([nk, k], axis=2)
        v = jnp.concatenate([nv, v], axis=2)

    kv_valid = nn + M                        # number of real (non-padded) kv columns
    J = nn + M_pad
    tj = _choose_tile(J, kv_tile)
    J_pad = _round_up(J, tj)
    k = _pad_to(k, 2, J_pad)
    v = _pad_to(v, 2, J_pad)
    mask_kv = kv_valid < J_pad               # static: mask padded kv columns inside the kernel

    # ---- Kernel B: fused LN + Q-proj + flash attention + fused output projection ----
    out = pl.pallas_call(
        partial(_attn_kernel, eps=LN_EPS, kv_valid=kv_valid, mask_kv=mask_kv),
        out_shape=jax.ShapeDtypeStruct((B, N_pad, D), F32),
        grid=(B, N_pad // tn, J_pad // tj),
        in_specs=[
            pl.BlockSpec((1, tn, D), lambda b, qi, ki: (b, qi, 0)),
            pl.BlockSpec((1, D), lambda b, qi, ki: (0, 0)),
            pl.BlockSpec((1, D), lambda b, qi, ki: (0, 0)),
            pl.BlockSpec((D, inner), lambda b, qi, ki: (0, 0)),
            pl.BlockSpec((1, heads, tj, dim_head), lambda b, qi, ki: (b, 0, ki, 0)),
            pl.BlockSpec((1, heads, tj, dim_head), lambda b, qi, ki: (b, 0, ki, 0)),
            pl.BlockSpec((heads, dim_head, D), lambda b, qi, ki: (0, 0, 0)),
        ],
        out_specs=pl.BlockSpec((1, tn, D), lambda b, qi, ki: (b, qi, 0)),
        scratch_shapes=[
            pltpu.VMEM((heads, tn, dim_head), BF16),   # q (computed once per q tile)
            pltpu.VMEM((heads, tn, 1), F32),           # running max
            pltpu.VMEM((heads, tn, 1), F32),           # running denom
            pltpu.VMEM((heads, tn, dim_head), F32),    # running numerator
        ],
        compiler_params=pltpu.CompilerParams(
            dimension_semantics=("parallel", "parallel", "arbitrary")),
    )(x_p, g2, b2, wq_t, k, v, wo3)

    return out[:, :N, :]


# --------------------------- Pure-JAX reference (for checking) ---------------------------
def _reference(x, ln_g, ln_b, wq, wkv, wo, null_kv, heads, dim_head, context=None):
    B, N, D = x.shape
    inner = heads * dim_head
    kv_input = x if context is None else context
    mu = x.mean(-1, keepdims=True)
    var = ((x - mu) ** 2).mean(-1, keepdims=True)
    xn = (x - mu) / jnp.sqrt(var + LN_EPS) * ln_g + ln_b
    q = xn @ wq.T
    kvp = kv_input @ wkv.T
    k, v = kvp[..., :inner], kvp[..., inner:]

    def split(t):
        return t.reshape(B, -1, heads, dim_head).transpose(0, 2, 1, 3)

    q = split(q) * dim_head ** -0.5
    k, v = split(k), split(v)
    nn = null_kv.shape[1] // 2
    if nn > 0:
        nk = jnp.broadcast_to(null_kv[:, 0::2, :][None], (B, heads, nn, dim_head))
        nv = jnp.broadcast_to(null_kv[:, 1::2, :][None], (B, heads, nn, dim_head))
        k = jnp.concatenate([nk, k], axis=2)
        v = jnp.concatenate([nv, v], axis=2)
    sim = jnp.einsum('bhid,bhjd->bhij', q, k)
    attn = jax.nn.softmax(sim, axis=-1)
    out = jnp.einsum('bhij,bhjd->bhid', attn, v)
    out = out.transpose(0, 2, 1, 3).reshape(B, N, inner)
    return out @ wo.T


if __name__ == "__main__":
    B, N, D = 2, 120, 256              # N=120 exercises the padding + kv-mask path
    heads, dim_head = 8, 64            # module defaults
    num_null_kv = 0                    # module default
    inner = heads * dim_head

    key = jax.random.PRNGKey(0)
    ks = jax.random.split(key, 7)
    x = jax.random.normal(ks[0], (B, N, D), dtype=jnp.float32)
    ln_g = 1.0 + 0.1 * jax.random.normal(ks[1], (D,), dtype=jnp.float32)
    ln_b = 0.05 * jax.random.normal(ks[2], (D,), dtype=jnp.float32)
    wq = jax.random.normal(ks[3], (inner, D), dtype=jnp.float32) * D ** -0.5
    wkv = jax.random.normal(ks[4], (2 * inner, D), dtype=jnp.float32) * D ** -0.5
    wo = jax.random.normal(ks[5], (D, inner), dtype=jnp.float32) * inner ** -0.5
    null_kv = jax.random.normal(ks[6], (heads, 2 * num_null_kv, dim_head), dtype=jnp.float32)

    out = attention_forward(x, ln_g, ln_b, wq, wkv, wo, null_kv,
                            heads=heads, dim_head=dim_head,
                            q_tile=64, kv_tile=64)   # small tiles -> multi-step flash path
    out = jax.block_until_ready(out)

    ref = _reference(x, ln_g, ln_b, wq, wkv, wo, null_kv, heads, dim_head)
    assert out.shape == (B, N, D), out.shape
    max_err = float(jnp.max(jnp.abs(out - ref)))
    # bf16 MXU operands -> loosened tolerance vs the f32 reference
    assert jnp.allclose(out, ref, atol=5e-2, rtol=5e-2), max_err

    print("KERNEL_OK")
</pallas_src>

<mosaic_0001>
module attributes {stable_mosaic.version = 11 : i64} {
  func.func @_kv_proj_kernel(%arg0: i32, %arg1: i32, %arg2: memref<1x64x256xf32, #tpu.memory_space<vmem>>, %arg3: memref<8x256x64xbf16, #tpu.memory_space<vmem>>, %arg4: memref<8x256x64xbf16, #tpu.memory_space<vmem>>, %arg5: memref<1x8x64x64xbf16, #tpu.memory_space<vmem>>, %arg6: memref<1x8x64x64xbf16, #tpu.memory_space<vmem>>) attributes {dimension_semantics = [#tpu.dimension_semantics<parallel>, #tpu.dimension_semantics<parallel>], iteration_bounds = array<i64: 2, 2>, scalar_prefetch = 0 : i64, scratch_operands = 0 : i64, tpu.core_type = #tpu.core_type<tc>, window_params = [{transform_indices = @transform_0, window_bounds = array<i64: 1, 64, 256>}, {pipeline_mode = #tpu.pipeline_mode<synchronous>, transform_indices = @transform_1, window_bounds = array<i64: 8, 256, 64>}, {pipeline_mode = #tpu.pipeline_mode<synchronous>, transform_indices = @transform_2, window_bounds = array<i64: 8, 256, 64>}, {transform_indices = @transform_3, window_bounds = array<i64: 1, 8, 64, 64>}, {transform_indices = @transform_4, window_bounds = array<i64: 1, 8, 64, 64>}]} {
    %c0 = arith.constant 0 : index
    %c0_0 = arith.constant 0 : index
    %c0_1 = arith.constant 0 : index
    %0 = vector.load %arg2[%c0, %c0_0, %c0_1] : memref<1x64x256xf32, #tpu.memory_space<vmem>>, vector<1x64x256xf32>
    %1 = vector.shape_cast %0 : vector<1x64x256xf32> to vector<64x256xf32>
    %2 = arith.truncf %1 : vector<64x256xf32> to vector<64x256xbf16>
    %c0_2 = arith.constant 0 : index
    %c0_3 = arith.constant 0 : index
    %c0_4 = arith.constant 0 : index
    %3 = vector.load %arg3[%c0_2, %c0_3, %c0_4] : memref<8x256x64xbf16, #tpu.memory_space<vmem>>, vector<1x256x64xbf16>
    %4 = vector.shape_cast %3 : vector<1x256x64xbf16> to vector<256x64xbf16>
    %cst = arith.constant dense<0.000000e+00> : vector<64x64xf32>
    %5 = tpu.matmul %2, %4, %cst {dimension_numbers = #tpu.dot_dimension_numbers<[1], [0], [0], [1], [0, 0, 1, 1], [], []>} : vector<64x256xbf16>, vector<256x64xbf16>, vector<64x64xf32> -> vector<64x64xf32>
    %6 = arith.truncf %5 : vector<64x64xf32> to vector<64x64xbf16>
    %c0_5 = arith.constant 0 : index
    %c0_6 = arith.constant 0 : index
    %c0_7 = arith.constant 0 : index
    %c0_8 = arith.constant 0 : index
    %7 = vector.load %arg5[%c0_5, %c0_6, %c0_7, %c0_8] : memref<1x8x64x64xbf16, #tpu.memory_space<vmem>>, vector<1x1x64x64xbf16>
    %8 = vector.shape_cast %7 : vector<1x1x64x64xbf16> to vector<64x64xbf16>
    %9 = vector.shape_cast %6 : vector<64x64xbf16> to vector<1x1x64x64xbf16>
    tpu.vector_store %arg5[%c0_5, %c0_6, %c0_7, %c0_8], %9 {strides = array<i32>} : memref<1x8x64x64xbf16, #tpu.memory_space<vmem>>, vector<1x1x64x64xbf16>,
    %c0_9 = arith.constant 0 : index
    %c0_10 = arith.constant 0 : index
    %c0_11 = arith.constant 0 : index
    %10 = vector.load %arg4[%c0_9, %c0_10, %c0_11] : memref<8x256x64xbf16, #tpu.memory_space<vmem>>, vector<1x256x64xbf16>
    %11 = vector.shape_cast %10 : vector<1x256x64xbf16> to vector<256x64xbf16>
    %cst_12 = arith.constant dense<0.000000e+00> : vector<64x64xf32>
    %12 = tpu.matmul %2, %11, %cst_12 {dimension_numbers = #tpu.dot_dimension_numbers<[1], [0], [0], [1], [0, 0, 1, 1], [], []>} : vector<64x256xbf16>, vector<256x64xbf16>, vector<64x64xf32> -> vector<64x64xf32>
    %13 = arith.truncf %12 : vector<64x64xf32> to vector<64x64xbf16>
    %c0_13 = arith.constant 0 : index
    %c0_14 = arith.constant 0 : index
    %c0_15 = arith.constant 0 : index
    %c0_16 = arith.constant 0 : index
    %14 = vector.load %arg6[%c0_13, %c0_14, %c0_15, %c0_16] : memref<1x8x64x64xbf16, #tpu.memory_space<vmem>>, vector<1x1x64x64xbf16>
    %15 = vector.shape_cast %14 : vector<1x1x64x64xbf16> to vector<64x64xbf16>
    %16 = vector.shape_cast %13 : vector<64x64xbf16> to vector<1x1x64x64xbf16>
    tpu.vector_store %arg6[%c0_13, %c0_14, %c0_15, %c0_16], %16 {strides = array<i32>} : memref<1x8x64x64xbf16, #tpu.memory_space<vmem>>, vector<1x1x64x64xbf16>,
    %c1 = arith.constant 1 : index
    %c0_17 = arith.constant 0 : index
    %c0_18 = arith.constant 0 : index
    %17 = vector.load %arg3[%c1, %c0_17, %c0_18] : memref<8x256x64xbf16, #tpu.memory_space<vmem>>, vector<1x256x64xbf16>
    %18 = vector.shape_cast %17 : vector<1x256x64xbf16> to vector<256x64xbf16>
    %cst_19 = arith.constant dense<0.000000e+00> : vector<64x64xf32>
    %19 = tpu.matmul %2, %18, %cst_19 {dimension_numbers = #tpu.dot_dimension_numbers<[1], [0], [0], [1], [0, 0, 1, 1], [], []>} : vector<64x256xbf16>, vector<256x64xbf16>, vector<64x64xf32> -> vector<64x64xf32>
    %20 = arith.truncf %19 : vector<64x64xf32> to vector<64x64xbf16>
    %c0_20 = arith.constant 0 : index
    %c1_21 = arith.constant 1 : index
    %c0_22 = arith.constant 0 : index
    %c0_23 = arith.constant 0 : index
    %21 = vector.load %arg5[%c0_20, %c1_21, %c0_22, %c0_23] : memref<1x8x64x64xbf16, #tpu.memory_space<vmem>>, vector<1x1x64x64xbf16>
    %22 = vector.shape_cast %21 : vector<1x1x64x64xbf16> to vector<64x64xbf16>
    %23 = vector.shape_cast %20 : vector<64x64xbf16> to vector<1x1x64x64xbf16>
    tpu.vector_store %arg5[%c0_20, %c1_21, %c0_22, %c0_23], %23 {strides = array<i32>} : memref<1x8x64x64xbf16, #tpu.memory_space<vmem>>, vector<1x1x64x64xbf16>,
    %c1_24 = arith.constant 1 : index
    %c0_25 = arith.constant 0 : index
    %c0_26 = arith.constant 0 : index
    %24 = vector.load %arg4[%c1_24, %c0_25, %c0_26] : memref<8x256x64xbf16, #tpu.memory_space<vmem>>, vector<1x256x64xbf16>
    %25 = vector.shape_cast %24 : vector<1x256x64xbf16> to vector<256x64xbf16>
    %cst_27 = arith.constant dense<0.000000e+00> : vector<64x64xf32>
    %26 = tpu.matmul %2, %25, %cst_27 {dimension_numbers = #tpu.dot_dimension_numbers<[1], [0], [0], [1], [0, 0, 1, 1], [], []>} : vector<64x256xbf16>, vector<256x64xbf16>, vector<64x64xf32> -> vector<64x64xf32>
    %27 = arith.truncf %26 : vector<64x64xf32> to vector<64x64xbf16>
    %c0_28 = arith.constant 0 : index
    %c1_29 = arith.constant 1 : index
    %c0_30 = arith.constant 0 : index
    %c0_31 = arith.constant 0 : index
    %28 = vector.load %arg6[%c0_28, %c1_29, %c0_30, %c0_31] : memref<1x8x64x64xbf16, #tpu.memory_space<vmem>>, vector<1x1x64x64xbf16>
    %29 = vector.shape_cast %28 : vector<1x1x64x64xbf16> to vector<64x64xbf16>
    %30 = vector.shape_cast %27 : vector<64x64xbf16> to vector<1x1x64x64xbf16>
    tpu.vector_store %arg6[%c0_28, %c1_29, %c0_30, %c0_31], %30 {strides = array<i32>} : memref<1x8x64x64xbf16, #tpu.memory_space<vmem>>, vector<1x1x64x64xbf16>,
    %c2 = arith.constant 2 : index
    %c0_32 = arith.constant 0 : index
    %c0_33 = arith.constant 0 : index
    %31 = vector.load %arg3[%c2, %c0_32, %c0_33] : memref<8x256x64xbf16, #tpu.memory_space<vmem>>, vector<1x256x64xbf16>
    %32 = vector.shape_cast %31 : vector<1x256x64xbf16> to vector<256x64xbf16>
    %cst_34 = arith.constant dense<0.000000e+00> : vector<64x64xf32>
    %33 = tpu.matmul %2, %32, %cst_34 {dimension_numbers = #tpu.dot_dimension_numbers<[1], [0], [0], [1], [0, 0, 1, 1], [], []>} : vector<64x256xbf16>, vector<256x64xbf16>, vector<64x64xf32> -> vector<64x64xf32>
    %34 = arith.truncf %33 : vector<64x64xf32> to vector<64x64xbf16>
    %c0_35 = arith.constant 0 : index
    %c2_36 = arith.constant 2 : index
    %c0_37 = arith.constant 0 : index
    %c0_38 = arith.constant 0 : index
    %35 = vector.load %arg5[%c0_35, %c2_36, %c0_37, %c0_38] : memref<1x8x64x64xbf16, #tpu.memory_space<vmem>>, vector<1x1x64x64xbf16>
    %36 = vector.shape_cast %35 : vector<1x1x64x64xbf16> to vector<64x64xbf16>
    %37 = vector.shape_cast %34 : vector<64x64xbf16> to vector<1x1x64x64xbf16>
    tpu.vector_store %arg5[%c0_35, %c2_36, %c0_37, %c0_38], %37 {strides = array<i32>} : memref<1x8x64x64xbf16, #tpu.memory_space<vmem>>, vector<1x1x64x64xbf16>,
    %c2_39 = arith.constant 2 : index
    %c0_40 = arith.constant 0 : index
    %c0_41 = arith.constant 0 : index
    %38 = vector.load %arg4[%c2_39, %c0_40, %c0_41] : memref<8x256x64xbf16, #tpu.memory_space<vmem>>, vector<1x256x64xbf16>
    %39 = vector.shape_cast %38 : vector<1x256x64xbf16> to vector<256x64xbf16>
    %cst_42 = arith.constant dense<0.000000e+00> : vector<64x64xf32>
    %40 = tpu.matmul %2, %39, %cst_42 {dimension_numbers = #tpu.dot_dimension_numbers<[1], [0], [0], [1], [0, 0, 1, 1], [], []>} : vector<64x256xbf16>, vector<256x64xbf16>, vector<64x64xf32> -> vector<64x64xf32>
    %41 = arith.truncf %40 : vector<64x64xf32> to vector<64x64xbf16>
    %c0_43 = arith.constant 0 : index
    %c2_44 = arith.constant 2 : index
    %c0_45 = arith.constant 0 : index
    %c0_46 = arith.constant 0 : index
    %42 = vector.load %arg6[%c0_43, %c2_44, %c0_45, %c0_46] : memref<1x8x64x64xbf16, #tpu.memory_space<vmem>>, vector<1x1x64x64xbf16>
    %43 = vector.shape_cast %42 : vector<1x1x64x64xbf16> to vector<64x64xbf16>
    %44 = vector.shape_cast %41 : vector<64x64xbf16> to vector<1x1x64x64xbf16>
    tpu.vector_store %arg6[%c0_43, %c2_44, %c0_45, %c0_46], %44 {strides = array<i32>} : memref<1x8x64x64xbf16, #tpu.memory_space<vmem>>, vector<1x1x64x64xbf16>,
    %c3 = arith.constant 3 : index
    %c0_47 = arith.constant 0 : index
    %c0_48 = arith.constant 0 : index
    %45 = vector.load %arg3[%c3, %c0_47, %c0_48] : memref<8x256x64xbf16, #tpu.memory_space<vmem>>, vector<1x256x64xbf16>
    %46 = vector.shape_cast %45 : vector<1x256x64xbf16> to vector<256x64xbf16>
    %cst_49 = arith.constant dense<0.000000e+00> : vector<64x64xf32>
    %47 = tpu.matmul %2, %46, %cst_49 {dimension_numbers = #tpu.dot_dimension_numbers<[1], [0], [0], [1], [0, 0, 1, 1], [], []>} : vector<64x256xbf16>, vector<256x64xbf16>, vector<64x64xf32> -> vector<64x64xf32>
    %48 = arith.truncf %47 : vector<64x64xf32> to vector<64x64xbf16>
    %c0_50 = arith.constant 0 : index
    %c3_51 = arith.constant 3 : index
    %c0_52 = arith.constant 0 : index
    %c0_53 = arith.constant 0 : index
    %49 = vector.load %arg5[%c0_50, %c3_51, %c0_52, %c0_53] : memref<1x8x64x64xbf16, #tpu.memory_space<vmem>>, vector<1x1x64x64xbf16>
    %50 = vector.shape_cast %49 : vector<1x1x64x64xbf16> to vector<64x64xbf16>
    %51 = vector.shape_cast %48 : vector<64x64xbf16> to vector<1x1x64x64xbf16>
    tpu.vector_store %arg5[%c0_50, %c3_51, %c0_52, %c0_53], %51 {strides = array<i32>} : memref<1x8x64x64xbf16, #tpu.memory_space<vmem>>, vector<1x1x64x64xbf16>,
    %c3_54 = arith.constant 3 : index
    %c0_55 = arith.constant 0 : index
    %c0_56 = arith.constant 0 : index
    %52 = vector.load %arg4[%c3_54, %c0_55, %c0_56] : memref<8x256x64xbf16, #tpu.memory_space<vmem>>, vector<1x256x64xbf16>
    %53 = vector.shape_cast %52 : vector<1x256x64xbf16> to vector<256x64xbf16>
    %cst_57 = arith.constant dense<0.000000e+00> : vector<64x64xf32>
    %54 = tpu.matmul %2, %53, %cst_57 {dimension_numbers = #tpu.dot_dimension_numbers<[1], [0], [0], [1], [0, 0, 1, 1], [], []>} : vector<64x256xbf16>, vector<256x64xbf16>, vector<64x64xf32> -> vector<64x64xf32>
    %55 = arith.truncf %54 : vector<64x64xf32> to vector<64x64xbf16>
    %c0_58 = arith.constant 0 : index
    %c3_59 = arith.constant 3 : index
    %c0_60 = arith.constant 0 : index
    %c0_61 = arith.constant 0 : index
    %56 = vector.load %arg6[%c0_58, %c3_59, %c0_60, %c0_61] : memref<1x8x64x64xbf16, #tpu.memory_space<vmem>>, vector<1x1x64x64xbf16>
    %57 = vector.shape_cast %56 : vector<1x1x64x64xbf16> to vector<64x64xbf16>
    %58 = vector.shape_cast %55 : vector<64x64xbf16> to vector<1x1x64x64xbf16>
    tpu.vector_store %arg6[%c0_58, %c3_59, %c0_60, %c0_61], %58 {strides = array<i32>} : memref<1x8x64x64xbf16, #tpu.memory_space<vmem>>, vector<1x1x64x64xbf16>,
    %c4 = arith.constant 4 : index
    %c0_62 = arith.constant 0 : index
    %c0_63 = arith.constant 0 : index
    %59 = vector.load %arg3[%c4, %c0_62, %c0_63] : memref<8x256x64xbf16, #tpu.memory_space<vmem>>, vector<1x256x64xbf16>
    %60 = vector.shape_cast %59 : vector<1x256x64xbf16> to vector<256x64xbf16>
    %cst_64 = arith.constant dense<0.000000e+00> : vector<64x64xf32>
    %61 = tpu.matmul %2, %60, %cst_64 {dimension_numbers = #tpu.dot_dimension_numbers<[1], [0], [0], [1], [0, 0, 1, 1], [], []>} : vector<64x256xbf16>, vector<256x64xbf16>, vector<64x64xf32> -> vector<64x64xf32>
    %62 = arith.truncf %61 : vector<64x64xf32> to vector<64x64xbf16>
    %c0_65 = arith.constant 0 : index
    %c4_66 = arith.constant 4 : index
    %c0_67 = arith.constant 0 : index
    %c0_68 = arith.constant 0 : index
    %63 = vector.load %arg5[%c0_65, %c4_66, %c0_67, %c0_68] : memref<1x8x64x64xbf16, #tpu.memory_space<vmem>>, vector<1x1x64x64xbf16>
    %64 = vector.shape_cast %63 : vector<1x1x64x64xbf16> to vector<64x64xbf16>
    %65 = vector.shape_cast %62 : vector<64x64xbf16> to vector<1x1x64x64xbf16>
    tpu.vector_store %arg5[%c0_65, %c4_66, %c0_67, %c0_68], %65 {strides = array<i32>} : memref<1x8x64x64xbf16, #tpu.memory_space<vmem>>, vector<1x1x64x64xbf16>,
    %c4_69 = arith.constant 4 : index
    %c0_70 = arith.constant 0 : index
    %c0_71 = arith.constant 0 : index
    %66 = vector.load %arg4[%c4_69, %c0_70, %c0_71] : memref<8x256x64xbf16, #tpu.memory_space<vmem>>, vector<1x256x64xbf16>
    %67 = vector.shape_cast %66 : vector<1x256x64xbf16> to vector<256x64xbf16>
    %cst_72 = arith.constant dense<0.000000e+00> : vector<64x64xf32>
    %68 = tpu.matmul %2, %67, %cst_72 {dimension_numbers = #tpu.dot_dimension_numbers<[1], [0], [0], [1], [0, 0, 1, 1], [], []>} : vector<64x256xbf16>, vector<256x64xbf16>, vector<64x64xf32> -> vector<64x64xf32>
    %69 = arith.truncf %68 : vector<64x64xf32> to vector<64x64xbf16>
    %c0_73 = arith.constant 0 : index
    %c4_74 = arith.constant 4 : index
    %c0_75 = arith.constant 0 : index
    %c0_76 = arith.constant 0 : index
    %70 = vector.load %arg6[%c0_73, %c4_74, %c0_75, %c0_76] : memref<1x8x64x64xbf16, #tpu.memory_space<vmem>>, vector<1x1x64x64xbf16>
    %71 = vector.shape_cast %70 : vector<1x1x64x64xbf16> to vector<64x64xbf16>
    %72 = vector.shape_cast %69 : vector<64x64xbf16> to vector<1x1x64x64xbf16>
    tpu.vector_store %arg6[%c0_73, %c4_74, %c0_75, %c0_76], %72 {strides = array<i32>} : memref<1x8x64x64xbf16, #tpu.memory_space<vmem>>, vector<1x1x64x64xbf16>,
    %c5 = arith.constant 5 : index
    %c0_77 = arith.constant 0 : index
    %c0_78 = arith.constant 0 : index
    %73 = vector.load %arg3[%c5, %c0_77, %c0_78] : memref<8x256x64xbf16, #tpu.memory_space<vmem>>, vector<1x256x64xbf16>
    %74 = vector.shape_cast %73 : vector<1x256x64xbf16> to vector<256x64xbf16>
    %cst_79 = arith.constant dense<0.000000e+00> : vector<64x64xf32>
    %75 = tpu.matmul %2, %74, %cst_79 {dimension_numbers = #tpu.dot_dimension_numbers<[1], [0], [0], [1], [0, 0, 1, 1], [], []>} : vector<64x256xbf16>, vector<256x64xbf16>, vector<64x64xf32> -> vector<64x64xf32>
    %76 = arith.truncf %75 : vector<64x64xf32> to vector<64x64xbf16>
    %c0_80 = arith.constant 0 : index
    %c5_81 = arith.constant 5 : index
    %c0_82 = arith.constant 0 : index
    %c0_83 = arith.constant 0 : index
    %77 = vector.load %arg5[%c0_80, %c5_81, %c0_82, %c0_83] : memref<1x8x64x64xbf16, #tpu.memory_space<vmem>>, vector<1x1x64x64xbf16>
    %78 = vector.shape_cast %77 : vector<1x1x64x64xbf16> to vector<64x64xbf16>
    %79 = vector.shape_cast %76 : vector<64x64xbf16> to vector<1x1x64x64xbf16>
    tpu.vector_store %arg5[%c0_80, %c5_81, %c0_82, %c0_83], %79 {strides = array<i32>} : memref<1x8x64x64xbf16, #tpu.memory_space<vmem>>, vector<1x1x64x64xbf16>,
    %c5_84 = arith.constant 5 : index
    %c0_85 = arith.constant 0 : index
    %c0_86 = arith.constant 0 : index
    %80 = vector.load %arg4[%c5_84, %c0_85, %c0_86] : memref<8x256x64xbf16, #tpu.memory_space<vmem>>, vector<1x256x64xbf16>
    %81 = vector.shape_cast %80 : vector<1x256x64xbf16> to vector<256x64xbf16>
    %cst_87 = arith.constant dense<0.000000e+00> : vector<64x64xf32>
    %82 = tpu.matmul %2, %81, %cst_87 {dimension_numbers = #tpu.dot_dimension_numbers<[1], [0], [0], [1], [0, 0, 1, 1], [], []>} : vector<64x256xbf16>, vector<256x64xbf16>, vector<64x64xf32> -> vector<64x64xf32>
    %83 = arith.truncf %82 : vector<64x64xf32> to vector<64x64xbf16>
    %c0_88 = arith.constant 0 : index
    %c5_89 = arith.constant 5 : index
    %c0_90 = arith.constant 0 : index
    %c0_91 = arith.constant 0 : index
    %84 = vector.load %arg6[%c0_88, %c5_89, %c0_90, %c0_91] : memref<1x8x64x64xbf16, #tpu.memory_space<vmem>>, vector<1x1x64x64xbf16>
    %85 = vector.shape_cast %84 : vector<1x1x64x64xbf16> to vector<64x64xbf16>
    %86 = vector.shape_cast %83 : vector<64x64xbf16> to vector<1x1x64x64xbf16>
    tpu.vector_store %arg6[%c0_88, %c5_89, %c0_90, %c0_91], %86 {strides = array<i32>} : memref<1x8x64x64xbf16, #tpu.memory_space<vmem>>, vector<1x1x64x64xbf16>,
    %c6 = arith.constant 6 : index
    %c0_92 = arith.constant 0 : index
    %c0_93 = arith.constant 0 : index
    %87 = vector.load %arg3[%c6, %c0_92, %c0_93] : memref<8x256x64xbf16, #tpu.memory_space<vmem>>, vector<1x256x64xbf16>
    %88 = vector.shape_cast %87 : vector<1x256x64xbf16> to vector<256x64xbf16>
    %cst_94 = arith.constant dense<0.000000e+00> : vector<64x64xf32>
    %89 = tpu.matmul %2, %88, %cst_94 {dimension_numbers = #tpu.dot_dimension_numbers<[1], [0], [0], [1], [0, 0, 1, 1], [], []>} : vector<64x256xbf16>, vector<256x64xbf16>, vector<64x64xf32> -> vector<64x64xf32>
    %90 = arith.truncf %89 : vector<64x64xf32> to vector<64x64xbf16>
    %c0_95 = arith.constant 0 : index
    %c6_96 = arith.constant 6 : index
    %c0_97 = arith.constant 0 : index
    %c0_98 = arith.constant 0 : index
    %91 = vector.load %arg5[%c0_95, %c6_96, %c0_97, %c0_98] : memref<1x8x64x64xbf16, #tpu.memory_space<vmem>>, vector<1x1x64x64xbf16>
    %92 = vector.shape_cast %91 : vector<1x1x64x64xbf16> to vector<64x64xbf16>
    %93 = vector.shape_cast %90 : vector<64x64xbf16> to vector<1x1x64x64xbf16>
    tpu.vector_store %arg5[%c0_95, %c6_96, %c0_97, %c0_98], %93 {strides = array<i32>} : memref<1x8x64x64xbf16, #tpu.memory_space<vmem>>, vector<1x1x64x64xbf16>,
    %c6_99 = arith.constant 6 : index
    %c0_100 = arith.constant 0 : index
    %c0_101 = arith.constant 0 : index
    %94 = vector.load %arg4[%c6_99, %c0_100, %c0_101] : memref<8x256x64xbf16, #tpu.memory_space<vmem>>, vector<1x256x64xbf16>
    %95 = vector.shape_cast %94 : vector<1x256x64xbf16> to vector<256x64xbf16>
    %cst_102 = arith.constant dense<0.000000e+00> : vector<64x64xf32>
    %96 = tpu.matmul %2, %95, %cst_102 {dimension_numbers = #tpu.dot_dimension_numbers<[1], [0], [0], [1], [0, 0, 1, 1], [], []>} : vector<64x256xbf16>, vector<256x64xbf16>, vector<64x64xf32> -> vector<64x64xf32>
    %97 = arith.truncf %96 : vector<64x64xf32> to vector<64x64xbf16>
    %c0_103 = arith.constant 0 : index
    %c6_104 = arith.constant 6 : index
    %c0_105 = arith.constant 0 : index
    %c0_106 = arith.constant 0 : index
    %98 = vector.load %arg6[%c0_103, %c6_104, %c0_105, %c0_106] : memref<1x8x64x64xbf16, #tpu.memory_space<vmem>>, vector<1x1x64x64xbf16>
    %99 = vector.shape_cast %98 : vector<1x1x64x64xbf16> to vector<64x64xbf16>
    %100 = vector.shape_cast %97 : vector<64x64xbf16> to vector<1x1x64x64xbf16>
    tpu.vector_store %arg6[%c0_103, %c6_104, %c0_105, %c0_106], %100 {strides = array<i32>} : memref<1x8x64x64xbf16, #tpu.memory_space<vmem>>, vector<1x1x64x64xbf16>,
    %c7 = arith.constant 7 : index
    %c0_107 = arith.constant 0 : index
    %c0_108 = arith.constant 0 : index
    %101 = vector.load %arg3[%c7, %c0_107, %c0_108] : memref<8x256x64xbf16, #tpu.memory_space<vmem>>, vector<1x256x64xbf16>
    %102 = vector.shape_cast %101 : vector<1x256x64xbf16> to vector<256x64xbf16>
    %cst_109 = arith.constant dense<0.000000e+00> : vector<64x64xf32>
    %103 = tpu.matmul %2, %102, %cst_109 {dimension_numbers = #tpu.dot_dimension_numbers<[1], [0], [0], [1], [0, 0, 1, 1], [], []>} : vector<64x256xbf16>, vector<256x64xbf16>, vector<64x64xf32> -> vector<64x64xf32>
    %104 = arith.truncf %103 : vector<64x64xf32> to vector<64x64xbf16>
    %c0_110 = arith.constant 0 : index
    %c7_111 = arith.constant 7 : index
    %c0_112 = arith.constant 0 : index
    %c0_113 = arith.constant 0 : index
    %105 = vector.load %arg5[%c0_110, %c7_111, %c0_112, %c0_113] : memref<1x8x64x64xbf16, #tpu.memory_space<vmem>>, vector<1x1x64x64xbf16>
    %106 = vector.shape_cast %105 : vector<1x1x64x64xbf16> to vector<64x64xbf16>
    %107 = vector.shape_cast %104 : vector<64x64xbf16> to vector<1x1x64x64xbf16>
    tpu.vector_store %arg5[%c0_110, %c7_111, %c0_112, %c0_113], %107 {strides = array<i32>} : memref<1x8x64x64xbf16, #tpu.memory_space<vmem>>, vector<1x1x64x64xbf16>,
    %c7_114 = arith.constant 7 : index
    %c0_115 = arith.constant 0 : index
    %c0_116 = arith.constant 0 : index
    %108 = vector.load %arg4[%c7_114, %c0_115, %c0_116] : memref<8x256x64xbf16, #tpu.memory_space<vmem>>, vector<1x256x64xbf16>
    %109 = vector.shape_cast %108 : vector<1x256x64xbf16> to vector<256x64xbf16>
    %cst_117 = arith.constant dense<0.000000e+00> : vector<64x64xf32>
    %110 = tpu.matmul %2, %109, %cst_117 {dimension_numbers = #tpu.dot_dimension_numbers<[1], [0], [0], [1], [0, 0, 1, 1], [], []>} : vector<64x256xbf16>, vector<256x64xbf16>, vector<64x64xf32> -> vector<64x64xf32>
    %111 = arith.truncf %110 : vector<64x64xf32> to vector<64x64xbf16>
    %c0_118 = arith.constant 0 : index
    %c7_119 = arith.constant 7 : index
    %c0_120 = arith.constant 0 : index
    %c0_121 = arith.constant 0 : index
    %112 = vector.load %arg6[%c0_118, %c7_119, %c0_120, %c0_121] : memref<1x8x64x64xbf16, #tpu.memory_space<vmem>>, vector<1x1x64x64xbf16>
    %113 = vector.shape_cast %112 : vector<1x1x64x64xbf16> to vector<64x64xbf16>
    %114 = vector.shape_cast %111 : vector<64x64xbf16> to vector<1x1x64x64xbf16>
    tpu.vector_store %arg6[%c0_118, %c7_119, %c0_120, %c0_121], %114 {strides = array<i32>} : memref<1x8x64x64xbf16, #tpu.memory_space<vmem>>, vector<1x1x64x64xbf16>,
    return
  }
  func.func @transform_0(%arg0: i32, %arg1: i32) -> (i32, i32, i32) {
    %c0_i32 = arith.constant 0 : i32
    %c0_i32_0 = arith.constant 0 : i32
    return %arg0, %arg1, %c0_i32 : i32, i32, i32
  }
  func.func @transform_1(%arg0: i32, %arg1: i32) -> (i32, i32, i32) {
    %c0_i32 = arith.constant 0 : i32
    %c0_i32_0 = arith.constant 0 : i32
    %c0_i32_1 = arith.constant 0 : i32
    %c0_i32_2 = arith.constant 0 : i32
    return %c0_i32, %c0_i32_0, %c0_i32_1 : i32, i32, i32
  }
  func.func @transform_2(%arg0: i32, %arg1: i32) -> (i32, i32, i32) {
    %c0_i32 = arith.constant 0 : i32
    %c0_i32_0 = arith.constant 0 : i32
    %c0_i32_1 = arith.constant 0 : i32
    %c0_i32_2 = arith.constant 0 : i32
    return %c0_i32, %c0_i32_0, %c0_i32_1 : i32, i32, i32
  }
  func.func @transform_3(%arg0: i32, %arg1: i32) -> (i32, i32, i32, i32) {
    %c0_i32 = arith.constant 0 : i32
    %c0_i32_0 = arith.constant 0 : i32
    %c0_i32_1 = arith.constant 0 : i32
    return %arg0, %c0_i32, %arg1, %c0_i32_0 : i32, i32, i32, i32
  }
  func.func @transform_4(%arg0: i32, %arg1: i32) -> (i32, i32, i32, i32) {
    %c0_i32 = arith.constant 0 : i32
    %c0_i32_0 = arith.constant 0 : i32
    %c0_i32_1 = arith.constant 0 : i32
    return %arg0, %c0_i32, %arg1, %c0_i32_0 : i32, i32, i32, i32
  }
}

</mosaic_0001>

<llo_original>
// kernel: tpu_custom_call.1
$region0: #{tpu_custom_call.1}
  #allocation0 [shape = 'u32[]', space=smem, size = 0x4, offset = 0x4, fixed_abs, tag = 'smem constant byte address 0x4 - core index']
  #allocation1 [shape = 'u32[72,128]{1,0:T(1,128)}', space=vmem, size = 0x9000, scoped, tag = 'internal scratch']
  %s0 = inlined_call_operand.vmem [shape: f32[2,128,256], index: 0, kind: input, shape index: {}]
  %s1 = inlined_call_operand.vmem [shape: bf16[8,256,64], index: 1, kind: input, shape index: {}]
  %s2 = inlined_call_operand.vmem [shape: bf16[8,256,64], index: 2, kind: input, shape index: {}]
  %s3 = inlined_call_operand.vmem [shape: bf16[2,8,128,64], index: 3, kind: output, shape index: {0}]
  %s4 = inlined_call_operand.vmem [shape: bf16[2,8,128,64], index: 4, kind: output, shape index: {1}]
  %5 = xla_tuple %s3, %s4
  %s6 = sld [smem:[#allocation0]]
  $region127: #{tpu_custom_call.1} parent=0
    _
  %s8 = ssub.s32 1, %s6
  %s9 = scalar_select 0, %s8, %s6
  $region1: #{tpu_custom_call.1} parent=0
    #allocation2 [shape = 'u8[262144]{0}', space=vmem, size = 0x40000, scoped, tag = 'output window, operand 0']
    #allocation3 [shape = 'u8[262144]{0}', space=vmem, size = 0x40000, scoped, tag = 'output window, operand 1']
    loop: start=0, step=1, limit=6
    $region2: #{tpu_custom_call.1} parent=1 // loop_pre_header
      _
    $region3: #{tpu_custom_call.1} parent=1 // loop_header
      %s11 = sphi 0, %s15
      %p12 = scmp.ge.s32.totalorder %s11, 6
      %s18 = sphi 0, %s30
      %s19 = sphi 0, %s26
      %s20 = sphi 0, %s18
      %s21 = sphi 0, %s19
      %s22 = sphi 0, %s20
      %s23 = sphi 0, %s21
      %s35 = sphi 0, %s37
      %s38 = sphi 0, %s35
      %s39 = sphi 0, %s38
      %s55 = sphi 0, %s39
      %s59 = sphi 0, %s59
      %s61 = sphi 0, %s59
      %s62 = sphi 0, %s61
      %s76 = sphi 0, %s62
      %s80 = sphi 0, %s80
      %s82 = sphi 0, %s80
      %s83 = sphi 0, %s82
      %s97 = sphi 0, %s83
      %s105 = sphi 0, %s107
      %s108 = sphi 0, %s105
      %s109 = sphi 0, %s108
      %s125 = sphi 0, %s109
      %s133 = sphi 0, %s135
      %s136 = sphi 0, %s133
      %s137 = sphi 0, %s136
      %s153 = sphi 0, %s137
    $region4: #{tpu_custom_call.1} parent=1 // loop_header_branch
      %14 = sbr.rel (%p12) target = $region8
    $region5: #{tpu_custom_call.1} parent=1 // loop_body
      %s16 = ssub.s32 %s11, 1
      %s17 = ssub.s32 %s11, 2
      %s24 = sadd.s32 1, %s19
      %p25 = scmp.ge.s32.totalorder %s24, 2
      %s26 = scalar_select %p25, 0, %s24
      %s27 = sadd.s32 1, %s18
      %s28 = scalar_select %p25, %s27, %s18
      %p29 = scmp.ge.s32.totalorder %s28, 2
      %s30 = scalar_select %p29, 0, %s28
      %s31 = ssub.s32 %s18, %s30
      %s32 = ssub.s32 %s19, %s26
      %s33 = sor.u32 %s31, %s32
      %p34 = scmp.eq.s32.totalorder %s33, 0
      %s36 = sadd.s32 %s35, 1
      %s37 = scalar_select %p34, %s35, %s36
      %p40 = pneg %p34
      %p41 = scmp.eq.s32.totalorder %s11, 3
      %p42 = por %p40, %p41
      %p43 = scmp.ne.s32.totalorder %s35, %s38
      %p44 = scmp.eq.s32.totalorder %s11, 0
      %p45 = por %p43, %p44
      %p46 = scmp.ne.s32.totalorder %s35, %s38
      %p47 = scmp.eq.s32.totalorder %s16, 3
      %p48 = por %p46, %p47
      %p49 = scmp.ne.s32.totalorder %s38, %s39
      %p50 = scmp.eq.s32.totalorder %s16, 0
      %p51 = por %p49, %p50
      %p52 = scmp.ne.s32.totalorder %s38, %s39
      %p53 = scmp.eq.s32.totalorder %s17, 3
      %p54 = por %p52, %p53
      %p56 = scmp.ne.s32.totalorder %s39, %s55
      %p57 = scmp.eq.s32.totalorder %s17, 0
      %p58 = por %p56, %p57
      %s60 = sadd.s32 %s59, 1
      %p63 = scmp.eq.s32.totalorder %s11, 3
      %p64 = scmp.ne.s32.totalorder %s59, %s61
      %p65 = scmp.eq.s32.totalorder %s11, 0
      %p66 = por %p64, %p65
      %p67 = scmp.ne.s32.totalorder %s59, %s61
      %p68 = scmp.eq.s32.totalorder %s16, 3
      %p69 = por %p67, %p68
      %p70 = scmp.ne.s32.totalorder %s61, %s62
      %p71 = scmp.eq.s32.totalorder %s16, 0
      %p72 = por %p70, %p71
      %p73 = scmp.ne.s32.totalorder %s61, %s62
      %p74 = scmp.eq.s32.totalorder %s17, 3
      %p75 = por %p73, %p74
      %p77 = scmp.ne.s32.totalorder %s62, %s76
      %p78 = scmp.eq.s32.totalorder %s17, 0
      %p79 = por %p77, %p78
      %s81 = sadd.s32 %s80, 1
      %p84 = scmp.eq.s32.totalorder %s11, 3
      %p85 = scmp.ne.s32.totalorder %s80, %s82
      %p86 = scmp.eq.s32.totalorder %s11, 0
      %p87 = por %p85, %p86
      %p88 = scmp.ne.s32.totalorder %s80, %s82
      %p89 = scmp.eq.s32.totalorder %s16, 3
      %p90 = por %p88, %p89
      %p91 = scmp.ne.s32.totalorder %s82, %s83
      %p92 = scmp.eq.s32.totalorder %s16, 0
      %p93 = por %p91, %p92
      %p94 = scmp.ne.s32.totalorder %s82, %s83
      %p95 = scmp.eq.s32.totalorder %s17, 3
      %p96 = por %p94, %p95
      %p98 = scmp.ne.s32.totalorder %s83, %s97
      %p99 = scmp.eq.s32.totalorder %s17, 0
      %p100 = por %p98, %p99
      %s101 = ssub.s32 %s18, %s30
      %s102 = ssub.s32 %s19, %s26
      %s103 = sor.u32 %s101, %s102
      %p104 = scmp.eq.s32.totalorder %s103, 0
      %s106 = sadd.s32 %s105, 1
      %s107 = scalar_select %p104, %s105, %s106
      %p110 = pneg %p104
      %p111 = scmp.eq.s32.totalorder %s11, 3
      %p112 = por %p110, %p111
      %p113 = scmp.ne.s32.totalorder %s105, %s108
      %p114 = scmp.eq.s32.totalorder %s11, 0
      %p115 = por %p113, %p114
      %p116 = scmp.ne.s32.totalorder %s105, %s108
      %p117 = scmp.eq.s32.totalorder %s16, 3
      %p118 = por %p116, %p117
      %p119 = scmp.ne.s32.totalorder %s108, %s109
      %p120 = scmp.eq.s32.totalorder %s16, 0
      %p121 = por %p119, %p120
      %p122 = scmp.ne.s32.totalorder %s108, %s109
      %p123 = scmp.eq.s32.totalorder %s17, 3
      %p124 = por %p122, %p123
      %p126 = scmp.ne.s32.totalorder %s109, %s125
      %p127 = scmp.eq.s32.totalorder %s17, 0
      %p128 = por %p126, %p127
      %s129 = ssub.s32 %s18, %s30
      %s130 = ssub.s32 %s19, %s26
      %s131 = sor.u32 %s129, %s130
      %p132 = scmp.eq.s32.totalorder %s131, 0
      %s134 = sadd.s32 %s133, 1
      %s135 = scalar_select %p132, %s133, %s134
      %p138 = pneg %p132
      %p139 = scmp.eq.s32.totalorder %s11, 3
      %p140 = por %p138, %p139
      %p141 = scmp.ne.s32.totalorder %s133, %s136
      %p142 = scmp.eq.s32.totalorder %s11, 0
      %p143 = por %p141, %p142
      %p144 = scmp.ne.s32.totalorder %s133, %s136
      %p145 = scmp.eq.s32.totalorder %s16, 3
      %p146 = por %p144, %p145
      %p147 = scmp.ne.s32.totalorder %s136, %s137
      %p148 = scmp.eq.s32.totalorder %s16, 0
      %p149 = por %p147, %p148
      %p150 = scmp.ne.s32.totalorder %s136, %s137
      %p151 = scmp.eq.s32.totalorder %s17, 3
      %p152 = por %p150, %p151
      %p154 = scmp.ne.s32.totalorder %s137, %s153
      %p155 = scmp.eq.s32.totalorder %s17, 0
      %p156 = por %p154, %p155
      %p157 = scmp.le.s32.totalorder 1, %s11
      %p158 = scmp.lt.s32.totalorder %s11, 5
      %p159 = pnand %p157, %p158
      %p160 = pneg %p159
      // Predicated region
      $region9: #{tpu_custom_call.1} parent=5 // pred_check
        _
      $region10: #{tpu_custom_call.1} parent=5 // pred_check_branch
        %162 = sbr.rel (%p159) target = $region12
      $region11: #{tpu_custom_call.1} parent=5 // pred_region
        %s163 = ssub.s32 %s11, 1
        // Predicated region
        $region13: #{tpu_custom_call.1} parent=11 // pred_check
          %p164 = pneg %p72
        $region14: #{tpu_custom_call.1} parent=11 // pred_check_branch
          %166 = sbr.rel (%p164) target = $region16
        $region15: #{tpu_custom_call.1} parent=11 // pred_region
          _
        $region16: #{tpu_custom_call.1} parent=11 // pred_fallthru
          _
        // Predicated region
        $region17: #{tpu_custom_call.1} parent=11 // pred_check
          %p167 = pneg %p93
        $region18: #{tpu_custom_call.1} parent=11 // pred_check_branch
          %169 = sbr.rel (%p167) target = $region20
        $region19: #{tpu_custom_call.1} parent=11 // pred_region
          _
        $region20: #{tpu_custom_call.1} parent=11 // pred_fallthru
          _
      $region12: #{tpu_custom_call.1} parent=5 // pred_fallthru
        _
      %p170 = scmp.lt.s32.totalorder %s11, 4
      // Predicated region
      $region21: #{tpu_custom_call.1} parent=5 // pred_check
        %p171 = pneg %p170
      $region22: #{tpu_custom_call.1} parent=5 // pred_check_branch
        %173 = sbr.rel (%p171) target = $region24
      $region23: #{tpu_custom_call.1} parent=5 // pred_region
        // Predicated region
        $region25: #{tpu_custom_call.1} parent=23 // pred_check
          %p174 = pneg %p45
        $region26: #{tpu_custom_call.1} parent=23 // pred_check_branch
          %176 = sbr.rel (%p174) target = $region28
        $region27: #{tpu_custom_call.1} parent=23 // pred_region
          %s177 = smul.u32 8, %s19
          %p178 = scmp.lt.s32.totalorder %s18, 1
          %s179 = scalar_select %p178, %s18, 1
          %p180 = scmp.lt.s32.totalorder %s177, 15
          %s181 = scalar_select %p180, %s177, 15
          %s182 = smul.addr %s181, 2
          %s183 = smul.addr %s179, 32
          %s184 = sadd.s32 %s182, %s183
          %s185 = smul.addr %s184, 8
          %s186 = scalar_lea.vmem %s0, %s185
          %s187 = smul.u32 8, %s19
        $region28: #{tpu_custom_call.1} parent=23 // pred_fallthru
          _
      $region24: #{tpu_custom_call.1} parent=5 // pred_fallthru
        _
      %p188 = scmp.le.s32.totalorder 1, %s11
      %p189 = scmp.lt.s32.totalorder %s11, 5
      %p190 = pnand %p188, %p189
      %p191 = pneg %p190
      // Predicated region
      $region29: #{tpu_custom_call.1} parent=5 // pred_check
        _
      $region30: #{tpu_custom_call.1} parent=5 // pred_check_branch
        %193 = sbr.rel (%p190) target = $region32
      $region31: #{tpu_custom_call.1} parent=5 // pred_region
        %s194 = ssub.s32 %s11, 1
        %s195 = smul.u32 8, %s21
        %p196 = scmp.lt.s32.totalorder %s20, 1
        %s197 = scalar_select %p196, %s20, 1
        %p198 = scmp.lt.s32.totalorder %s195, 15
        %s199 = scalar_select %p198, %s195, 15
        %s200 = smul.addr %s199, 2
        %s201 = smul.addr %s197, 32
        %s202 = sadd.s32 %s200, %s201
        %s203 = smul.addr %s202, 8
        %s204 = scalar_lea.vmem %s0, %s203
        %p205 = pneg %p51
        %p206 = pneg %p48
        %p207 = pneg %p72
        %p208 = pneg %p69
        %p209 = pneg %p93
        %p210 = pneg %p90
        %p211 = pneg %p121
        %p212 = pneg %p118
        %s213 = sand.u32 %s108, 1
        %s214 = sand.u32 %s108, 1
        %s215 = smul.addr %s214, 256
        %s216 = scalar_lea.vmem [#allocation2], %s215
        %p217 = pneg %p149
        %p218 = pneg %p146
        %s219 = sand.u32 %s136, 1
        %s220 = sand.u32 %s136, 1
        %s221 = smul.addr %s220, 256
        %s222 = scalar_lea.vmem [#allocation3], %s221
        %s223 = smul.u32 8, %s21
        %p224 = scmp.lt.s32.totalorder %s20, 1
        %s225 = scalar_select %p224, %s20, 1
        %p226 = scmp.lt.s32.totalorder %s223, 15
        %s227 = scalar_select %p226, %s223, 15
        %s228 = smul.addr %s227, 2
        %s229 = smul.addr %s225, 32
        %s230 = sadd.s32 %s228, %s229
        %s231 = smul.addr %s230, 8
        %s232 = scalar_lea.vmem %s0, %s231
        %s233 = smul.u32 8, %s21
        %s234 = smul.u32 8, %s21
        %s235 = smul.u32 8, %s21
        %v236 = vld [vmem:[%s232] sm:$0xff]
        %v237 = vld [vmem:[%s232 + $0x8] sm:$0xff]
        %v238 = vld [vmem:[%s232 + $0x10] sm:$0xff]
        %v239 = vld [vmem:[%s232 + $0x18] sm:$0xff]
        %v240 = vld [vmem:[%s232 + $0x20] sm:$0xff]
        %v241 = vld [vmem:[%s232 + $0x28] sm:$0xff]
        %v242 = vld [vmem:[%s232 + $0x30] sm:$0xff]
        %v243 = vld [vmem:[%s232 + $0x38] sm:$0xff]
        %v244 = vld [vmem:[%s232 + $0x40] sm:$0xff]
        %v245 = vld [vmem:[%s232 + $0x48] sm:$0xff]
        %v246 = vld [vmem:[%s232 + $0x50] sm:$0xff]
        %v247 = vld [vmem:[%s232 + $0x58] sm:$0xff]
        %v248 = vld [vmem:[%s232 + $0x60] sm:$0xff]
        %v249 = vld [vmem:[%s232 + $0x68] sm:$0xff]
        %v250 = vld [vmem:[%s232 + $0x70] sm:$0xff]
        %v251 = vld [vmem:[%s232 + $0x78] sm:$0xff]
        %v252 = vpack.c.bf16 %v238, %v236
        %v253 = vpack.c.bf16 %v239, %v237
        %v254 = vpack.c.bf16 %v242, %v240
        %v255 = vpack.c.bf16 %v243, %v241
        %v256 = vpack.c.bf16 %v246, %v244
        %v257 = vpack.c.bf16 %v247, %v245
        %v258 = vpack.c.bf16 %v250, %v248
        %v259 = vpack.c.bf16 %v251, %v249
        %v260 = vld [vmem:[%s1] sm:$0xf]
        %v261 = vld [vmem:[%s1 + $0x4] sm:$0xf]
        %v262 = vld [vmem:[%s1 + $0x8] sm:$0xf]
        %v263 = vld [vmem:[%s1 + $0xc] sm:$0xf]
        %v264 = vld [vmem:[%s1 + $0x10] sm:$0xf]
        %v265 = vld [vmem:[%s1 + $0x14] sm:$0xf]
        %v266 = vld [vmem:[%s1 + $0x18] sm:$0xf]
        %v267 = vld [vmem:[%s1 + $0x1c] sm:$0xf]
        %v268 = vld [vmem:[%s1 + $0x20] sm:$0xf]
        %v269 = vld [vmem:[%s1 + $0x24] sm:$0xf]
        %v270 = vld [vmem:[%s1 + $0x28] sm:$0xf]
        %v271 = vld [vmem:[%s1 + $0x2c] sm:$0xf]
        %v272 = vld [vmem:[%s1 + $0x30] sm:$0xf]
        %v273 = vld [vmem:[%s1 + $0x34] sm:$0xf]
        %v274 = vld [vmem:[%s1 + $0x38] sm:$0xf]
        %v275 = vld [vmem:[%s1 + $0x3c] sm:$0xf]
        %v276 = vld [vmem:[%s1 + $0x40] sm:$0xf]
        %v277 = vld [vmem:[%s1 + $0x44] sm:$0xf]
        %v278 = vld [vmem:[%s1 + $0x48] sm:$0xf]
        %v279 = vld [vmem:[%s1 + $0x4c] sm:$0xf]
        %v280 = vld [vmem:[%s1 + $0x50] sm:$0xf]
        %v281 = vld [vmem:[%s1 + $0x54] sm:$0xf]
        %v282 = vld [vmem:[%s1 + $0x58] sm:$0xf]
        %v283 = vld [vmem:[%s1 + $0x5c] sm:$0xf]
        %v284 = vld [vmem:[%s1 + $0x60] sm:$0xf]
        %v285 = vld [vmem:[%s1 + $0x64] sm:$0xf]
        %v286 = vld [vmem:[%s1 + $0x68] sm:$0xf]
        %v287 = vld [vmem:[%s1 + $0x6c] sm:$0xf]
        %v288 = vld [vmem:[%s1 + $0x70] sm:$0xf]
        %v289 = vld [vmem:[%s1 + $0x74] sm:$0xf]
        %v290 = vld [vmem:[%s1 + $0x78] sm:$0xf]
        %v291 = vld [vmem:[%s1 + $0x7c] sm:$0xf]
        %v324 = vunpack.c.l.b16 %v260
        %v325 = vunpack.c.l.b16 %v261
        %v326 = vunpack.c.l.b16 %v262
        %v327 = vunpack.c.l.b16 %v263
        %v328 = vunpack.c.l.b16 %v264
        %v329 = vunpack.c.l.b16 %v265
        %v330 = vunpack.c.l.b16 %v266
        %v331 = vunpack.c.l.b16 %v267
        %v332 = vunpack.c.l.b16 %v268
        %v333 = vunpack.c.l.b16 %v269
        %v334 = vunpack.c.l.b16 %v270
        %v335 = vunpack.c.l.b16 %v271
        %v336 = vunpack.c.l.b16 %v272
        %v337 = vunpack.c.l.b16 %v273
        %v338 = vunpack.c.l.b16 %v274
        %v339 = vunpack.c.l.b16 %v275
        %v340 = vunpack.c.l.b16 %v276
        %v341 = vunpack.c.l.b16 %v277
        %v342 = vunpack.c.l.b16 %v278
        %v343 = vunpack.c.l.b16 %v279
        %v344 = vunpack.c.l.b16 %v280
        %v345 = vunpack.c.l.b16 %v281
        %v346 = vunpack.c.l.b16 %v282
        %v347 = vunpack.c.l.b16 %v283
        %v348 = vunpack.c.l.b16 %v284
        %v349 = vunpack.c.l.b16 %v285
        %v350 = vunpack.c.l.b16 %v286
        %v351 = vunpack.c.l.b16 %v287
        %v352 = vunpack.c.l.b16 %v288
        %v353 = vunpack.c.l.b16 %v289
        %v354 = vunpack.c.l.b16 %v290
        %v355 = vunpack.c.l.b16 %v291
        %v356 = vpack.c.b16 %v325, %v324
        %v357 = vpack.c.b16 %v327, %v326
        %v358 = vpack.c.b16 %v329, %v328
        %v359 = vpack.c.b16 %v331, %v330
        %v360 = vpack.c.b16 %v333, %v332
        %v361 = vpack.c.b16 %v335, %v334
        %v362 = vpack.c.b16 %v337, %v336
        %v363 = vpack.c.b16 %v339, %v338
        %v364 = vpack.c.b16 %v341, %v340
        %v365 = vpack.c.b16 %v343, %v342
        %v366 = vpack.c.b16 %v345, %v344
        %v367 = vpack.c.b16 %v347, %v346
        %v368 = vpack.c.b16 %v349, %v348
        %v369 = vpack.c.b16 %v351, %v350
        %v370 = vpack.c.b16 %v353, %v352
        %v371 = vpack.c.b16 %v355, %v354
        %388 = vmatpush.bf16.msra.mxu0 %v363
        %389 = vmatpush.bf16.msra.mxu0 %v362
        %390 = vmatpush.bf16.msra.mxu0 %v361
        %391 = vmatpush.bf16.msra.mxu0 %v360
        %392 = vmatpush.bf16.msra.mxu0 %v359
        %393 = vmatpush.bf16.msra.mxu0 %v358
        %394 = vmatpush.bf16.msra.mxu0 %v357
        %395 = vmatpush.bf16.msra.mxu0 %v356
        %396 = vmatmul.bf16.gmra.mxu0 %v252
        %v397 = vpop.f32.mrf.mxu0
        %v398 = vadd.f32 0.0, %v397
        %v399 = vpop.f32.mrf.mxu0
        %v400 = vadd.f32 0.0, %v399
        %401 = vmatmul.bf16.gmra.mxu0 %v254
        %v402 = vpop.f32.mrf.mxu0
        %v403 = vadd.f32 0.0, %v402
        %v404 = vpop.f32.mrf.mxu0
        %v405 = vadd.f32 0.0, %v404
        %406 = vmatmul.bf16.gmra.mxu0 %v256
        %v407 = vpop.f32.mrf.mxu0
        %v408 = vadd.f32 0.0, %v407
        %v409 = vpop.f32.mrf.mxu0
        %v410 = vadd.f32 0.0, %v409
        %411 = vmatmul.bf16.gmra.mxu0 %v258
        %v412 = vpop.f32.mrf.mxu0
        %v413 = vadd.f32 0.0, %v412
        %v414 = vpop.f32.mrf.mxu0
        %v415 = vadd.f32 0.0, %v414
        %416 = vdwg.mxu0
        %417 = vmatpush.bf16.msra.mxu0 %v371
        %418 = vmatpush.bf16.msra.mxu0 %v370
        %419 = vmatpush.bf16.msra.mxu0 %v369
        %420 = vmatpush.bf16.msra.mxu0 %v368
        %421 = vmatpush.bf16.msra.mxu0 %v367
        %422 = vmatpush.bf16.msra.mxu0 %v366
        %423 = vmatpush.bf16.msra.mxu0 %v365
        %424 = vmatpush.bf16.msra.mxu0 %v364
        %425 = vmatmul.bf16.gmra.mxu0 %v253
        %v426 = vpop.f32.mrf.mxu0
        %v427 = vadd.f32 %v398, %v426
        %v428 = vpop.f32.mrf.mxu0
        %v429 = vadd.f32 %v400, %v428
        %430 = vmatmul.bf16.gmra.mxu0 %v255
        %v431 = vpop.f32.mrf.mxu0
        %v432 = vadd.f32 %v403, %v431
        %v433 = vpop.f32.mrf.mxu0
        %v434 = vadd.f32 %v405, %v433
        %435 = vmatmul.bf16.gmra.mxu0 %v257
        %v436 = vpop.f32.mrf.mxu0
        %v437 = vadd.f32 %v408, %v436
        %v438 = vpop.f32.mrf.mxu0
        %v439 = vadd.f32 %v410, %v438
        %440 = vmatmul.bf16.gmra.mxu0 %v259
        %v441 = vpop.f32.mrf.mxu0
        %v442 = vadd.f32 %v413, %v441
        %v443 = vpop.f32.mrf.mxu0
        %v444 = vadd.f32 %v415, %v443
        %445 = vdwg.mxu0
        %v446 = vpack.c.bf16 %v427, %v427
        %v447 = vpack.c.bf16 %v429, %v429
        %v448 = vpack.c.bf16 %v432, %v432
        %v449 = vpack.c.bf16 %v434, %v434
        %v450 = vpack.c.bf16 %v437, %v437
        %v451 = vpack.c.bf16 %v439, %v439
        %v452 = vpack.c.bf16 %v442, %v442
        %v453 = vpack.c.bf16 %v444, %v444
        %vm454 = vcmask 519168
        %455 = vst.msk [vmem:[%s216] sm:$0xf] %vm454, %v446
        %456 = vst.msk [vmem:[%s216 + $0x4] sm:$0xf] %vm454, %v447
        %457 = vst.msk [vmem:[%s216 + $0x8] sm:$0xf] %vm454, %v448
        %458 = vst.msk [vmem:[%s216 + $0xc] sm:$0xf] %vm454, %v449
        %459 = vst.msk [vmem:[%s216 + $0x10] sm:$0xf] %vm454, %v450
        %460 = vst.msk [vmem:[%s216 + $0x14] sm:$0xf] %vm454, %v451
        %461 = vst.msk [vmem:[%s216 + $0x18] sm:$0xf] %vm454, %v452
        %462 = vst.msk [vmem:[%s216 + $0x1c] sm:$0xf] %vm454, %v453
        %v463 = vld [vmem:[%s2] sm:$0xf]
        %v464 = vld [vmem:[%s2 + $0x4] sm:$0xf]
        %v465 = vld [vmem:[%s2 + $0x8] sm:$0xf]
        %v466 = vld [vmem:[%s2 + $0xc] sm:$0xf]
        %v467 = vld [vmem:[%s2 + $0x10] sm:$0xf]
        %v468 = vld [vmem:[%s2 + $0x14] sm:$0xf]
        %v469 = vld [vmem:[%s2 + $0x18] sm:$0xf]
        %v470 = vld [vmem:[%s2 + $0x1c] sm:$0xf]
        %v471 = vld [vmem:[%s2 + $0x20] sm:$0xf]
        %v472 = vld [vmem:[%s2 + $0x24] sm:$0xf]
        %v473 = vld [vmem:[%s2 + $0x28] sm:$0xf]
        %v474 = vld [vmem:[%s2 + $0x2c] sm:$0xf]
        %v475 = vld [vmem:[%s2 + $0x30] sm:$0xf]
        %v476 = vld [vmem:[%s2 + $0x34] sm:$0xf]
        %v477 = vld [vmem:[%s2 + $0x38] sm:$0xf]
        %v478 = vld [vmem:[%s2 + $0x3c] sm:$0xf]
        %v479 = vld [vmem:[%s2 + $0x40] sm:$0xf]
        %v480 = vld [vmem:[%s2 + $0x44] sm:$0xf]
        %v481 = vld [vmem:[%s2 + $0x48] sm:$0xf]
        %v482 = vld [vmem:[%s2 + $0x4c] sm:$0xf]
        %v483 = vld [vmem:[%s2 + $0x50] sm:$0xf]
        %v484 = vld [vmem:[%s2 + $0x54] sm:$0xf]
        %v485 = vld [vmem:[%s2 + $0x58] sm:$0xf]
        %v486 = vld [vmem:[%s2 + $0x5c] sm:$0xf]
        %v487 = vld [vmem:[%s2 + $0x60] sm:$0xf]
        %v488 = vld [vmem:[%s2 + $0x64] sm:$0xf]
        %v489 = vld [vmem:[%s2 + $0x68] sm:$0xf]
        %v490 = vld [vmem:[%s2 + $0x6c] sm:$0xf]
        %v491 = vld [vmem:[%s2 + $0x70] sm:$0xf]
        %v492 = vld [vmem:[%s2 + $0x74] sm:$0xf]
        %v493 = vld [vmem:[%s2 + $0x78] sm:$0xf]
        %v494 = vld [vmem:[%s2 + $0x7c] sm:$0xf]
        %v527 = vunpack.c.l.b16 %v463
        %v528 = vunpack.c.l.b16 %v464
        %v529 = vunpack.c.l.b16 %v465
        %v530 = vunpack.c.l.b16 %v466
        %v531 = vunpack.c.l.b16 %v467
        %v532 = vunpack.c.l.b16 %v468
        %v533 = vunpack.c.l.b16 %v469
        %v534 = vunpack.c.l.b16 %v470
        %v535 = vunpack.c.l.b16 %v471
        %v536 = vunpack.c.l.b16 %v472
        %v537 = vunpack.c.l.b16 %v473
        %v538 = vunpack.c.l.b16 %v474
        %v539 = vunpack.c.l.b16 %v475
        %v540 = vunpack.c.l.b16 %v476
        %v541 = vunpack.c.l.b16 %v477
        %v542 = vunpack.c.l.b16 %v478
        %v543 = vunpack.c.l.b16 %v479
        %v544 = vunpack.c.l.b16 %v480
        %v545 = vunpack.c.l.b16 %v481
        %v546 = vunpack.c.l.b16 %v482
        %v547 = vunpack.c.l.b16 %v483
        %v548 = vunpack.c.l.b16 %v484
        %v549 = vunpack.c.l.b16 %v485
        %v550 = vunpack.c.l.b16 %v486
        %v551 = vunpack.c.l.b16 %v487
        %v552 = vunpack.c.l.b16 %v488
        %v553 = vunpack.c.l.b16 %v489
        %v554 = vunpack.c.l.b16 %v490
        %v555 = vunpack.c.l.b16 %v491
        %v556 = vunpack.c.l.b16 %v492
        %v557 = vunpack.c.l.b16 %v493
        %v558 = vunpack.c.l.b16 %v494
        %v559 = vpack.c.b16 %v528, %v527
        %v560 = vpack.c.b16 %v530, %v529
        %v561 = vpack.c.b16 %v532, %v531
        %v562 = vpack.c.b16 %v534, %v533
        %v563 = vpack.c.b16 %v536, %v535
        %v564 = vpack.c.b16 %v538, %v537
        %v565 = vpack.c.b16 %v540, %v539
        %v566 = vpack.c.b16 %v542, %v541
        %v567 = vpack.c.b16 %v544, %v543
        %v568 = vpack.c.b16 %v546, %v545
        %v569 = vpack.c.b16 %v548, %v547
        %v570 = vpack.c.b16 %v550, %v549
        %v571 = vpack.c.b16 %v552, %v551
        %v572 = vpack.c.b16 %v554, %v553
        %v573 = vpack.c.b16 %v556, %v555
        %v574 = vpack.c.b16 %v558, %v557
        %591 = vmatpush.bf16.msra.mxu0 %v566
        %592 = vmatpush.bf16.msra.mxu0 %v565
        %593 = vmatpush.bf16.msra.mxu0 %v564
        %594 = vmatpush.bf16.msra.mxu0 %v563
        %595 = vmatpush.bf16.msra.mxu0 %v562
        %596 = vmatpush.bf16.msra.mxu0 %v561
        %597 = vmatpush.bf16.msra.mxu0 %v560
        %598 = vmatpush.bf16.msra.mxu0 %v559
        %599 = vmatmul.bf16.gmra.mxu0 %v252
        %v600 = vpop.f32.mrf.mxu0
        %v601 = vadd.f32 0.0, %v600
        %v602 = vpop.f32.mrf.mxu0
        %v603 = vadd.f32 0.0, %v602
        %604 = vmatmul.bf16.gmra.mxu0 %v254
        %v605 = vpop.f32.mrf.mxu0
        %v606 = vadd.f32 0.0, %v605
        %v607 = vpop.f32.mrf.mxu0
        %v608 = vadd.f32 0.0, %v607
        %609 = vmatmul.bf16.gmra.mxu0 %v256
        %v610 = vpop.f32.mrf.mxu0
        %v611 = vadd.f32 0.0, %v610
        %v612 = vpop.f32.mrf.mxu0
        %v613 = vadd.f32 0.0, %v612
        %614 = vmatmul.bf16.gmra.mxu0 %v258
        %v615 = vpop.f32.mrf.mxu0
        %v616 = vadd.f32 0.0, %v615
        %v617 = vpop.f32.mrf.mxu0
        %v618 = vadd.f32 0.0, %v617
        %619 = vdwg.mxu0
        %620 = vmatpush.bf16.msra.mxu0 %v574
        %621 = vmatpush.bf16.msra.mxu0 %v573
        %622 = vmatpush.bf16.msra.mxu0 %v572
        %623 = vmatpush.bf16.msra.mxu0 %v571
        %624 = vmatpush.bf16.msra.mxu0 %v570
        %625 = vmatpush.bf16.msra.mxu0 %v569
        %626 = vmatpush.bf16.msra.mxu0 %v568
        %627 = vmatpush.bf16.msra.mxu0 %v567
        %628 = vmatmul.bf16.gmra.mxu0 %v253
        %v629 = vpop.f32.mrf.mxu0
        %v630 = vadd.f32 %v601, %v629
        %v631 = vpop.f32.mrf.mxu0
        %v632 = vadd.f32 %v603, %v631
        %633 = vmatmul.bf16.gmra.mxu0 %v255
        %v634 = vpop.f32.mrf.mxu0
        %v635 = vadd.f32 %v606, %v634
        %v636 = vpop.f32.mrf.mxu0
        %v637 = vadd.f32 %v608, %v636
        %638 = vmatmul.bf16.gmra.mxu0 %v257
        %v639 = vpop.f32.mrf.mxu0
        %v640 = vadd.f32 %v611, %v639
        %v641 = vpop.f32.mrf.mxu0
        %v642 = vadd.f32 %v613, %v641
        %643 = vmatmul.bf16.gmra.mxu0 %v259
        %v644 = vpop.f32.mrf.mxu0
        %v645 = vadd.f32 %v616, %v644
        %v646 = vpop.f32.mrf.mxu0
        %v647 = vadd.f32 %v618, %v646
        %648 = vdwg.mxu0
        %v649 = vpack.c.bf16 %v630, %v630
        %v650 = vpack.c.bf16 %v632, %v632
        %v651 = vpack.c.bf16 %v635, %v635
        %v652 = vpack.c.bf16 %v637, %v637
        %v653 = vpack.c.bf16 %v640, %v640
        %v654 = vpack.c.bf16 %v642, %v642
        %v655 = vpack.c.bf16 %v645, %v645
        %v656 = vpack.c.bf16 %v647, %v647
        %657 = vst.msk [vmem:[%s222] sm:$0xf] %vm454, %v649
        %658 = vst.msk [vmem:[%s222 + $0x4] sm:$0xf] %vm454, %v650
        %659 = vst.msk [vmem:[%s222 + $0x8] sm:$0xf] %vm454, %v651
        %660 = vst.msk [vmem:[%s222 + $0xc] sm:$0xf] %vm454, %v652
        %661 = vst.msk [vmem:[%s222 + $0x10] sm:$0xf] %vm454, %v653
        %662 = vst.msk [vmem:[%s222 + $0x14] sm:$0xf] %vm454, %v654
        %663 = vst.msk [vmem:[%s222 + $0x18] sm:$0xf] %vm454, %v655
        %664 = vst.msk [vmem:[%s222 + $0x1c] sm:$0xf] %vm454, %v656
        %s665 = scalar_lea.vmem %s1, 128
        %v666 = vld [vmem:[%s665] sm:$0xf]
        %v667 = vld [vmem:[%s665 + $0x4] sm:$0xf]
        %v668 = vld [vmem:[%s665 + $0x8] sm:$0xf]
        %v669 = vld [vmem:[%s665 + $0xc] sm:$0xf]
        %v670 = vld [vmem:[%s665 + $0x10] sm:$0xf]
        %v671 = vld [vmem:[%s665 + $0x14] sm:$0xf]
        %v672 = vld [vmem:[%s665 + $0x18] sm:$0xf]
        %v673 = vld [vmem:[%s665 + $0x1c] sm:$0xf]
        %v674 = vld [vmem:[%s665 + $0x20] sm:$0xf]
        %v675 = vld [vmem:[%s665 + $0x24] sm:$0xf]
        %v676 = vld [vmem:[%s665 + $0x28] sm:$0xf]
        %v677 = vld [vmem:[%s665 + $0x2c] sm:$0xf]
        %v678 = vld [vmem:[%s665 + $0x30] sm:$0xf]
        %v679 = vld [vmem:[%s665 + $0x34] sm:$0xf]
        %v680 = vld [vmem:[%s665 + $0x38] sm:$0xf]
        %v681 = vld [vmem:[%s665 + $0x3c] sm:$0xf]
        %v682 = vld [vmem:[%s665 + $0x40] sm:$0xf]
        %v683 = vld [vmem:[%s665 + $0x44] sm:$0xf]
        %v684 = vld [vmem:[%s665 + $0x48] sm:$0xf]
        %v685 = vld [vmem:[%s665 + $0x4c] sm:$0xf]
        %v686 = vld [vmem:[%s665 + $0x50] sm:$0xf]
        %v687 = vld [vmem:[%s665 + $0x54] sm:$0xf]
        %v688 = vld [vmem:[%s665 + $0x58] sm:$0xf]
        %v689 = vld [vmem:[%s665 + $0x5c] sm:$0xf]
        %v690 = vld [vmem:[%s665 + $0x60] sm:$0xf]
        %v691 = vld [vmem:[%s665 + $0x64] sm:$0xf]
        %v692 = vld [vmem:[%s665 + $0x68] sm:$0xf]
        %v693 = vld [vmem:[%s665 + $0x6c] sm:$0xf]
        %v694 = vld [vmem:[%s665 + $0x70] sm:$0xf]
        %v695 = vld [vmem:[%s665 + $0x74] sm:$0xf]
        %v696 = vld [vmem:[%s665 + $0x78] sm:$0xf]
        %v697 = vld [vmem:[%s665 + $0x7c] sm:$0xf]
        %v730 = vunpack.c.l.b16 %v666
        %v731 = vunpack.c.l.b16 %v667
        %v732 = vunpack.c.l.b16 %v668
        %v733 = vunpack.c.l.b16 %v669
        %v734 = vunpack.c.l.b16 %v670
        %v735 = vunpack.c.l.b16 %v671
        %v736 = vunpack.c.l.b16 %v672
        %v737 = vunpack.c.l.b16 %v673
        %v738 = vunpack.c.l.b16 %v674
        %v739 = vunpack.c.l.b16 %v675
        %v740 = vunpack.c.l.b16 %v676
        %v741 = vunpack.c.l.b16 %v677
        %v742 = vunpack.c.l.b16 %v678
        %v743 = vunpack.c.l.b16 %v679
        %v744 = vunpack.c.l.b16 %v680
        %v745 = vunpack.c.l.b16 %v681
        %v746 = vunpack.c.l.b16 %v682
        %v747 = vunpack.c.l.b16 %v683
        %v748 = vunpack.c.l.b16 %v684
        %v749 = vunpack.c.l.b16 %v685
        %v750 = vunpack.c.l.b16 %v686
        %v751 = vunpack.c.l.b16 %v687
        %v752 = vunpack.c.l.b16 %v688
        %v753 = vunpack.c.l.b16 %v689
        %v754 = vunpack.c.l.b16 %v690
        %v755 = vunpack.c.l.b16 %v691
        %v756 = vunpack.c.l.b16 %v692
        %v757 = vunpack.c.l.b16 %v693
        %v758 = vunpack.c.l.b16 %v694
        %v759 = vunpack.c.l.b16 %v695
        %v760 = vunpack.c.l.b16 %v696
        %v761 = vunpack.c.l.b16 %v697
        %v762 = vpack.c.b16 %v731, %v730
        %v763 = vpack.c.b16 %v733, %v732
        %v764 = vpack.c.b16 %v735, %v734
        %v765 = vpack.c.b16 %v737, %v736
        %v766 = vpack.c.b16 %v739, %v738
        %v767 = vpack.c.b16 %v741, %v740
        %v768 = vpack.c.b16 %v743, %v742
        %v769 = vpack.c.b16 %v745, %v744
        %v770 = vpack.c.b16 %v747, %v746
        %v771 = vpack.c.b16 %v749, %v748
        %v772 = vpack.c.b16 %v751, %v750
        %v773 = vpack.c.b16 %v753, %v752
        %v774 = vpack.c.b16 %v755, %v754
        %v775 = vpack.c.b16 %v757, %v756
        %v776 = vpack.c.b16 %v759, %v758
        %v777 = vpack.c.b16 %v761, %v760
        %794 = vmatpush.bf16.msra.mxu0 %v769
        %795 = vmatpush.bf16.msra.mxu0 %v768
        %796 = vmatpush.bf16.msra.mxu0 %v767
        %797 = vmatpush.bf16.msra.mxu0 %v766
        %798 = vmatpush.bf16.msra.mxu0 %v765
        %799 = vmatpush.bf16.msra.mxu0 %v764
        %800 = vmatpush.bf16.msra.mxu0 %v763
        %801 = vmatpush.bf16.msra.mxu0 %v762
        %802 = vmatmul.bf16.gmra.mxu0 %v252
        %v803 = vpop.f32.mrf.mxu0
        %v804 = vadd.f32 0.0, %v803
        %v805 = vpop.f32.mrf.mxu0
        %v806 = vadd.f32 0.0, %v805
        %807 = vmatmul.bf16.gmra.mxu0 %v254
        %v808 = vpop.f32.mrf.mxu0
        %v809 = vadd.f32 0.0, %v808
        %v810 = vpop.f32.mrf.mxu0
        %v811 = vadd.f32 0.0, %v810
        %812 = vmatmul.bf16.gmra.mxu0 %v256
        %v813 = vpop.f32.mrf.mxu0
        %v814 = vadd.f32 0.0, %v813
        %v815 = vpop.f32.mrf.mxu0
        %v816 = vadd.f32 0.0, %v815
        %817 = vmatmul.bf16.gmra.mxu0 %v258
        %v818 = vpop.f32.mrf.mxu0
        %v819 = vadd.f32 0.0, %v818
        %v820 = vpop.f32.mrf.mxu0
        %v821 = vadd.f32 0.0, %v820
        %822 = vdwg.mxu0
        %823 = vmatpush.bf16.msra.mxu0 %v777
        %824 = vmatpush.bf16.msra.mxu0 %v776
        %825 = vmatpush.bf16.msra.mxu0 %v775
        %826 = vmatpush.bf16.msra.mxu0 %v774
        %827 = vmatpush.bf16.msra.mxu0 %v773
        %828 = vmatpush.bf16.msra.mxu0 %v772
        %829 = vmatpush.bf16.msra.mxu0 %v771
        %830 = vmatpush.bf16.msra.mxu0 %v770
        %831 = vmatmul.bf16.gmra.mxu0 %v253
        %v832 = vpop.f32.mrf.mxu0
        %v833 = vadd.f32 %v804, %v832
        %v834 = vpop.f32.mrf.mxu0
        %v835 = vadd.f32 %v806, %v834
        %836 = vmatmul.bf16.gmra.mxu0 %v255
        %v837 = vpop.f32.mrf.mxu0
        %v838 = vadd.f32 %v809, %v837
        %v839 = vpop.f32.mrf.mxu0
        %v840 = vadd.f32 %v811, %v839
        %841 = vmatmul.bf16.gmra.mxu0 %v257
        %v842 = vpop.f32.mrf.mxu0
        %v843 = vadd.f32 %v814, %v842
        %v844 = vpop.f32.mrf.mxu0
        %v845 = vadd.f32 %v816, %v844
        %846 = vmatmul.bf16.gmra.mxu0 %v259
        %v847 = vpop.f32.mrf.mxu0
        %v848 = vadd.f32 %v819, %v847
        %v849 = vpop.f32.mrf.mxu0
        %v850 = vadd.f32 %v821, %v849
        %851 = vdwg.mxu0
        %v852 = vpack.c.bf16 %v833, %v833
        %v853 = vpack.c.bf16 %v835, %v835
        %v854 = vpack.c.bf16 %v838, %v838
        %v855 = vpack.c.bf16 %v840, %v840
        %v856 = vpack.c.bf16 %v843, %v843
        %v857 = vpack.c.bf16 %v845, %v845
        %v858 = vpack.c.bf16 %v848, %v848
        %v859 = vpack.c.bf16 %v850, %v850
        %s860 = scalar_lea.vmem %s216, 32 [#allocation2]
        %861 = vst.msk [vmem:[%s860] sm:$0xf] %vm454, %v852
        %862 = vst.msk [vmem:[%s860 + $0x4] sm:$0xf] %vm454, %v853
        %863 = vst.msk [vmem:[%s860 + $0x8] sm:$0xf] %vm454, %v854
        %864 = vst.msk [vmem:[%s860 + $0xc] sm:$0xf] %vm454, %v855
        %865 = vst.msk [vmem:[%s860 + $0x10] sm:$0xf] %vm454, %v856
        %866 = vst.msk [vmem:[%s860 + $0x14] sm:$0xf] %vm454, %v857
        %867 = vst.msk [vmem:[%s860 + $0x18] sm:$0xf] %vm454, %v858
        %868 = vst.msk [vmem:[%s860 + $0x1c] sm:$0xf] %vm454, %v859
        %s869 = scalar_lea.vmem %s2, 128
        %v870 = vld [vmem:[%s869] sm:$0xf]
        %v871 = vld [vmem:[%s869 + $0x4] sm:$0xf]
        %v872 = vld [vmem:[%s869 + $0x8] sm:$0xf]
        %v873 = vld [vmem:[%s869 + $0xc] sm:$0xf]
        %v874 = vld [vmem:[%s869 + $0x10] sm:$0xf]
        %v875 = vld [vmem:[%s869 + $0x14] sm:$0xf]
        %v876 = vld [vmem:[%s869 + $0x18] sm:$0xf]
        %v877 = vld [vmem:[%s869 + $0x1c] sm:$0xf]
        %v878 = vld [vmem:[%s869 + $0x20] sm:$0xf]
        %v879 = vld [vmem:[%s869 + $0x24] sm:$0xf]
        %v880 = vld [vmem:[%s869 + $0x28] sm:$0xf]
        %v881 = vld [vmem:[%s869 + $0x2c] sm:$0xf]
        %v882 = vld [vmem:[%s869 + $0x30] sm:$0xf]
        %v883 = vld [vmem:[%s869 + $0x34] sm:$0xf]
        %v884 = vld [vmem:[%s869 + $0x38] sm:$0xf]
        %v885 = vld [vmem:[%s869 + $0x3c] sm:$0xf]
        %v886 = vld [vmem:[%s869 + $0x40] sm:$0xf]
        %v887 = vld [vmem:[%s869 + $0x44] sm:$0xf]
        %v888 = vld [vmem:[%s869 + $0x48] sm:$0xf]
        %v889 = vld [vmem:[%s869 + $0x4c] sm:$0xf]
        %v890 = vld [vmem:[%s869 + $0x50] sm:$0xf]
        %v891 = vld [vmem:[%s869 + $0x54] sm:$0xf]
        %v892 = vld [vmem:[%s869 + $0x58] sm:$0xf]
        %v893 = vld [vmem:[%s869 + $0x5c] sm:$0xf]
        %v894 = vld [vmem:[%s869 + $0x60] sm:$0xf]
        %v895 = vld [vmem:[%s869 + $0x64] sm:$0xf]
        %v896 = vld [vmem:[%s869 + $0x68] sm:$0xf]
        %v897 = vld [vmem:[%s869 + $0x6c] sm:$0xf]
        %v898 = vld [vmem:[%s869 + $0x70] sm:$0xf]
        %v899 = vld [vmem:[%s869 + $0x74] sm:$0xf]
        %v900 = vld [vmem:[%s869 + $0x78] sm:$0xf]
        %v901 = vld [vmem:[%s869 + $0x7c] sm:$0xf]
        %v934 = vunpack.c.l.b16 %v870
        %v935 = vunpack.c.l.b16 %v871
        %v936 = vunpack.c.l.b16 %v872
        %v937 = vunpack.c.l.b16 %v873
        %v938 = vunpack.c.l.b16 %v874
        %v939 = vunpack.c.l.b16 %v875
        %v940 = vunpack.c.l.b16 %v876
        %v941 = vunpack.c.l.b16 %v877
        %v942 = vunpack.c.l.b16 %v878
        %v943 = vunpack.c.l.b16 %v879
        %v944 = vunpack.c.l.b16 %v880
        %v945 = vunpack.c.l.b16 %v881
        %v946 = vunpack.c.l.b16 %v882
        %v947 = vunpack.c.l.b16 %v883
        %v948 = vunpack.c.l.b16 %v884
        %v949 = vunpack.c.l.b16 %v885
        %v950 = vunpack.c.l.b16 %v886
        %v951 = vunpack.c.l.b16 %v887
        %v952 = vunpack.c.l.b16 %v888
        %v953 = vunpack.c.l.b16 %v889
        %v954 = vunpack.c.l.b16 %v890
        %v955 = vunpack.c.l.b16 %v891
        %v956 = vunpack.c.l.b16 %v892
        %v957 = vunpack.c.l.b16 %v893
        %v958 = vunpack.c.l.b16 %v894
        %v959 = vunpack.c.l.b16 %v895
        %v960 = vunpack.c.l.b16 %v896
        %v961 = vunpack.c.l.b16 %v897
        %v962 = vunpack.c.l.b16 %v898
        %v963 = vunpack.c.l.b16 %v899
        %v964 = vunpack.c.l.b16 %v900
        %v965 = vunpack.c.l.b16 %v901
        %v966 = vpack.c.b16 %v935, %v934
        %v967 = vpack.c.b16 %v937, %v936
        %v968 = vpack.c.b16 %v939, %v938
        %v969 = vpack.c.b16 %v941, %v940
        %v970 = vpack.c.b16 %v943, %v942
        %v971 = vpack.c.b16 %v945, %v944
        %v972 = vpack.c.b16 %v947, %v946
        %v973 = vpack.c.b16 %v949, %v948
        %v974 = vpack.c.b16 %v951, %v950
        %v975 = vpack.c.b16 %v953, %v952
        %v976 = vpack.c.b16 %v955, %v954
        %v977 = vpack.c.b16 %v957, %v956
        %v978 = vpack.c.b16 %v959, %v958
        %v979 = vpack.c.b16 %v961, %v960
        %v980 = vpack.c.b16 %v963, %v962
        %v981 = vpack.c.b16 %v965, %v964
        %998 = vmatpush.bf16.msra.mxu0 %v973
        %999 = vmatpush.bf16.msra.mxu0 %v972
        %1000 = vmatpush.bf16.msra.mxu0 %v971
        %1001 = vmatpush.bf16.msra.mxu0 %v970
        %1002 = vmatpush.bf16.msra.mxu0 %v969
        %1003 = vmatpush.bf16.msra.mxu0 %v968
        %1004 = vmatpush.bf16.msra.mxu0 %v967
        %1005 = vmatpush.bf16.msra.mxu0 %v966
        %1006 = vmatmul.bf16.gmra.mxu0 %v252
        %v1007 = vpop.f32.mrf.mxu0
        %v1008 = vadd.f32 0.0, %v1007
        %v1009 = vpop.f32.mrf.mxu0
        %v1010 = vadd.f32 0.0, %v1009
        %1011 = vmatmul.bf16.gmra.mxu0 %v254
        %v1012 = vpop.f32.mrf.mxu0
        %v1013 = vadd.f32 0.0, %v1012
        %v1014 = vpop.f32.mrf.mxu0
        %v1015 = vadd.f32 0.0, %v1014
        %1016 = vmatmul.bf16.gmra.mxu0 %v256
        %v1017 = vpop.f32.mrf.mxu0
        %v1018 = vadd.f32 0.0, %v1017
        %v1019 = vpop.f32.mrf.mxu0
        %v1020 = vadd.f32 0.0, %v1019
        %1021 = vmatmul.bf16.gmra.mxu0 %v258
        %v1022 = vpop.f32.mrf.mxu0
        %v1023 = vadd.f32 0.0, %v1022
        %v1024 = vpop.f32.mrf.mxu0
        %v1025 = vadd.f32 0.0, %v1024
        %1026 = vdwg.mxu0
        %1027 = vmatpush.bf16.msra.mxu0 %v981
        %1028 = vmatpush.bf16.msra.mxu0 %v980
        %1029 = vmatpush.bf16.msra.mxu0 %v979
        %1030 = vmatpush.bf16.msra.mxu0 %v978
        %1031 = vmatpush.bf16.msra.mxu0 %v977
        %1032 = vmatpush.bf16.msra.mxu0 %v976
        %1033 = vmatpush.bf16.msra.mxu0 %v975
        %1034 = vmatpush.bf16.msra.mxu0 %v974
        %1035 = vmatmul.bf16.gmra.mxu0 %v253
        %v1036 = vpop.f32.mrf.mxu0
        %v1037 = vadd.f32 %v1008, %v1036
        %v1038 = vpop.f32.mrf.mxu0
        %v1039 = vadd.f32 %v1010, %v1038
        %1040 = vmatmul.bf16.gmra.mxu0 %v255
        %v1041 = vpop.f32.mrf.mxu0
        %v1042 = vadd.f32 %v1013, %v1041
        %v1043 = vpop.f32.mrf.mxu0
        %v1044 = vadd.f32 %v1015, %v1043
        %1045 = vmatmul.bf16.gmra.mxu0 %v257
        %v1046 = vpop.f32.mrf.mxu0
        %v1047 = vadd.f32 %v1018, %v1046
        %v1048 = vpop.f32.mrf.mxu0
        %v1049 = vadd.f32 %v1020, %v1048
        %1050 = vmatmul.bf16.gmra.mxu0 %v259
        %v1051 = vpop.f32.mrf.mxu0
        %v1052 = vadd.f32 %v1023, %v1051
        %v1053 = vpop.f32.mrf.mxu0
        %v1054 = vadd.f32 %v1025, %v1053
        %1055 = vdwg.mxu0
        %v1056 = vpack.c.bf16 %v1037, %v1037
        %v1057 = vpack.c.bf16 %v1039, %v1039
        %v1058 = vpack.c.bf16 %v1042, %v1042
        %v1059 = vpack.c.bf16 %v1044, %v1044
        %v1060 = vpack.c.bf16 %v1047, %v1047
        %v1061 = vpack.c.bf16 %v1049, %v1049
        %v1062 = vpack.c.bf16 %v1052, %v1052
        %v1063 = vpack.c.bf16 %v1054, %v1054
        %s1064 = scalar_lea.vmem %s222, 32 [#allocation3]
        %1065 = vst.msk [vmem:[%s1064] sm:$0xf] %vm454, %v1056
        %1066 = vst.msk [vmem:[%s1064 + $0x4] sm:$0xf] %vm454, %v1057
        %1067 = vst.msk [vmem:[%s1064 + $0x8] sm:$0xf] %vm454, %v1058
        %1068 = vst.msk [vmem:[%s1064 + $0xc] sm:$0xf] %vm454, %v1059
        %1069 = vst.msk [vmem:[%s1064 + $0x10] sm:$0xf] %vm454, %v1060
        %1070 = vst.msk [vmem:[%s1064 + $0x14] sm:$0xf] %vm454, %v1061
        %1071 = vst.msk [vmem:[%s1064 + $0x18] sm:$0xf] %vm454, %v1062
        %1072 = vst.msk [vmem:[%s1064 + $0x1c] sm:$0xf] %vm454, %v1063
        %s1073 = scalar_lea.vmem %s1, 256
        %v1074 = vld [vmem:[%s1073] sm:$0xf]
        %v1075 = vld [vmem:[%s1073 + $0x4] sm:$0xf]
        %v1076 = vld [vmem:[%s1073 + $0x8] sm:$0xf]
        %v1077 = vld [vmem:[%s1073 + $0xc] sm:$0xf]
        %v1078 = vld [vmem:[%s1073 + $0x10] sm:$0xf]
        %v1079 = vld [vmem:[%s1073 + $0x14] sm:$0xf]
        %v1080 = vld [vmem:[%s1073 + $0x18] sm:$0xf]
        %v1081 = vld [vmem:[%s1073 + $0x1c] sm:$0xf]
        %v1082 = vld [vmem:[%s1073 + $0x20] sm:$0xf]
        %v1083 = vld [vmem:[%s1073 + $0x24] sm:$0xf]
        %v1084 = vld [vmem:[%s1073 + $0x28] sm:$0xf]
        %v1085 = vld [vmem:[%s1073 + $0x2c] sm:$0xf]
        %v1086 = vld [vmem:[%s1073 + $0x30] sm:$0xf]
        %v1087 = vld [vmem:[%s1073 + $0x34] sm:$0xf]
        %v1088 = vld [vmem:[%s1073 + $0x38] sm:$0xf]
        %v1089 = vld [vmem:[%s1073 + $0x3c] sm:$0xf]
        %v1090 = vld [vmem:[%s1073 + $0x40] sm:$0xf]
        %v1091 = vld [vmem:[%s1073 + $0x44] sm:$0xf]
        %v1092 = vld [vmem:[%s1073 + $0x48] sm:$0xf]
        %v1093 = vld [vmem:[%s1073 + $0x4c] sm:$0xf]
        %v1094 = vld [vmem:[%s1073 + $0x50] sm:$0xf]
        %v1095 = vld [vmem:[%s1073 + $0x54] sm:$0xf]
        %v1096 = vld [vmem:[%s1073 + $0x58] sm:$0xf]
        %v1097 = vld [vmem:[%s1073 + $0x5c] sm:$0xf]
        %v1098 = vld [vmem:[%s1073 + $0x60] sm:$0xf]
        %v1099 = vld [vmem:[%s1073 + $0x64] sm:$0xf]
        %v1100 = vld [vmem:[%s1073 + $0x68] sm:$0xf]
        %v1101 = vld [vmem:[%s1073 + $0x6c] sm:$0xf]
        %v1102 = vld [vmem:[%s1073 + $0x70] sm:$0xf]
        %v1103 = vld [vmem:[%s1073 + $0x74] sm:$0xf]
        %v1104 = vld [vmem:[%s1073 + $0x78] sm:$0xf]
        %v1105 = vld [vmem:[%s1073 + $0x7c] sm:$0xf]
        %v1138 = vunpack.c.l.b16 %v1074
        %v1139 = vunpack.c.l.b16 %v1075
        %v1140 = vunpack.c.l.b16 %v1076
        %v1141 = vunpack.c.l.b16 %v1077
        %v1142 = vunpack.c.l.b16 %v1078
        %v1143 = vunpack.c.l.b16 %v1079
        %v1144 = vunpack.c.l.b16 %v1080
        %v1145 = vunpack.c.l.b16 %v1081
        %v1146 = vunpack.c.l.b16 %v1082
        %v1147 = vunpack.c.l.b16 %v1083
        %v1148 = vunpack.c.l.b16 %v1084
        %v1149 = vunpack.c.l.b16 %v1085
        %v1150 = vunpack.c.l.b16 %v1086
        %v1151 = vunpack.c.l.b16 %v1087
        %v1152 = vunpack.c.l.b16 %v1088
        %v1153 = vunpack.c.l.b16 %v1089
        %v1154 = vunpack.c.l.b16 %v1090
        %v1155 = vunpack.c.l.b16 %v1091
        %v1156 = vunpack.c.l.b16 %v1092
        %v1157 = vunpack.c.l.b16 %v1093
        %v1158 = vunpack.c.l.b16 %v1094
        %v1159 = vunpack.c.l.b16 %v1095
        %v1160 = vunpack.c.l.b16 %v1096
        %v1161 = vunpack.c.l.b16 %v1097
        %v1162 = vunpack.c.l.b16 %v1098
        %v1163 = vunpack.c.l.b16 %v1099
        %v1164 = vunpack.c.l.b16 %v1100
        %v1165 = vunpack.c.l.b16 %v1101
        %v1166 = vunpack.c.l.b16 %v1102
        %v1167 = vunpack.c.l.b16 %v1103
        %v1168 = vunpack.c.l.b16 %v1104
        %v1169 = vunpack.c.l.b16 %v1105
        %v1170 = vpack.c.b16 %v1139, %v1138
        %v1171 = vpack.c.b16 %v1141, %v1140
        %v1172 = vpack.c.b16 %v1143, %v1142
        %v1173 = vpack.c.b16 %v1145, %v1144
        %v1174 = vpack.c.b16 %v1147, %v1146
        %v1175 = vpack.c.b16 %v1149, %v1148
        %v1176 = vpack.c.b16 %v1151, %v1150
        %v1177 = vpack.c.b16 %v1153, %v1152
        %v1178 = vpack.c.b16 %v1155, %v1154
        %v1179 = vpack.c.b16 %v1157, %v1156
        %v1180 = vpack.c.b16 %v1159, %v1158
        %v1181 = vpack.c.b16 %v1161, %v1160
        %v1182 = vpack.c.b16 %v1163, %v1162
        %v1183 = vpack.c.b16 %v1165, %v1164
        %v1184 = vpack.c.b16 %v1167, %v1166
        %v1185 = vpack.c.b16 %v1169, %v1168
        %1202 = vmatpush.bf16.msra.mxu0 %v1177
        %1203 = vmatpush.bf16.msra.mxu0 %v1176
        %1204 = vmatpush.bf16.msra.mxu0 %v1175
        %1205 = vmatpush.bf16.msra.mxu0 %v1174
        %1206 = vmatpush.bf16.msra.mxu0 %v1173
        %1207 = vmatpush.bf16.msra.mxu0 %v1172
        %1208 = vmatpush.bf16.msra.mxu0 %v1171
        %1209 = vmatpush.bf16.msra.mxu0 %v1170
        %1210 = vmatmul.bf16.gmra.mxu0 %v252
        %v1211 = vpop.f32.mrf.mxu0
        %v1212 = vadd.f32 0.0, %v1211
        %v1213 = vpop.f32.mrf.mxu0
        %v1214 = vadd.f32 0.0, %v1213
        %1215 = vmatmul.bf16.gmra.mxu0 %v254
        %v1216 = vpop.f32.mrf.mxu0
        %v1217 = vadd.f32 0.0, %v1216
        %v1218 = vpop.f32.mrf.mxu0
        %v1219 = vadd.f32 0.0, %v1218
        %1220 = vmatmul.bf16.gmra.mxu0 %v256
        %v1221 = vpop.f32.mrf.mxu0
        %v1222 = vadd.f32 0.0, %v1221
        %v1223 = vpop.f32.mrf.mxu0
        %v1224 = vadd.f32 0.0, %v1223
        %1225 = vmatmul.bf16.gmra.mxu0 %v258
        %v1226 = vpop.f32.mrf.mxu0
        %v1227 = vadd.f32 0.0, %v1226
        %v1228 = vpop.f32.mrf.mxu0
        %v1229 = vadd.f32 0.0, %v1228
        %1230 = vdwg.mxu0
        %1231 = vmatpush.bf16.msra.mxu0 %v1185
        %1232 = vmatpush.bf16.msra.mxu0 %v1184
        %1233 = vmatpush.bf16.msra.mxu0 %v1183
        %1234 = vmatpush.bf16.msra.mxu0 %v1182
        %1235 = vmatpush.bf16.msra.mxu0 %v1181
        %1236 = vmatpush.bf16.msra.mxu0 %v1180
        %1237 = vmatpush.bf16.msra.mxu0 %v1179
        %1238 = vmatpush.bf16.msra.mxu0 %v1178
        %1239 = vmatmul.bf16.gmra.mxu0 %v253
        %v1240 = vpop.f32.mrf.mxu0
        %v1241 = vadd.f32 %v1212, %v1240
        %v1242 = vpop.f32.mrf.mxu0
        %v1243 = vadd.f32 %v1214, %v1242
        %1244 = vmatmul.bf16.gmra.mxu0 %v255
        %v1245 = vpop.f32.mrf.mxu0
        %v1246 = vadd.f32 %v1217, %v1245
        %v1247 = vpop.f32.mrf.mxu0
        %v1248 = vadd.f32 %v1219, %v1247
        %1249 = vmatmul.bf16.gmra.mxu0 %v257
        %v1250 = vpop.f32.mrf.mxu0
        %v1251 = vadd.f32 %v1222, %v1250
        %v1252 = vpop.f32.mrf.mxu0
        %v1253 = vadd.f32 %v1224, %v1252
        %1254 = vmatmul.bf16.gmra.mxu0 %v259
        %v1255 = vpop.f32.mrf.mxu0
        %v1256 = vadd.f32 %v1227, %v1255
        %v1257 = vpop.f32.mrf.mxu0
        %v1258 = vadd.f32 %v1229, %v1257
        %1259 = vdwg.mxu0
        %v1260 = vpack.c.bf16 %v1241, %v1241
        %v1261 = vpack.c.bf16 %v1243, %v1243
        %v1262 = vpack.c.bf16 %v1246, %v1246
        %v1263 = vpack.c.bf16 %v1248, %v1248
        %v1264 = vpack.c.bf16 %v1251, %v1251
        %v1265 = vpack.c.bf16 %v1253, %v1253
        %v1266 = vpack.c.bf16 %v1256, %v1256
        %v1267 = vpack.c.bf16 %v1258, %v1258
        %s1268 = scalar_lea.vmem %s216, 64 [#allocation2]
        %1269 = vst.msk [vmem:[%s1268] sm:$0xf] %vm454, %v1260
        %1270 = vst.msk [vmem:[%s1268 + $0x4] sm:$0xf] %vm454, %v1261
        %1271 = vst.msk [vmem:[%s1268 + $0x8] sm:$0xf] %vm454, %v1262
        %1272 = vst.msk [vmem:[%s1268 + $0xc] sm:$0xf] %vm454, %v1263
        %1273 = vst.msk [vmem:[%s1268 + $0x10] sm:$0xf] %vm454, %v1264
        %1274 = vst.msk [vmem:[%s1268 + $0x14] sm:$0xf] %vm454, %v1265
        %1275 = vst.msk [vmem:[%s1268 + $0x18] sm:$0xf] %vm454, %v1266
        %1276 = vst.msk [vmem:[%s1268 + $0x1c] sm:$0xf] %vm454, %v1267
        %s1277 = scalar_lea.vmem %s2, 256
        %v1278 = vld [vmem:[%s1277] sm:$0xf]
        %v1279 = vld [vmem:[%s1277 + $0x4] sm:$0xf]
        %v1280 = vld [vmem:[%s1277 + $0x8] sm:$0xf]
        %v1281 = vld [vmem:[%s1277 + $0xc] sm:$0xf]
        %v1282 = vld [vmem:[%s1277 + $0x10] sm:$0xf]
        %v1283 = vld [vmem:[%s1277 + $0x14] sm:$0xf]
        %v1284 = vld [vmem:[%s1277 + $0x18] sm:$0xf]
        %v1285 = vld [vmem:[%s1277 + $0x1c] sm:$0xf]
        %v1286 = vld [vmem:[%s1277 + $0x20] sm:$0xf]
        %v1287 = vld [vmem:[%s1277 + $0x24] sm:$0xf]
        %v1288 = vld [vmem:[%s1277 + $0x28] sm:$0xf]
        %v1289 = vld [vmem:[%s1277 + $0x2c] sm:$0xf]
        %v1290 = vld [vmem:[%s1277 + $0x30] sm:$0xf]
        %v1291 = vld [vmem:[%s1277 + $0x34] sm:$0xf]
        %v1292 = vld [vmem:[%s1277 + $0x38] sm:$0xf]
        %v1293 = vld [vmem:[%s1277 + $0x3c] sm:$0xf]
        %v1294 = vld [vmem:[%s1277 + $0x40] sm:$0xf]
        %v1295 = vld [vmem:[%s1277 + $0x44] sm:$0xf]
        %v1296 = vld [vmem:[%s1277 + $0x48] sm:$0xf]
        %v1297 = vld [vmem:[%s1277 + $0x4c] sm:$0xf]
        %v1298 = vld [vmem:[%s1277 + $0x50] sm:$0xf]
        %v1299 = vld [vmem:[%s1277 + $0x54] sm:$0xf]
        %v1300 = vld [vmem:[%s1277 + $0x58] sm:$0xf]
        %v1301 = vld [vmem:[%s1277 + $0x5c] sm:$0xf]
        %v1302 = vld [vmem:[%s1277 + $0x60] sm:$0xf]
        %v1303 = vld [vmem:[%s1277 + $0x64] sm:$0xf]
        %v1304 = vld [vmem:[%s1277 + $0x68] sm:$0xf]
        %v1305 = vld [vmem:[%s1277 + $0x6c] sm:$0xf]
        %v1306 = vld [vmem:[%s1277 + $0x70] sm:$0xf]
        %v1307 = vld [vmem:[%s1277 + $0x74] sm:$0xf]
        %v1308 = vld [vmem:[%s1277 + $0x78] sm:$0xf]
        %v1309 = vld [vmem:[%s1277 + $0x7c] sm:$0xf]
        %v1342 = vunpack.c.l.b16 %v1278
        %v1343 = vunpack.c.l.b16 %v1279
        %v1344 = vunpack.c.l.b16 %v1280
        %v1345 = vunpack.c.l.b16 %v1281
        %v1346 = vunpack.c.l.b16 %v1282
        %v1347 = vunpack.c.l.b16 %v1283
        %v1348 = vunpack.c.l.b16 %v1284
        %v1349 = vunpack.c.l.b16 %v1285
        %v1350 = vunpack.c.l.b16 %v1286
        %v1351 = vunpack.c.l.b16 %v1287
        %v1352 = vunpack.c.l.b16 %v1288
        %v1353 = vunpack.c.l.b16 %v1289
        %v1354 = vunpack.c.l.b16 %v1290
        %v1355 = vunpack.c.l.b16 %v1291
        %v1356 = vunpack.c.l.b16 %v1292
        %v1357 = vunpack.c.l.b16 %v1293
        %v1358 = vunpack.c.l.b16 %v1294
        %v1359 = vunpack.c.l.b16 %v1295
        %v1360 = vunpack.c.l.b16 %v1296
        %v1361 = vunpack.c.l.b16 %v1297
        %v1362 = vunpack.c.l.b16 %v1298
        %v1363 = vunpack.c.l.b16 %v1299
        %v1364 = vunpack.c.l.b16 %v1300
        %v1365 = vunpack.c.l.b16 %v1301
        %v1366 = vunpack.c.l.b16 %v1302
        %v1367 = vunpack.c.l.b16 %v1303
        %v1368 = vunpack.c.l.b16 %v1304
        %v1369 = vunpack.c.l.b16 %v1305
        %v1370 = vunpack.c.l.b16 %v1306
        %v1371 = vunpack.c.l.b16 %v1307
        %v1372 = vunpack.c.l.b16 %v1308
        %v1373 = vunpack.c.l.b16 %v1309
        %v1374 = vpack.c.b16 %v1343, %v1342
        %v1375 = vpack.c.b16 %v1345, %v1344
        %v1376 = vpack.c.b16 %v1347, %v1346
        %v1377 = vpack.c.b16 %v1349, %v1348
        %v1378 = vpack.c.b16 %v1351, %v1350
        %v1379 = vpack.c.b16 %v1353, %v1352
        %v1380 = vpack.c.b16 %v1355, %v1354
        %v1381 = vpack.c.b16 %v1357, %v1356
        %v1382 = vpack.c.b16 %v1359, %v1358
        %v1383 = vpack.c.b16 %v1361, %v1360
        %v1384 = vpack.c.b16 %v1363, %v1362
        %v1385 = vpack.c.b16 %v1365, %v1364
        %v1386 = vpack.c.b16 %v1367, %v1366
        %v1387 = vpack.c.b16 %v1369, %v1368
        %v1388 = vpack.c.b16 %v1371, %v1370
        %v1389 = vpack.c.b16 %v1373, %v1372
        %1406 = vmatpush.bf16.msra.mxu0 %v1381
        %1407 = vmatpush.bf16.msra.mxu0 %v1380
        %1408 = vmatpush.bf16.msra.mxu0 %v1379
        %1409 = vmatpush.bf16.msra.mxu0 %v1378
        %1410 = vmatpush.bf16.msra.mxu0 %v1377
        %1411 = vmatpush.bf16.msra.mxu0 %v1376
        %1412 = vmatpush.bf16.msra.mxu0 %v1375
        %1413 = vmatpush.bf16.msra.mxu0 %v1374
        %1414 = vmatmul.bf16.gmra.mxu0 %v252
        %v1415 = vpop.f32.mrf.mxu0
        %v1416 = vadd.f32 0.0, %v1415
        %v1417 = vpop.f32.mrf.mxu0
        %v1418 = vadd.f32 0.0, %v1417
        %1419 = vmatmul.bf16.gmra.mxu0 %v254
        %v1420 = vpop.f32.mrf.mxu0
        %v1421 = vadd.f32 0.0, %v1420
        %v1422 = vpop.f32.mrf.mxu0
        %v1423 = vadd.f32 0.0, %v1422
        %1424 = vmatmul.bf16.gmra.mxu0 %v256
        %v1425 = vpop.f32.mrf.mxu0
        %v1426 = vadd.f32 0.0, %v1425
        %v1427 = vpop.f32.mrf.mxu0
        %v1428 = vadd.f32 0.0, %v1427
        %1429 = vmatmul.bf16.gmra.mxu0 %v258
        %v1430 = vpop.f32.mrf.mxu0
        %v1431 = vadd.f32 0.0, %v1430
        %v1432 = vpop.f32.mrf.mxu0
        %v1433 = vadd.f32 0.0, %v1432
        %1434 = vdwg.mxu0
        %1435 = vmatpush.bf16.msra.mxu0 %v1389
        %1436 = vmatpush.bf16.msra.mxu0 %v1388
        %1437 = vmatpush.bf16.msra.mxu0 %v1387
        %1438 = vmatpush.bf16.msra.mxu0 %v1386
        %1439 = vmatpush.bf16.msra.mxu0 %v1385
        %1440 = vmatpush.bf16.msra.mxu0 %v1384
        %1441 = vmatpush.bf16.msra.mxu0 %v1383
        %1442 = vmatpush.bf16.msra.mxu0 %v1382
        %1443 = vmatmul.bf16.gmra.mxu0 %v253
        %v1444 = vpop.f32.mrf.mxu0
        %v1445 = vadd.f32 %v1416, %v1444
        %v1446 = vpop.f32.mrf.mxu0
        %v1447 = vadd.f32 %v1418, %v1446
        %1448 = vmatmul.bf16.gmra.mxu0 %v255
        %v1449 = vpop.f32.mrf.mxu0
        %v1450 = vadd.f32 %v1421, %v1449
        %v1451 = vpop.f32.mrf.mxu0
        %v1452 = vadd.f32 %v1423, %v1451
        %1453 = vmatmul.bf16.gmra.mxu0 %v257
        %v1454 = vpop.f32.mrf.mxu0
        %v1455 = vadd.f32 %v1426, %v1454
        %v1456 = vpop.f32.mrf.mxu0
        %v1457 = vadd.f32 %v1428, %v1456
        %1458 = vmatmul.bf16.gmra.mxu0 %v259
        %v1459 = vpop.f32.mrf.mxu0
        %v1460 = vadd.f32 %v1431, %v1459
        %v1461 = vpop.f32.mrf.mxu0
        %v1462 = vadd.f32 %v1433, %v1461
        %1463 = vdwg.mxu0
        %v1464 = vpack.c.bf16 %v1445, %v1445
        %v1465 = vpack.c.bf16 %v1447, %v1447
        %v1466 = vpack.c.bf16 %v1450, %v1450
        %v1467 = vpack.c.bf16 %v1452, %v1452
        %v1468 = vpack.c.bf16 %v1455, %v1455
        %v1469 = vpack.c.bf16 %v1457, %v1457
        %v1470 = vpack.c.bf16 %v1460, %v1460
        %v1471 = vpack.c.bf16 %v1462, %v1462
        %s1472 = scalar_lea.vmem %s222, 64 [#allocation3]
        %1473 = vst.msk [vmem:[%s1472] sm:$0xf] %vm454, %v1464
        %1474 = vst.msk [vmem:[%s1472 + $0x4] sm:$0xf] %vm454, %v1465
        %1475 = vst.msk [vmem:[%s1472 + $0x8] sm:$0xf] %vm454, %v1466
        %1476 = vst.msk [vmem:[%s1472 + $0xc] sm:$0xf] %vm454, %v1467
        %1477 = vst.msk [vmem:[%s1472 + $0x10] sm:$0xf] %vm454, %v1468
        %1478 = vst.msk [vmem:[%s1472 + $0x14] sm:$0xf] %vm454, %v1469
        %1479 = vst.msk [vmem:[%s1472 + $0x18] sm:$0xf] %vm454, %v1470
        %1480 = vst.msk [vmem:[%s1472 + $0x1c] sm:$0xf] %vm454, %v1471
        %s1481 = scalar_lea.vmem %s1, 384
        %v1482 = vld [vmem:[%s1481] sm:$0xf]
        %v1483 = vld [vmem:[%s1481 + $0x4] sm:$0xf]
        %v1484 = vld [vmem:[%s1481 + $0x8] sm:$0xf]
        %v1485 = vld [vmem:[%s1481 + $0xc] sm:$0xf]
        %v1486 = vld [vmem:[%s1481 + $0x10] sm:$0xf]
        %v1487 = vld [vmem:[%s1481 + $0x14] sm:$0xf]
        %v1488 = vld [vmem:[%s1481 + $0x18] sm:$0xf]
        %v1489 = vld [vmem:[%s1481 + $0x1c] sm:$0xf]
        %v1490 = vld [vmem:[%s1481 + $0x20] sm:$0xf]
        %v1491 = vld [vmem:[%s1481 + $0x24] sm:$0xf]
        %v1492 = vld [vmem:[%s1481 + $0x28] sm:$0xf]
        %v1493 = vld [vmem:[%s1481 + $0x2c] sm:$0xf]
        %v1494 = vld [vmem:[%s1481 + $0x30] sm:$0xf]
        %v1495 = vld [vmem:[%s1481 + $0x34] sm:$0xf]
        %v1496 = vld [vmem:[%s1481 + $0x38] sm:$0xf]
        %v1497 = vld [vmem:[%s1481 + $0x3c] sm:$0xf]
        %v1498 = vld [vmem:[%s1481 + $0x40] sm:$0xf]
        %v1499 = vld [vmem:[%s1481 + $0x44] sm:$0xf]
        %v1500 = vld [vmem:[%s1481 + $0x48] sm:$0xf]
        %v1501 = vld [vmem:[%s1481 + $0x4c] sm:$0xf]
        %v1502 = vld [vmem:[%s1481 + $0x50] sm:$0xf]
        %v1503 = vld [vmem:[%s1481 + $0x54] sm:$0xf]
        %v1504 = vld [vmem:[%s1481 + $0x58] sm:$0xf]
        %v1505 = vld [vmem:[%s1481 + $0x5c] sm:$0xf]
        %v1506 = vld [vmem:[%s1481 + $0x60] sm:$0xf]
        %v1507 = vld [vmem:[%s1481 + $0x64] sm:$0xf]
        %v1508 = vld [vmem:[%s1481 + $0x68] sm:$0xf]
        %v1509 = vld [vmem:[%s1481 + $0x6c] sm:$0xf]
        %v1510 = vld [vmem:[%s1481 + $0x70] sm:$0xf]
        %v1511 = vld [vmem:[%s1481 + $0x74] sm:$0xf]
        %v1512 = vld [vmem:[%s1481 + $0x78] sm:$0xf]
        %v1513 = vld [vmem:[%s1481 + $0x7c] sm:$0xf]
        %v1546 = vunpack.c.l.b16 %v1482
        %v1547 = vunpack.c.l.b16 %v1483
        %v1548 = vunpack.c.l.b16 %v1484
        %v1549 = vunpack.c.l.b16 %v1485
        %v1550 = vunpack.c.l.b16 %v1486
        %v1551 = vunpack.c.l.b16 %v1487
        %v1552 = vunpack.c.l.b16 %v1488
        %v1553 = vunpack.c.l.b16 %v1489
        %v1554 = vunpack.c.l.b16 %v1490
        %v1555 = vunpack.c.l.b16 %v1491
        %v1556 = vunpack.c.l.b16 %v1492
        %v1557 = vunpack.c.l.b16 %v1493
        %v1558 = vunpack.c.l.b16 %v1494
        %v1559 = vunpack.c.l.b16 %v1495
        %v1560 = vunpack.c.l.b16 %v1496
        %v1561 = vunpack.c.l.b16 %v1497
        %v1562 = vunpack.c.l.b16 %v1498
        %v1563 = vunpack.c.l.b16 %v1499
        %v1564 = vunpack.c.l.b16 %v1500
        %v1565 = vunpack.c.l.b16 %v1501
        %v1566 = vunpack.c.l.b16 %v1502
        %v1567 = vunpack.c.l.b16 %v1503
        %v1568 = vunpack.c.l.b16 %v1504
        %v1569 = vunpack.c.l.b16 %v1505
        %v1570 = vunpack.c.l.b16 %v1506
        %v1571 = vunpack.c.l.b16 %v1507
        %v1572 = vunpack.c.l.b16 %v1508
        %v1573 = vunpack.c.l.b16 %v1509
        %v1574 = vunpack.c.l.b16 %v1510
        %v1575 = vunpack.c.l.b16 %v1511
        %v1576 = vunpack.c.l.b16 %v1512
        %v1577 = vunpack.c.l.b16 %v1513
        %v1578 = vpack.c.b16 %v1547, %v1546
        %v1579 = vpack.c.b16 %v1549, %v1548
        %v1580 = vpack.c.b16 %v1551, %v1550
        %v1581 = vpack.c.b16 %v1553, %v1552
        %v1582 = vpack.c.b16 %v1555, %v1554
        %v1583 = vpack.c.b16 %v1557, %v1556
        %v1584 = vpack.c.b16 %v1559, %v1558
        %v1585 = vpack.c.b16 %v1561, %v1560
        %v1586 = vpack.c.b16 %v1563, %v1562
        %v1587 = vpack.c.b16 %v1565, %v1564
        %v1588 = vpack.c.b16 %v1567, %v1566
        %v1589 = vpack.c.b16 %v1569, %v1568
        %v1590 = vpack.c.b16 %v1571, %v1570
        %v1591 = vpack.c.b16 %v1573, %v1572
        %v1592 = vpack.c.b16 %v1575, %v1574
        %v1593 = vpack.c.b16 %v1577, %v1576
        %1610 = vmatpush.bf16.msra.mxu0 %v1585
        %1611 = vmatpush.bf16.msra.mxu0 %v1584
        %1612 = vmatpush.bf16.msra.mxu0 %v1583
        %1613 = vmatpush.bf16.msra.mxu0 %v1582
        %1614 = vmatpush.bf16.msra.mxu0 %v1581
        %1615 = vmatpush.bf16.msra.mxu0 %v1580
        %1616 = vmatpush.bf16.msra.mxu0 %v1579
        %1617 = vmatpush.bf16.msra.mxu0 %v1578
        %1618 = vmatmul.bf16.gmra.mxu0 %v252
        %v1619 = vpop.f32.mrf.mxu0
        %v1620 = vadd.f32 0.0, %v1619
        %v1621 = vpop.f32.mrf.mxu0
        %v1622 = vadd.f32 0.0, %v1621
        %1623 = vmatmul.bf16.gmra.mxu0 %v254
        %v1624 = vpop.f32.mrf.mxu0
        %v1625 = vadd.f32 0.0, %v1624
        %v1626 = vpop.f32.mrf.mxu0
        %v1627 = vadd.f32 0.0, %v1626
        %1628 = vmatmul.bf16.gmra.mxu0 %v256
        %v1629 = vpop.f32.mrf.mxu0
        %v1630 = vadd.f32 0.0, %v1629
        %v1631 = vpop.f32.mrf.mxu0
        %v1632 = vadd.f32 0.0, %v1631
        %1633 = vmatmul.bf16.gmra.mxu0 %v258
        %v1634 = vpop.f32.mrf.mxu0
        %v1635 = vadd.f32 0.0, %v1634
        %v1636 = vpop.f32.mrf.mxu0
        %v1637 = vadd.f32 0.0, %v1636
        %1638 = vdwg.mxu0
        %1639 = vmatpush.bf16.msra.mxu0 %v1593
        %1640 = vmatpush.bf16.msra.mxu0 %v1592
        %1641 = vmatpush.bf16.msra.mxu0 %v1591
        %1642 = vmatpush.bf16.msra.mxu0 %v1590
        %1643 = vmatpush.bf16.msra.mxu0 %v1589
        %1644 = vmatpush.bf16.msra.mxu0 %v1588
        %1645 = vmatpush.bf16.msra.mxu0 %v1587
        %1646 = vmatpush.bf16.msra.mxu0 %v1586
        %1647 = vmatmul.bf16.gmra.mxu0 %v253
        %v1648 = vpop.f32.mrf.mxu0
        %v1649 = vadd.f32 %v1620, %v1648
        %v1650 = vpop.f32.mrf.mxu0
        %v1651 = vadd.f32 %v1622, %v1650
        %1652 = vmatmul.bf16.gmra.mxu0 %v255
        %v1653 = vpop.f32.mrf.mxu0
        %v1654 = vadd.f32 %v1625, %v1653
        %v1655 = vpop.f32.mrf.mxu0
        %v1656 = vadd.f32 %v1627, %v1655
        %1657 = vmatmul.bf16.gmra.mxu0 %v257
        %v1658 = vpop.f32.mrf.mxu0
        %v1659 = vadd.f32 %v1630, %v1658
        %v1660 = vpop.f32.mrf.mxu0
        %v1661 = vadd.f32 %v1632, %v1660
        %1662 = vmatmul.bf16.gmra.mxu0 %v259
        %v1663 = vpop.f32.mrf.mxu0
        %v1664 = vadd.f32 %v1635, %v1663
        %v1665 = vpop.f32.mrf.mxu0
        %v1666 = vadd.f32 %v1637, %v1665
        %1667 = vdwg.mxu0
        %v1668 = vpack.c.bf16 %v1649, %v1649
        %v1669 = vpack.c.bf16 %v1651, %v1651
        %v1670 = vpack.c.bf16 %v1654, %v1654
        %v1671 = vpack.c.bf16 %v1656, %v1656
        %v1672 = vpack.c.bf16 %v1659, %v1659
        %v1673 = vpack.c.bf16 %v1661, %v1661
        %v1674 = vpack.c.bf16 %v1664, %v1664
        %v1675 = vpack.c.bf16 %v1666, %v1666
        %s1676 = scalar_lea.vmem %s216, 96 [#allocation2]
        %1677 = vst.msk [vmem:[%s1676] sm:$0xf] %vm454, %v1668
        %1678 = vst.msk [vmem:[%s1676 + $0x4] sm:$0xf] %vm454, %v1669
        %1679 = vst.msk [vmem:[%s1676 + $0x8] sm:$0xf] %vm454, %v1670
        %1680 = vst.msk [vmem:[%s1676 + $0xc] sm:$0xf] %vm454, %v1671
        %1681 = vst.msk [vmem:[%s1676 + $0x10] sm:$0xf] %vm454, %v1672
        %1682 = vst.msk [vmem:[%s1676 + $0x14] sm:$0xf] %vm454, %v1673
        %1683 = vst.msk [vmem:[%s1676 + $0x18] sm:$0xf] %vm454, %v1674
        %1684 = vst.msk [vmem:[%s1676 + $0x1c] sm:$0xf] %vm454, %v1675
        %s1685 = scalar_lea.vmem %s2, 384
        %v1686 = vld [vmem:[%s1685] sm:$0xf]
        %v1687 = vld [vmem:[%s1685 + $0x4] sm:$0xf]
        %v1688 = vld [vmem:[%s1685 + $0x8] sm:$0xf]
        %v1689 = vld [vmem:[%s1685 + $0xc] sm:$0xf]
        %v1690 = vld [vmem:[%s1685 + $0x10] sm:$0xf]
        %v1691 = vld [vmem:[%s1685 + $0x14] sm:$0xf]
        %v1692 = vld [vmem:[%s1685 + $0x18] sm:$0xf]
        %v1693 = vld [vmem:[%s1685 + $0x1c] sm:$0xf]
        %v1694 = vld [vmem:[%s1685 + $0x20] sm:$0xf]
        %v1695 = vld [vmem:[%s1685 + $0x24] sm:$0xf]
        %v1696 = vld [vmem:[%s1685 + $0x28] sm:$0xf]
        %v1697 = vld [vmem:[%s1685 + $0x2c] sm:$0xf]
        %v1698 = vld [vmem:[%s1685 + $0x30] sm:$0xf]
        %v1699 = vld [vmem:[%s1685 + $0x34] sm:$0xf]
        %v1700 = vld [vmem:[%s1685 + $0x38] sm:$0xf]
        %v1701 = vld [vmem:[%s1685 + $0x3c] sm:$0xf]
        %v1702 = vld [vmem:[%s1685 + $0x40] sm:$0xf]
        %v1703 = vld [vmem:[%s1685 + $0x44] sm:$0xf]
        %v1704 = vld [vmem:[%s1685 + $0x48] sm:$0xf]
        %v1705 = vld [vmem:[%s1685 + $0x4c] sm:$0xf]
        %v1706 = vld [vmem:[%s1685 + $0x50] sm:$0xf]
        %v1707 = vld [vmem:[%s1685 + $0x54] sm:$0xf]
        %v1708 = vld [vmem:[%s1685 + $0x58] sm:$0xf]
        %v1709 = vld [vmem:[%s1685 + $0x5c] sm:$0xf]
        %v1710 = vld [vmem:[%s1685 + $0x60] sm:$0xf]
        %v1711 = vld [vmem:[%s1685 + $0x64] sm:$0xf]
        %v1712 = vld [vmem:[%s1685 + $0x68] sm:$0xf]
        %v1713 = vld [vmem:[%s1685 + $0x6c] sm:$0xf]
        %v1714 = vld [vmem:[%s1685 + $0x70] sm:$0xf]
        %v1715 = vld [vmem:[%s1685 + $0x74] sm:$0xf]
        %v1716 = vld [vmem:[%s1685 + $0x78] sm:$0xf]
        %v1717 = vld [vmem:[%s1685 + $0x7c] sm:$0xf]
        %v1750 = vunpack.c.l.b16 %v1686
        %v1751 = vunpack.c.l.b16 %v1687
        %v1752 = vunpack.c.l.b16 %v1688
        %v1753 = vunpack.c.l.b16 %v1689
        %v1754 = vunpack.c.l.b16 %v1690
        %v1755 = vunpack.c.l.b16 %v1691
        %v1756 = vunpack.c.l.b16 %v1692
        %v1757 = vunpack.c.l.b16 %v1693
        %v1758 = vunpack.c.l.b16 %v1694
        %v1759 = vunpack.c.l.b16 %v1695
        %v1760 = vunpack.c.l.b16 %v1696
        %v1761 = vunpack.c.l.b16 %v1697
        %v1762 = vunpack.c.l.b16 %v1698
        %v1763 = vunpack.c.l.b16 %v1699
        %v1764 = vunpack.c.l.b16 %v1700
        %v1765 = vunpack.c.l.b16 %v1701
        %v1766 = vunpack.c.l.b16 %v1702
        %v1767 = vunpack.c.l.b16 %v1703
        %v1768 = vunpack.c.l.b16 %v1704
        %v1769 = vunpack.c.l.b16 %v1705
        %v1770 = vunpack.c.l.b16 %v1706
        %v1771 = vunpack.c.l.b16 %v1707
        %v1772 = vunpack.c.l.b16 %v1708
        %v1773 = vunpack.c.l.b16 %v1709
        %v1774 = vunpack.c.l.b16 %v1710
        %v1775 = vunpack.c.l.b16 %v1711
        %v1776 = vunpack.c.l.b16 %v1712
        %v1777 = vunpack.c.l.b16 %v1713
        %v1778 = vunpack.c.l.b16 %v1714
        %v1779 = vunpack.c.l.b16 %v1715
        %v1780 = vunpack.c.l.b16 %v1716
        %v1781 = vunpack.c.l.b16 %v1717
        %v1782 = vpack.c.b16 %v1751, %v1750
        %v1783 = vpack.c.b16 %v1753, %v1752
        %v1784 = vpack.c.b16 %v1755, %v1754
        %v1785 = vpack.c.b16 %v1757, %v1756
        %v1786 = vpack.c.b16 %v1759, %v1758
        %v1787 = vpack.c.b16 %v1761, %v1760
        %v1788 = vpack.c.b16 %v1763, %v1762
        %v1789 = vpack.c.b16 %v1765, %v1764
        %v1790 = vpack.c.b16 %v1767, %v1766
        %v1791 = vpack.c.b16 %v1769, %v1768
        %v1792 = vpack.c.b16 %v1771, %v1770
        %v1793 = vpack.c.b16 %v1773, %v1772
        %v1794 = vpack.c.b16 %v1775, %v1774
        %v1795 = vpack.c.b16 %v1777, %v1776
        %v1796 = vpack.c.b16 %v1779, %v1778
        %v1797 = vpack.c.b16 %v1781, %v1780
        %1814 = vmatpush.bf16.msra.mxu0 %v1789
        %1815 = vmatpush.bf16.msra.mxu0 %v1788
        %1816 = vmatpush.bf16.msra.mxu0 %v1787
        %1817 = vmatpush.bf16.msra.mxu0 %v1786
        %1818 = vmatpush.bf16.msra.mxu0 %v1785
        %1819 = vmatpush.bf16.msra.mxu0 %v1784
        %1820 = vmatpush.bf16.msra.mxu0 %v1783
        %1821 = vmatpush.bf16.msra.mxu0 %v1782
        %1822 = vmatmul.bf16.gmra.mxu0 %v252
        %v1823 = vpop.f32.mrf.mxu0
        %v1824 = vadd.f32 0.0, %v1823
        %v1825 = vpop.f32.mrf.mxu0
        %v1826 = vadd.f32 0.0, %v1825
        %1827 = vmatmul.bf16.gmra.mxu0 %v254
        %v1828 = vpop.f32.mrf.mxu0
        %v1829 = vadd.f32 0.0, %v1828
        %v1830 = vpop.f32.mrf.mxu0
        %v1831 = vadd.f32 0.0, %v1830
        %1832 = vmatmul.bf16.gmra.mxu0 %v256
        %v1833 = vpop.f32.mrf.mxu0
        %v1834 = vadd.f32 0.0, %v1833
        %v1835 = vpop.f32.mrf.mxu0
        %v1836 = vadd.f32 0.0, %v1835
        %1837 = vmatmul.bf16.gmra.mxu0 %v258
        %v1838 = vpop.f32.mrf.mxu0
        %v1839 = vadd.f32 0.0, %v1838
        %v1840 = vpop.f32.mrf.mxu0
        %v1841 = vadd.f32 0.0, %v1840
        %1842 = vdwg.mxu0
        %1843 = vmatpush.bf16.msra.mxu0 %v1797
        %1844 = vmatpush.bf16.msra.mxu0 %v1796
        %1845 = vmatpush.bf16.msra.mxu0 %v1795
        %1846 = vmatpush.bf16.msra.mxu0 %v1794
        %1847 = vmatpush.bf16.msra.mxu0 %v1793
        %1848 = vmatpush.bf16.msra.mxu0 %v1792
        %1849 = vmatpush.bf16.msra.mxu0 %v1791
        %1850 = vmatpush.bf16.msra.mxu0 %v1790
        %1851 = vmatmul.bf16.gmra.mxu0 %v253
        %v1852 = vpop.f32.mrf.mxu0
        %v1853 = vadd.f32 %v1824, %v1852
        %v1854 = vpop.f32.mrf.mxu0
        %v1855 = vadd.f32 %v1826, %v1854
        %1856 = vmatmul.bf16.gmra.mxu0 %v255
        %v1857 = vpop.f32.mrf.mxu0
        %v1858 = vadd.f32 %v1829, %v1857
        %v1859 = vpop.f32.mrf.mxu0
        %v1860 = vadd.f32 %v1831, %v1859
        %1861 = vmatmul.bf16.gmra.mxu0 %v257
        %v1862 = vpop.f32.mrf.mxu0
        %v1863 = vadd.f32 %v1834, %v1862
        %v1864 = vpop.f32.mrf.mxu0
        %v1865 = vadd.f32 %v1836, %v1864
        %1866 = vmatmul.bf16.gmra.mxu0 %v259
        %v1867 = vpop.f32.mrf.mxu0
        %v1868 = vadd.f32 %v1839, %v1867
        %v1869 = vpop.f32.mrf.mxu0
        %v1870 = vadd.f32 %v1841, %v1869
        %1871 = vdwg.mxu0
        %v1872 = vpack.c.bf16 %v1853, %v1853
        %v1873 = vpack.c.bf16 %v1855, %v1855
        %v1874 = vpack.c.bf16 %v1858, %v1858
        %v1875 = vpack.c.bf16 %v1860, %v1860
        %v1876 = vpack.c.bf16 %v1863, %v1863
        %v1877 = vpack.c.bf16 %v1865, %v1865
        %v1878 = vpack.c.bf16 %v1868, %v1868
        %v1879 = vpack.c.bf16 %v1870, %v1870
        %s1880 = scalar_lea.vmem %s222, 96 [#allocation3]
        %1881 = vst.msk [vmem:[%s1880] sm:$0xf] %vm454, %v1872
        %1882 = vst.msk [vmem:[%s1880 + $0x4] sm:$0xf] %vm454, %v1873
        %1883 = vst.msk [vmem:[%s1880 + $0x8] sm:$0xf] %vm454, %v1874
        %1884 = vst.msk [vmem:[%s1880 + $0xc] sm:$0xf] %vm454, %v1875
        %1885 = vst.msk [vmem:[%s1880 + $0x10] sm:$0xf] %vm454, %v1876
        %1886 = vst.msk [vmem:[%s1880 + $0x14] sm:$0xf] %vm454, %v1877
        %1887 = vst.msk [vmem:[%s1880 + $0x18] sm:$0xf] %vm454, %v1878
        %1888 = vst.msk [vmem:[%s1880 + $0x1c] sm:$0xf] %vm454, %v1879
        %s1889 = scalar_lea.vmem %s1, 512
        %v1890 = vld [vmem:[%s1889] sm:$0xf]
        %v1891 = vld [vmem:[%s1889 + $0x4] sm:$0xf]
        %v1892 = vld [vmem:[%s1889 + $0x8] sm:$0xf]
        %v1893 = vld [vmem:[%s1889 + $0xc] sm:$0xf]
        %v1894 = vld [vmem:[%s1889 + $0x10] sm:$0xf]
        %v1895 = vld [vmem:[%s1889 + $0x14] sm:$0xf]
        %v1896 = vld [vmem:[%s1889 + $0x18] sm:$0xf]
        %v1897 = vld [vmem:[%s1889 + $0x1c] sm:$0xf]
        %v1898 = vld [vmem:[%s1889 + $0x20] sm:$0xf]
        %v1899 = vld [vmem:[%s1889 + $0x24] sm:$0xf]
        %v1900 = vld [vmem:[%s1889 + $0x28] sm:$0xf]
        %v1901 = vld [vmem:[%s1889 + $0x2c] sm:$0xf]
        %v1902 = vld [vmem:[%s1889 + $0x30] sm:$0xf]
        %v1903 = vld [vmem:[%s1889 + $0x34] sm:$0xf]
        %v1904 = vld [vmem:[%s1889 + $0x38] sm:$0xf]
        %v1905 = vld [vmem:[%s1889 + $0x3c] sm:$0xf]
        %v1906 = vld [vmem:[%s1889 + $0x40] sm:$0xf]
        %v1907 = vld [vmem:[%s1889 + $0x44] sm:$0xf]
        %v1908 = vld [vmem:[%s1889 + $0x48] sm:$0xf]
        %v1909 = vld [vmem:[%s1889 + $0x4c] sm:$0xf]
        %v1910 = vld [vmem:[%s1889 + $0x50] sm:$0xf]
        %v1911 = vld [vmem:[%s1889 + $0x54] sm:$0xf]
        %v1912 = vld [vmem:[%s1889 + $0x58] sm:$0xf]
        %v1913 = vld [vmem:[%s1889 + $0x5c] sm:$0xf]
        %v1914 = vld [vmem:[%s1889 + $0x60] sm:$0xf]
        %v1915 = vld [vmem:[%s1889 + $0x64] sm:$0xf]
        %v1916 = vld [vmem:[%s1889 + $0x68] sm:$0xf]
        %v1917 = vld [vmem:[%s1889 + $0x6c] sm:$0xf]
        %v1918 = vld [vmem:[%s1889 + $0x70] sm:$0xf]
        %v1919 = vld [vmem:[%s1889 + $0x74] sm:$0xf]
        %v1920 = vld [vmem:[%s1889 + $0x78] sm:$0xf]
        %v1921 = vld [vmem:[%s1889 + $0x7c] sm:$0xf]
        %v1954 = vunpack.c.l.b16 %v1890
        %v1955 = vunpack.c.l.b16 %v1891
        %v1956 = vunpack.c.l.b16 %v1892
        %v1957 = vunpack.c.l.b16 %v1893
        %v1958 = vunpack.c.l.b16 %v1894
        %v1959 = vunpack.c.l.b16 %v1895
        %v1960 = vunpack.c.l.b16 %v1896
        %v1961 = vunpack.c.l.b16 %v1897
        %v1962 = vunpack.c.l.b16 %v1898
        %v1963 = vunpack.c.l.b16 %v1899
        %v1964 = vunpack.c.l.b16 %v1900
        %v1965 = vunpack.c.l.b16 %v1901
        %v1966 = vunpack.c.l.b16 %v1902
        %v1967 = vunpack.c.l.b16 %v1903
        %v1968 = vunpack.c.l.b16 %v1904
        %v1969 = vunpack.c.l.b16 %v1905
        %v1970 = vunpack.c.l.b16 %v1906
        %v1971 = vunpack.c.l.b16 %v1907
        %v1972 = vunpack.c.l.b16 %v1908
        %v1973 = vunpack.c.l.b16 %v1909
        %v1974 = vunpack.c.l.b16 %v1910
        %v1975 = vunpack.c.l.b16 %v1911
        %v1976 = vunpack.c.l.b16 %v1912
        %v1977 = vunpack.c.l.b16 %v1913
        %v1978 = vunpack.c.l.b16 %v1914
        %v1979 = vunpack.c.l.b16 %v1915
        %v1980 = vunpack.c.l.b16 %v1916
        %v1981 = vunpack.c.l.b16 %v1917
        %v1982 = vunpack.c.l.b16 %v1918
        %v1983 = vunpack.c.l.b16 %v1919
        %v1984 = vunpack.c.l.b16 %v1920
        %v1985 = vunpack.c.l.b16 %v1921
        %v1986 = vpack.c.b16 %v1955, %v1954
        %v1987 = vpack.c.b16 %v1957, %v1956
        %v1988 = vpack.c.b16 %v1959, %v1958
        %v1989 = vpack.c.b16 %v1961, %v1960
        %v1990 = vpack.c.b16 %v1963, %v1962
        %v1991 = vpack.c.b16 %v1965, %v1964
        %v1992 = vpack.c.b16 %v1967, %v1966
        %v1993 = vpack.c.b16 %v1969, %v1968
        %v1994 = vpack.c.b16 %v1971, %v1970
        %v1995 = vpack.c.b16 %v1973, %v1972
        %v1996 = vpack.c.b16 %v1975, %v1974
        %v1997 = vpack.c.b16 %v1977, %v1976
        %v1998 = vpack.c.b16 %v1979, %v1978
        %v1999 = vpack.c.b16 %v1981, %v1980
        %v2000 = vpack.c.b16 %v1983, %v1982
        %v2001 = vpack.c.b16 %v1985, %v1984
        %2018 = vmatpush.bf16.msra.mxu0 %v1993
        %2019 = vmatpush.bf16.msra.mxu0 %v1992
        %2020 = vmatpush.bf16.msra.mxu0 %v1991
        %2021 = vmatpush.bf16.msra.mxu0 %v1990
        %2022 = vmatpush.bf16.msra.mxu0 %v1989
        %2023 = vmatpush.bf16.msra.mxu0 %v1988
        %2024 = vmatpush.bf16.msra.mxu0 %v1987
        %2025 = vmatpush.bf16.msra.mxu0 %v1986
        %2026 = vmatmul.bf16.gmra.mxu0 %v252
        %v2027 = vpop.f32.mrf.mxu0
        %v2028 = vadd.f32 0.0, %v2027
        %v2029 = vpop.f32.mrf.mxu0
        %v2030 = vadd.f32 0.0, %v2029
        %2031 = vmatmul.bf16.gmra.mxu0 %v254
        %v2032 = vpop.f32.mrf.mxu0
        %v2033 = vadd.f32 0.0, %v2032
        %v2034 = vpop.f32.mrf.mxu0
        %v2035 = vadd.f32 0.0, %v2034
        %2036 = vmatmul.bf16.gmra.mxu0 %v256
        %v2037 = vpop.f32.mrf.mxu0
        %v2038 = vadd.f32 0.0, %v2037
        %v2039 = vpop.f32.mrf.mxu0
        %v2040 = vadd.f32 0.0, %v2039
        %2041 = vmatmul.bf16.gmra.mxu0 %v258
        %v2042 = vpop.f32.mrf.mxu0
        %v2043 = vadd.f32 0.0, %v2042
        %v2044 = vpop.f32.mrf.mxu0
        %v2045 = vadd.f32 0.0, %v2044
        %2046 = vdwg.mxu0
        %2047 = vmatpush.bf16.msra.mxu0 %v2001
        %2048 = vmatpush.bf16.msra.mxu0 %v2000
        %2049 = vmatpush.bf16.msra.mxu0 %v1999
        %2050 = vmatpush.bf16.msra.mxu0 %v1998
        %2051 = vmatpush.bf16.msra.mxu0 %v1997
        %2052 = vmatpush.bf16.msra.mxu0 %v1996
        %2053 = vmatpush.bf16.msra.mxu0 %v1995
        %2054 = vmatpush.bf16.msra.mxu0 %v1994
        %2055 = vmatmul.bf16.gmra.mxu0 %v253
        %v2056 = vpop.f32.mrf.mxu0
        %v2057 = vadd.f32 %v2028, %v2056
        %v2058 = vpop.f32.mrf.mxu0
        %v2059 = vadd.f32 %v2030, %v2058
        %2060 = vmatmul.bf16.gmra.mxu0 %v255
        %v2061 = vpop.f32.mrf.mxu0
        %v2062 = vadd.f32 %v2033, %v2061
        %v2063 = vpop.f32.mrf.mxu0
        %v2064 = vadd.f32 %v2035, %v2063
        %2065 = vmatmul.bf16.gmra.mxu0 %v257
        %v2066 = vpop.f32.mrf.mxu0
        %v2067 = vadd.f32 %v2038, %v2066
        %v2068 = vpop.f32.mrf.mxu0
        %v2069 = vadd.f32 %v2040, %v2068
        %2070 = vmatmul.bf16.gmra.mxu0 %v259
        %v2071 = vpop.f32.mrf.mxu0
        %v2072 = vadd.f32 %v2043, %v2071
        %v2073 = vpop.f32.mrf.mxu0
        %v2074 = vadd.f32 %v2045, %v2073
        %2075 = vdwg.mxu0
        %v2076 = vpack.c.bf16 %v2057, %v2057
        %v2077 = vpack.c.bf16 %v2059, %v2059
        %v2078 = vpack.c.bf16 %v2062, %v2062
        %v2079 = vpack.c.bf16 %v2064, %v2064
        %v2080 = vpack.c.bf16 %v2067, %v2067
        %v2081 = vpack.c.bf16 %v2069, %v2069
        %v2082 = vpack.c.bf16 %v2072, %v2072
        %v2083 = vpack.c.bf16 %v2074, %v2074
        %s2084 = scalar_lea.vmem %s216, 128 [#allocation2]
        %2085 = vst.msk [vmem:[%s2084] sm:$0xf] %vm454, %v2076
        %2086 = vst.msk [vmem:[%s2084 + $0x4] sm:$0xf] %vm454, %v2077
        %2087 = vst.msk [vmem:[%s2084 + $0x8] sm:$0xf] %vm454, %v2078
        %2088 = vst.msk [vmem:[%s2084 + $0xc] sm:$0xf] %vm454, %v2079
        %2089 = vst.msk [vmem:[%s2084 + $0x10] sm:$0xf] %vm454, %v2080
        %2090 = vst.msk [vmem:[%s2084 + $0x14] sm:$0xf] %vm454, %v2081
        %2091 = vst.msk [vmem:[%s2084 + $0x18] sm:$0xf] %vm454, %v2082
        %2092 = vst.msk [vmem:[%s2084 + $0x1c] sm:$0xf] %vm454, %v2083
        %s2093 = scalar_lea.vmem %s2, 512
        %v2094 = vld [vmem:[%s2093] sm:$0xf]
        %v2095 = vld [vmem:[%s2093 + $0x4] sm:$0xf]
        %v2096 = vld [vmem:[%s2093 + $0x8] sm:$0xf]
        %v2097 = vld [vmem:[%s2093 + $0xc] sm:$0xf]
        %v2098 = vld [vmem:[%s2093 + $0x10] sm:$0xf]
        %v2099 = vld [vmem:[%s2093 + $0x14] sm:$0xf]
        %v2100 = vld [vmem:[%s2093 + $0x18] sm:$0xf]
        %v2101 = vld [vmem:[%s2093 + $0x1c] sm:$0xf]
        %v2102 = vld [vmem:[%s2093 + $0x20] sm:$0xf]
        %v2103 = vld [vmem:[%s2093 + $0x24] sm:$0xf]
        %v2104 = vld [vmem:[%s2093 + $0x28] sm:$0xf]
        %v2105 = vld [vmem:[%s2093 + $0x2c] sm:$0xf]
        %v2106 = vld [vmem:[%s2093 + $0x30] sm:$0xf]
        %v2107 = vld [vmem:[%s2093 + $0x34] sm:$0xf]
        %v2108 = vld [vmem:[%s2093 + $0x38] sm:$0xf]
        %v2109 = vld [vmem:[%s2093 + $0x3c] sm:$0xf]
        %v2110 = vld [vmem:[%s2093 + $0x40] sm:$0xf]
        %v2111 = vld [vmem:[%s2093 + $0x44] sm:$0xf]
        %v2112 = vld [vmem:[%s2093 + $0x48] sm:$0xf]
        %v2113 = vld [vmem:[%s2093 + $0x4c] sm:$0xf]
        %v2114 = vld [vmem:[%s2093 + $0x50] sm:$0xf]
        %v2115 = vld [vmem:[%s2093 + $0x54] sm:$0xf]
        %v2116 = vld [vmem:[%s2093 + $0x58] sm:$0xf]
        %v2117 = vld [vmem:[%s2093 + $0x5c] sm:$0xf]
        %v2118 = vld [vmem:[%s2093 + $0x60] sm:$0xf]
        %v2119 = vld [vmem:[%s2093 + $0x64] sm:$0xf]
        %v2120 = vld [vmem:[%s2093 + $0x68] sm:$0xf]
        %v2121 = vld [vmem:[%s2093 + $0x6c] sm:$0xf]
        %v2122 = vld [vmem:[%s2093 + $0x70] sm:$0xf]
        %v2123 = vld [vmem:[%s2093 + $0x74] sm:$0xf]
        %v2124 = vld [vmem:[%s2093 + $0x78] sm:$0xf]
        %v2125 = vld [vmem:[%s2093 + $0x7c] sm:$0xf]
        %v2158 = vunpack.c.l.b16 %v2094
        %v2159 = vunpack.c.l.b16 %v2095
        %v2160 = vunpack.c.l.b16 %v2096
        %v2161 = vunpack.c.l.b16 %v2097
        %v2162 = vunpack.c.l.b16 %v2098
        %v2163 = vunpack.c.l.b16 %v2099
        %v2164 = vunpack.c.l.b16 %v2100
        %v2165 = vunpack.c.l.b16 %v2101
        %v2166 = vunpack.c.l.b16 %v2102
        %v2167 = vunpack.c.l.b16 %v2103
        %v2168 = vunpack.c.l.b16 %v2104
        %v2169 = vunpack.c.l.b16 %v2105
        %v2170 = vunpack.c.l.b16 %v2106
        %v2171 = vunpack.c.l.b16 %v2107
        %v2172 = vunpack.c.l.b16 %v2108
        %v2173 = vunpack.c.l.b16 %v2109
        %v2174 = vunpack.c.l.b16 %v2110
        %v2175 = vunpack.c.l.b16 %v2111
        %v2176 = vunpack.c.l.b16 %v2112
        %v2177 = vunpack.c.l.b16 %v2113
        %v2178 = vunpack.c.l.b16 %v2114
        %v2179 = vunpack.c.l.b16 %v2115
        %v2180 = vunpack.c.l.b16 %v2116
        %v2181 = vunpack.c.l.b16 %v2117
        %v2182 = vunpack.c.l.b16 %v2118
        %v2183 = vunpack.c.l.b16 %v2119
        %v2184 = vunpack.c.l.b16 %v2120
        %v2185 = vunpack.c.l.b16 %v2121
        %v2186 = vunpack.c.l.b16 %v2122
        %v2187 = vunpack.c.l.b16 %v2123
        %v2188 = vunpack.c.l.b16 %v2124
        %v2189 = vunpack.c.l.b16 %v2125
        %v2190 = vpack.c.b16 %v2159, %v2158
        %v2191 = vpack.c.b16 %v2161, %v2160
        %v2192 = vpack.c.b16 %v2163, %v2162
        %v2193 = vpack.c.b16 %v2165, %v2164
        %v2194 = vpack.c.b16 %v2167, %v2166
        %v2195 = vpack.c.b16 %v2169, %v2168
        %v2196 = vpack.c.b16 %v2171, %v2170
        %v2197 = vpack.c.b16 %v2173, %v2172
        %v2198 = vpack.c.b16 %v2175, %v2174
        %v2199 = vpack.c.b16 %v2177, %v2176
        %v2200 = vpack.c.b16 %v2179, %v2178
        %v2201 = vpack.c.b16 %v2181, %v2180
        %v2202 = vpack.c.b16 %v2183, %v2182
        %v2203 = vpack.c.b16 %v2185, %v2184
        %v2204 = vpack.c.b16 %v2187, %v2186
        %v2205 = vpack.c.b16 %v2189, %v2188
        %2222 = vmatpush.bf16.msra.mxu0 %v2197
        %2223 = vmatpush.bf16.msra.mxu0 %v2196
        %2224 = vmatpush.bf16.msra.mxu0 %v2195
        %2225 = vmatpush.bf16.msra.mxu0 %v2194
        %2226 = vmatpush.bf16.msra.mxu0 %v2193
        %2227 = vmatpush.bf16.msra.mxu0 %v2192
        %2228 = vmatpush.bf16.msra.mxu0 %v2191
        %2229 = vmatpush.bf16.msra.mxu0 %v2190
        %2230 = vmatmul.bf16.gmra.mxu0 %v252
        %v2231 = vpop.f32.mrf.mxu0
        %v2232 = vadd.f32 0.0, %v2231
        %v2233 = vpop.f32.mrf.mxu0
        %v2234 = vadd.f32 0.0, %v2233
        %2235 = vmatmul.bf16.gmra.mxu0 %v254
        %v2236 = vpop.f32.mrf.mxu0
        %v2237 = vadd.f32 0.0, %v2236
        %v2238 = vpop.f32.mrf.mxu0
        %v2239 = vadd.f32 0.0, %v2238
        %2240 = vmatmul.bf16.gmra.mxu0 %v256
        %v2241 = vpop.f32.mrf.mxu0
        %v2242 = vadd.f32 0.0, %v2241
        %v2243 = vpop.f32.mrf.mxu0
        %v2244 = vadd.f32 0.0, %v2243
        %2245 = vmatmul.bf16.gmra.mxu0 %v258
        %v2246 = vpop.f32.mrf.mxu0
        %v2247 = vadd.f32 0.0, %v2246
        %v2248 = vpop.f32.mrf.mxu0
        %v2249 = vadd.f32 0.0, %v2248
        %2250 = vdwg.mxu0
        %2251 = vmatpush.bf16.msra.mxu0 %v2205
        %2252 = vmatpush.bf16.msra.mxu0 %v2204
        %2253 = vmatpush.bf16.msra.mxu0 %v2203
        %2254 = vmatpush.bf16.msra.mxu0 %v2202
        %2255 = vmatpush.bf16.msra.mxu0 %v2201
        %2256 = vmatpush.bf16.msra.mxu0 %v2200
        %2257 = vmatpush.bf16.msra.mxu0 %v2199
        %2258 = vmatpush.bf16.msra.mxu0 %v2198
        %2259 = vmatmul.bf16.gmra.mxu0 %v253
        %v2260 = vpop.f32.mrf.mxu0
        %v2261 = vadd.f32 %v2232, %v2260
        %v2262 = vpop.f32.mrf.mxu0
        %v2263 = vadd.f32 %v2234, %v2262
        %2264 = vmatmul.bf16.gmra.mxu0 %v255
        %v2265 = vpop.f32.mrf.mxu0
        %v2266 = vadd.f32 %v2237, %v2265
        %v2267 = vpop.f32.mrf.mxu0
        %v2268 = vadd.f32 %v2239, %v2267
        %2269 = vmatmul.bf16.gmra.mxu0 %v257
        %v2270 = vpop.f32.mrf.mxu0
        %v2271 = vadd.f32 %v2242, %v2270
        %v2272 = vpop.f32.mrf.mxu0
        %v2273 = vadd.f32 %v2244, %v2272
        %2274 = vmatmul.bf16.gmra.mxu0 %v259
        %v2275 = vpop.f32.mrf.mxu0
        %v2276 = vadd.f32 %v2247, %v2275
        %v2277 = vpop.f32.mrf.mxu0
        %v2278 = vadd.f32 %v2249, %v2277
        %2279 = vdwg.mxu0
        %v2280 = vpack.c.bf16 %v2261, %v2261
        %v2281 = vpack.c.bf16 %v2263, %v2263
        %v2282 = vpack.c.bf16 %v2266, %v2266
        %v2283 = vpack.c.bf16 %v2268, %v2268
        %v2284 = vpack.c.bf16 %v2271, %v2271
        %v2285 = vpack.c.bf16 %v2273, %v2273
        %v2286 = vpack.c.bf16 %v2276, %v2276
        %v2287 = vpack.c.bf16 %v2278, %v2278
        %s2288 = scalar_lea.vmem %s222, 128 [#allocation3]
        %2289 = vst.msk [vmem:[%s2288] sm:$0xf] %vm454, %v2280
        %2290 = vst.msk [vmem:[%s2288 + $0x4] sm:$0xf] %vm454, %v2281
        %2291 = vst.msk [vmem:[%s2288 + $0x8] sm:$0xf] %vm454, %v2282
        %2292 = vst.msk [vmem:[%s2288 + $0xc] sm:$0xf] %vm454, %v2283
        %2293 = vst.msk [vmem:[%s2288 + $0x10] sm:$0xf] %vm454, %v2284
        %2294 = vst.msk [vmem:[%s2288 + $0x14] sm:$0xf] %vm454, %v2285
        %2295 = vst.msk [vmem:[%s2288 + $0x18] sm:$0xf] %vm454, %v2286
        %2296 = vst.msk [vmem:[%s2288 + $0x1c] sm:$0xf] %vm454, %v2287
        %s2297 = scalar_lea.vmem %s1, 640
        %v2298 = vld [vmem:[%s2297] sm:$0xf]
        %v2299 = vld [vmem:[%s2297 + $0x4] sm:$0xf]
        %v2300 = vld [vmem:[%s2297 + $0x8] sm:$0xf]
        %v2301 = vld [vmem:[%s2297 + $0xc] sm:$0xf]
        %v2302 = vld [vmem:[%s2297 + $0x10] sm:$0xf]
        %v2303 = vld [vmem:[%s2297 + $0x14] sm:$0xf]
        %v2304 = vld [vmem:[%s2297 + $0x18] sm:$0xf]
        %v2305 = vld [vmem:[%s2297 + $0x1c] sm:$0xf]
        %v2306 = vld [vmem:[%s2297 + $0x20] sm:$0xf]
        %v2307 = vld [vmem:[%s2297 + $0x24] sm:$0xf]
        %v2308 = vld [vmem:[%s2297 + $0x28] sm:$0xf]
        %v2309 = vld [vmem:[%s2297 + $0x2c] sm:$0xf]
        %v2310 = vld [vmem:[%s2297 + $0x30] sm:$0xf]
        %v2311 = vld [vmem:[%s2297 + $0x34] sm:$0xf]
        %v2312 = vld [vmem:[%s2297 + $0x38] sm:$0xf]
        %v2313 = vld [vmem:[%s2297 + $0x3c] sm:$0xf]
        %v2314 = vld [vmem:[%s2297 + $0x40] sm:$0xf]
        %v2315 = vld [vmem:[%s2297 + $0x44] sm:$0xf]
        %v2316 = vld [vmem:[%s2297 + $0x48] sm:$0xf]
        %v2317 = vld [vmem:[%s2297 + $0x4c] sm:$0xf]
        %v2318 = vld [vmem:[%s2297 + $0x50] sm:$0xf]
        %v2319 = vld [vmem:[%s2297 + $0x54] sm:$0xf]
        %v2320 = vld [vmem:[%s2297 + $0x58] sm:$0xf]
        %v2321 = vld [vmem:[%s2297 + $0x5c] sm:$0xf]
        %v2322 = vld [vmem:[%s2297 + $0x60] sm:$0xf]
        %v2323 = vld [vmem:[%s2297 + $0x64] sm:$0xf]
        %v2324 = vld [vmem:[%s2297 + $0x68] sm:$0xf]
        %v2325 = vld [vmem:[%s2297 + $0x6c] sm:$0xf]
        %v2326 = vld [vmem:[%s2297 + $0x70] sm:$0xf]
        %v2327 = vld [vmem:[%s2297 + $0x74] sm:$0xf]
        %v2328 = vld [vmem:[%s2297 + $0x78] sm:$0xf]
        %v2329 = vld [vmem:[%s2297 + $0x7c] sm:$0xf]
        %v2362 = vunpack.c.l.b16 %v2298
        %v2363 = vunpack.c.l.b16 %v2299
        %v2364 = vunpack.c.l.b16 %v2300
        %v2365 = vunpack.c.l.b16 %v2301
        %v2366 = vunpack.c.l.b16 %v2302
        %v2367 = vunpack.c.l.b16 %v2303
        %v2368 = vunpack.c.l.b16 %v2304
        %v2369 = vunpack.c.l.b16 %v2305
        %v2370 = vunpack.c.l.b16 %v2306
        %v2371 = vunpack.c.l.b16 %v2307
        %v2372 = vunpack.c.l.b16 %v2308
        %v2373 = vunpack.c.l.b16 %v2309
        %v2374 = vunpack.c.l.b16 %v2310
        %v2375 = vunpack.c.l.b16 %v2311
        %v2376 = vunpack.c.l.b16 %v2312
        %v2377 = vunpack.c.l.b16 %v2313
        %v2378 = vunpack.c.l.b16 %v2314
        %v2379 = vunpack.c.l.b16 %v2315
        %v2380 = vunpack.c.l.b16 %v2316
        %v2381 = vunpack.c.l.b16 %v2317
        %v2382 = vunpack.c.l.b16 %v2318
        %v2383 = vunpack.c.l.b16 %v2319
        %v2384 = vunpack.c.l.b16 %v2320
        %v2385 = vunpack.c.l.b16 %v2321
        %v2386 = vunpack.c.l.b16 %v2322
        %v2387 = vunpack.c.l.b16 %v2323
        %v2388 = vunpack.c.l.b16 %v2324
        %v2389 = vunpack.c.l.b16 %v2325
        %v2390 = vunpack.c.l.b16 %v2326
        %v2391 = vunpack.c.l.b16 %v2327
        %v2392 = vunpack.c.l.b16 %v2328
        %v2393 = vunpack.c.l.b16 %v2329
        %v2394 = vpack.c.b16 %v2363, %v2362
        %v2395 = vpack.c.b16 %v2365, %v2364
        %v2396 = vpack.c.b16 %v2367, %v2366
        %v2397 = vpack.c.b16 %v2369, %v2368
        %v2398 = vpack.c.b16 %v2371, %v2370
        %v2399 = vpack.c.b16 %v2373, %v2372
        %v2400 = vpack.c.b16 %v2375, %v2374
        %v2401 = vpack.c.b16 %v2377, %v2376
        %v2402 = vpack.c.b16 %v2379, %v2378
        %v2403 = vpack.c.b16 %v2381, %v2380
        %v2404 = vpack.c.b16 %v2383, %v2382
        %v2405 = vpack.c.b16 %v2385, %v2384
        %v2406 = vpack.c.b16 %v2387, %v2386
        %v2407 = vpack.c.b16 %v2389, %v2388
        %v2408 = vpack.c.b16 %v2391, %v2390
        %v2409 = vpack.c.b16 %v2393, %v2392
        %2426 = vmatpush.bf16.msra.mxu0 %v2401
        %2427 = vmatpush.bf16.msra.mxu0 %v2400
        %2428 = vmatpush.bf16.msra.mxu0 %v2399
        %2429 = vmatpush.bf16.msra.mxu0 %v2398
        %2430 = vmatpush.bf16.msra.mxu0 %v2397
        %2431 = vmatpush.bf16.msra.mxu0 %v2396
        %2432 = vmatpush.bf16.msra.mxu0 %v2395
        %2433 = vmatpush.bf16.msra.mxu0 %v2394
        %2434 = vmatmul.bf16.gmra.mxu0 %v252
        %v2435 = vpop.f32.mrf.mxu0
        %v2436 = vadd.f32 0.0, %v2435
        %v2437 = vpop.f32.mrf.mxu0
        %v2438 = vadd.f32 0.0, %v2437
        %2439 = vmatmul.bf16.gmra.mxu0 %v254
        %v2440 = vpop.f32.mrf.mxu0
        %v2441 = vadd.f32 0.0, %v2440
        %v2442 = vpop.f32.mrf.mxu0
        %v2443 = vadd.f32 0.0, %v2442
        %2444 = vmatmul.bf16.gmra.mxu0 %v256
        %v2445 = vpop.f32.mrf.mxu0
        %v2446 = vadd.f32 0.0, %v2445
        %v2447 = vpop.f32.mrf.mxu0
        %v2448 = vadd.f32 0.0, %v2447
        %2449 = vmatmul.bf16.gmra.mxu0 %v258
        %v2450 = vpop.f32.mrf.mxu0
        %v2451 = vadd.f32 0.0, %v2450
        %v2452 = vpop.f32.mrf.mxu0
        %v2453 = vadd.f32 0.0, %v2452
        %2454 = vdwg.mxu0
        %2455 = vmatpush.bf16.msra.mxu0 %v2409
        %2456 = vmatpush.bf16.msra.mxu0 %v2408
        %2457 = vmatpush.bf16.msra.mxu0 %v2407
        %2458 = vmatpush.bf16.msra.mxu0 %v2406
        %2459 = vmatpush.bf16.msra.mxu0 %v2405
        %2460 = vmatpush.bf16.msra.mxu0 %v2404
        %2461 = vmatpush.bf16.msra.mxu0 %v2403
        %2462 = vmatpush.bf16.msra.mxu0 %v2402
        %2463 = vmatmul.bf16.gmra.mxu0 %v253
        %v2464 = vpop.f32.mrf.mxu0
        %v2465 = vadd.f32 %v2436, %v2464
        %v2466 = vpop.f32.mrf.mxu0
        %v2467 = vadd.f32 %v2438, %v2466
        %2468 = vmatmul.bf16.gmra.mxu0 %v255
        %v2469 = vpop.f32.mrf.mxu0
        %v2470 = vadd.f32 %v2441, %v2469
        %v2471 = vpop.f32.mrf.mxu0
        %v2472 = vadd.f32 %v2443, %v2471
        %2473 = vmatmul.bf16.gmra.mxu0 %v257
        %v2474 = vpop.f32.mrf.mxu0
        %v2475 = vadd.f32 %v2446, %v2474
        %v2476 = vpop.f32.mrf.mxu0
        %v2477 = vadd.f32 %v2448, %v2476
        %2478 = vmatmul.bf16.gmra.mxu0 %v259
        %v2479 = vpop.f32.mrf.mxu0
        %v2480 = vadd.f32 %v2451, %v2479
        %v2481 = vpop.f32.mrf.mxu0
        %v2482 = vadd.f32 %v2453, %v2481
        %2483 = vdwg.mxu0
        %v2484 = vpack.c.bf16 %v2465, %v2465
        %v2485 = vpack.c.bf16 %v2467, %v2467
        %v2486 = vpack.c.bf16 %v2470, %v2470
        %v2487 = vpack.c.bf16 %v2472, %v2472
        %v2488 = vpack.c.bf16 %v2475, %v2475
        %v2489 = vpack.c.bf16 %v2477, %v2477
        %v2490 = vpack.c.bf16 %v2480, %v2480
        %v2491 = vpack.c.bf16 %v2482, %v2482
        %s2492 = scalar_lea.vmem %s216, 160 [#allocation2]
        %2493 = vst.msk [vmem:[%s2492] sm:$0xf] %vm454, %v2484
        %2494 = vst.msk [vmem:[%s2492 + $0x4] sm:$0xf] %vm454, %v2485
        %2495 = vst.msk [vmem:[%s2492 + $0x8] sm:$0xf] %vm454, %v2486
        %2496 = vst.msk [vmem:[%s2492 + $0xc] sm:$0xf] %vm454, %v2487
        %2497 = vst.msk [vmem:[%s2492 + $0x10] sm:$0xf] %vm454, %v2488
        %2498 = vst.msk [vmem:[%s2492 + $0x14] sm:$0xf] %vm454, %v2489
        %2499 = vst.msk [vmem:[%s2492 + $0x18] sm:$0xf] %vm454, %v2490
        %2500 = vst.msk [vmem:[%s2492 + $0x1c] sm:$0xf] %vm454, %v2491
        %s2501 = scalar_lea.vmem %s2, 640
        %v2502 = vld [vmem:[%s2501] sm:$0xf]
        %v2503 = vld [vmem:[%s2501 + $0x4] sm:$0xf]
        %v2504 = vld [vmem:[%s2501 + $0x8] sm:$0xf]
        %v2505 = vld [vmem:[%s2501 + $0xc] sm:$0xf]
        %v2506 = vld [vmem:[%s2501 + $0x10] sm:$0xf]
        %v2507 = vld [vmem:[%s2501 + $0x14] sm:$0xf]
        %v2508 = vld [vmem:[%s2501 + $0x18] sm:$0xf]
        %v2509 = vld [vmem:[%s2501 + $0x1c] sm:$0xf]
        %v2510 = vld [vmem:[%s2501 + $0x20] sm:$0xf]
        %v2511 = vld [vmem:[%s2501 + $0x24] sm:$0xf]
        %v2512 = vld [vmem:[%s2501 + $0x28] sm:$0xf]
        %v2513 = vld [vmem:[%s2501 + $0x2c] sm:$0xf]
        %v2514 = vld [vmem:[%s2501 + $0x30] sm:$0xf]
        %v2515 = vld [vmem:[%s2501 + $0x34] sm:$0xf]
        %v2516 = vld [vmem:[%s2501 + $0x38] sm:$0xf]
        %v2517 = vld [vmem:[%s2501 + $0x3c] sm:$0xf]
        %v2518 = vld [vmem:[%s2501 + $0x40] sm:$0xf]
        %v2519 = vld [vmem:[%s2501 + $0x44] sm:$0xf]
        %v2520 = vld [vmem:[%s2501 + $0x48] sm:$0xf]
        %v2521 = vld [vmem:[%s2501 + $0x4c] sm:$0xf]
        %v2522 = vld [vmem:[%s2501 + $0x50] sm:$0xf]
        %v2523 = vld [vmem:[%s2501 + $0x54] sm:$0xf]
        %v2524 = vld [vmem:[%s2501 + $0x58] sm:$0xf]
        %v2525 = vld [vmem:[%s2501 + $0x5c] sm:$0xf]
        %v2526 = vld [vmem:[%s2501 + $0x60] sm:$0xf]
        %v2527 = vld [vmem:[%s2501 + $0x64] sm:$0xf]
        %v2528 = vld [vmem:[%s2501 + $0x68] sm:$0xf]
        %v2529 = vld [vmem:[%s2501 + $0x6c] sm:$0xf]
        %v2530 = vld [vmem:[%s2501 + $0x70] sm:$0xf]
        %v2531 = vld [vmem:[%s2501 + $0x74] sm:$0xf]
        %v2532 = vld [vmem:[%s2501 + $0x78] sm:$0xf]
        %v2533 = vld [vmem:[%s2501 + $0x7c] sm:$0xf]
        %v2566 = vunpack.c.l.b16 %v2502
        %v2567 = vunpack.c.l.b16 %v2503
        %v2568 = vunpack.c.l.b16 %v2504
        %v2569 = vunpack.c.l.b16 %v2505
        %v2570 = vunpack.c.l.b16 %v2506
        %v2571 = vunpack.c.l.b16 %v2507
        %v2572 = vunpack.c.l.b16 %v2508
        %v2573 = vunpack.c.l.b16 %v2509
        %v2574 = vunpack.c.l.b16 %v2510
        %v2575 = vunpack.c.l.b16 %v2511
        %v2576 = vunpack.c.l.b16 %v2512
        %v2577 = vunpack.c.l.b16 %v2513
        %v2578 = vunpack.c.l.b16 %v2514
        %v2579 = vunpack.c.l.b16 %v2515
        %v2580 = vunpack.c.l.b16 %v2516
        %v2581 = vunpack.c.l.b16 %v2517
        %v2582 = vunpack.c.l.b16 %v2518
        %v2583 = vunpack.c.l.b16 %v2519
        %v2584 = vunpack.c.l.b16 %v2520
        %v2585 = vunpack.c.l.b16 %v2521
        %v2586 = vunpack.c.l.b16 %v2522
        %v2587 = vunpack.c.l.b16 %v2523
        %v2588 = vunpack.c.l.b16 %v2524
        %v2589 = vunpack.c.l.b16 %v2525
        %v2590 = vunpack.c.l.b16 %v2526
        %v2591 = vunpack.c.l.b16 %v2527
        %v2592 = vunpack.c.l.b16 %v2528
        %v2593 = vunpack.c.l.b16 %v2529
        %v2594 = vunpack.c.l.b16 %v2530
        %v2595 = vunpack.c.l.b16 %v2531
        %v2596 = vunpack.c.l.b16 %v2532
        %v2597 = vunpack.c.l.b16 %v2533
        %v2598 = vpack.c.b16 %v2567, %v2566
        %v2599 = vpack.c.b16 %v2569, %v2568
        %v2600 = vpack.c.b16 %v2571, %v2570
        %v2601 = vpack.c.b16 %v2573, %v2572
        %v2602 = vpack.c.b16 %v2575, %v2574
        %v2603 = vpack.c.b16 %v2577, %v2576
        %v2604 = vpack.c.b16 %v2579, %v2578
        %v2605 = vpack.c.b16 %v2581, %v2580
        %v2606 = vpack.c.b16 %v2583, %v2582
        %v2607 = vpack.c.b16 %v2585, %v2584
        %v2608 = vpack.c.b16 %v2587, %v2586
        %v2609 = vpack.c.b16 %v2589, %v2588
        %v2610 = vpack.c.b16 %v2591, %v2590
        %v2611 = vpack.c.b16 %v2593, %v2592
        %v2612 = vpack.c.b16 %v2595, %v2594
        %v2613 = vpack.c.b16 %v2597, %v2596
        %2630 = vmatpush.bf16.msra.mxu0 %v2605
        %2631 = vmatpush.bf16.msra.mxu0 %v2604
        %2632 = vmatpush.bf16.msra.mxu0 %v2603
        %2633 = vmatpush.bf16.msra.mxu0 %v2602
        %2634 = vmatpush.bf16.msra.mxu0 %v2601
        %2635 = vmatpush.bf16.msra.mxu0 %v2600
        %2636 = vmatpush.bf16.msra.mxu0 %v2599
        %2637 = vmatpush.bf16.msra.mxu0 %v2598
        %2638 = vmatmul.bf16.gmra.mxu0 %v252
        %v2639 = vpop.f32.mrf.mxu0
        %v2640 = vadd.f32 0.0, %v2639
        %v2641 = vpop.f32.mrf.mxu0
        %v2642 = vadd.f32 0.0, %v2641
        %2643 = vmatmul.bf16.gmra.mxu0 %v254
        %v2644 = vpop.f32.mrf.mxu0
        %v2645 = vadd.f32 0.0, %v2644
        %v2646 = vpop.f32.mrf.mxu0
        %v2647 = vadd.f32 0.0, %v2646
        %2648 = vmatmul.bf16.gmra.mxu0 %v256
        %v2649 = vpop.f32.mrf.mxu0
        %v2650 = vadd.f32 0.0, %v2649
        %v2651 = vpop.f32.mrf.mxu0
        %v2652 = vadd.f32 0.0, %v2651
        %2653 = vmatmul.bf16.gmra.mxu0 %v258
        %v2654 = vpop.f32.mrf.mxu0
        %v2655 = vadd.f32 0.0, %v2654
        %v2656 = vpop.f32.mrf.mxu0
        %v2657 = vadd.f32 0.0, %v2656
        %2658 = vdwg.mxu0
        %2659 = vmatpush.bf16.msra.mxu0 %v2613
        %2660 = vmatpush.bf16.msra.mxu0 %v2612
        %2661 = vmatpush.bf16.msra.mxu0 %v2611
        %2662 = vmatpush.bf16.msra.mxu0 %v2610
        %2663 = vmatpush.bf16.msra.mxu0 %v2609
        %2664 = vmatpush.bf16.msra.mxu0 %v2608
        %2665 = vmatpush.bf16.msra.mxu0 %v2607
        %2666 = vmatpush.bf16.msra.mxu0 %v2606
        %2667 = vmatmul.bf16.gmra.mxu0 %v253
        %v2668 = vpop.f32.mrf.mxu0
        %v2669 = vadd.f32 %v2640, %v2668
        %v2670 = vpop.f32.mrf.mxu0
        %v2671 = vadd.f32 %v2642, %v2670
        %2672 = vmatmul.bf16.gmra.mxu0 %v255
        %v2673 = vpop.f32.mrf.mxu0
        %v2674 = vadd.f32 %v2645, %v2673
        %v2675 = vpop.f32.mrf.mxu0
        %v2676 = vadd.f32 %v2647, %v2675
        %2677 = vmatmul.bf16.gmra.mxu0 %v257
        %v2678 = vpop.f32.mrf.mxu0
        %v2679 = vadd.f32 %v2650, %v2678
        %v2680 = vpop.f32.mrf.mxu0
        %v2681 = vadd.f32 %v2652, %v2680
        %2682 = vmatmul.bf16.gmra.mxu0 %v259
        %v2683 = vpop.f32.mrf.mxu0
        %v2684 = vadd.f32 %v2655, %v2683
        %v2685 = vpop.f32.mrf.mxu0
        %v2686 = vadd.f32 %v2657, %v2685
        %2687 = vdwg.mxu0
        %v2688 = vpack.c.bf16 %v2669, %v2669
        %v2689 = vpack.c.bf16 %v2671, %v2671
        %v2690 = vpack.c.bf16 %v2674, %v2674
        %v2691 = vpack.c.bf16 %v2676, %v2676
        %v2692 = vpack.c.bf16 %v2679, %v2679
        %v2693 = vpack.c.bf16 %v2681, %v2681
        %v2694 = vpack.c.bf16 %v2684, %v2684
        %v2695 = vpack.c.bf16 %v2686, %v2686
        %s2696 = scalar_lea.vmem %s222, 160 [#allocation3]
        %2697 = vst.msk [vmem:[%s2696] sm:$0xf] %vm454, %v2688
        %2698 = vst.msk [vmem:[%s2696 + $0x4] sm:$0xf] %vm454, %v2689
        %2699 = vst.msk [vmem:[%s2696 + $0x8] sm:$0xf] %vm454, %v2690
        %2700 = vst.msk [vmem:[%s2696 + $0xc] sm:$0xf] %vm454, %v2691
        %2701 = vst.msk [vmem:[%s2696 + $0x10] sm:$0xf] %vm454, %v2692
        %2702 = vst.msk [vmem:[%s2696 + $0x14] sm:$0xf] %vm454, %v2693
        %2703 = vst.msk [vmem:[%s2696 + $0x18] sm:$0xf] %vm454, %v2694
        %2704 = vst.msk [vmem:[%s2696 + $0x1c] sm:$0xf] %vm454, %v2695
        %s2705 = scalar_lea.vmem %s1, 768
        %v2706 = vld [vmem:[%s2705] sm:$0xf]
        %v2707 = vld [vmem:[%s2705 + $0x4] sm:$0xf]
        %v2708 = vld [vmem:[%s2705 + $0x8] sm:$0xf]
        %v2709 = vld [vmem:[%s2705 + $0xc] sm:$0xf]
        %v2710 = vld [vmem:[%s2705 + $0x10] sm:$0xf]
        %v2711 = vld [vmem:[%s2705 + $0x14] sm:$0xf]
        %v2712 = vld [vmem:[%s2705 + $0x18] sm:$0xf]
        %v2713 = vld [vmem:[%s2705 + $0x1c] sm:$0xf]
        %v2714 = vld [vmem:[%s2705 + $0x20] sm:$0xf]
        %v2715 = vld [vmem:[%s2705 + $0x24] sm:$0xf]
        %v2716 = vld [vmem:[%s2705 + $0x28] sm:$0xf]
        %v2717 = vld [vmem:[%s2705 + $0x2c] sm:$0xf]
        %v2718 = vld [vmem:[%s2705 + $0x30] sm:$0xf]
        %v2719 = vld [vmem:[%s2705 + $0x34] sm:$0xf]
        %v2720 = vld [vmem:[%s2705 + $0x38] sm:$0xf]
        %v2721 = vld [vmem:[%s2705 + $0x3c] sm:$0xf]
        %v2722 = vld [vmem:[%s2705 + $0x40] sm:$0xf]
        %v2723 = vld [vmem:[%s2705 + $0x44] sm:$0xf]
        %v2724 = vld [vmem:[%s2705 + $0x48] sm:$0xf]
        %v2725 = vld [vmem:[%s2705 + $0x4c] sm:$0xf]
        %v2726 = vld [vmem:[%s2705 + $0x50] sm:$0xf]
        %v2727 = vld [vmem:[%s2705 + $0x54] sm:$0xf]
        %v2728 = vld [vmem:[%s2705 + $0x58] sm:$0xf]
        %v2729 = vld [vmem:[%s2705 + $0x5c] sm:$0xf]
        %v2730 = vld [vmem:[%s2705 + $0x60] sm:$0xf]
        %v2731 = vld [vmem:[%s2705 + $0x64] sm:$0xf]
        %v2732 = vld [vmem:[%s2705 + $0x68] sm:$0xf]
        %v2733 = vld [vmem:[%s2705 + $0x6c] sm:$0xf]
        %v2734 = vld [vmem:[%s2705 + $0x70] sm:$0xf]
        %v2735 = vld [vmem:[%s2705 + $0x74] sm:$0xf]
        %v2736 = vld [vmem:[%s2705 + $0x78] sm:$0xf]
        %v2737 = vld [vmem:[%s2705 + $0x7c] sm:$0xf]
        %v2770 = vunpack.c.l.b16 %v2706
        %v2771 = vunpack.c.l.b16 %v2707
        %v2772 = vunpack.c.l.b16 %v2708
        %v2773 = vunpack.c.l.b16 %v2709
        %v2774 = vunpack.c.l.b16 %v2710
        %v2775 = vunpack.c.l.b16 %v2711
        %v2776 = vunpack.c.l.b16 %v2712
        %v2777 = vunpack.c.l.b16 %v2713
        %v2778 = vunpack.c.l.b16 %v2714
        %v2779 = vunpack.c.l.b16 %v2715
        %v2780 = vunpack.c.l.b16 %v2716
        %v2781 = vunpack.c.l.b16 %v2717
        %v2782 = vunpack.c.l.b16 %v2718
        %v2783 = vunpack.c.l.b16 %v2719
        %v2784 = vunpack.c.l.b16 %v2720
        %v2785 = vunpack.c.l.b16 %v2721
        %v2786 = vunpack.c.l.b16 %v2722
        %v2787 = vunpack.c.l.b16 %v2723
        %v2788 = vunpack.c.l.b16 %v2724
        %v2789 = vunpack.c.l.b16 %v2725
        %v2790 = vunpack.c.l.b16 %v2726
        %v2791 = vunpack.c.l.b16 %v2727
        %v2792 = vunpack.c.l.b16 %v2728
        %v2793 = vunpack.c.l.b16 %v2729
        %v2794 = vunpack.c.l.b16 %v2730
        %v2795 = vunpack.c.l.b16 %v2731
        %v2796 = vunpack.c.l.b16 %v2732
        %v2797 = vunpack.c.l.b16 %v2733
        %v2798 = vunpack.c.l.b16 %v2734
        %v2799 = vunpack.c.l.b16 %v2735
        %v2800 = vunpack.c.l.b16 %v2736
        %v2801 = vunpack.c.l.b16 %v2737
        %v2802 = vpack.c.b16 %v2771, %v2770
        %v2803 = vpack.c.b16 %v2773, %v2772
        %v2804 = vpack.c.b16 %v2775, %v2774
        %v2805 = vpack.c.b16 %v2777, %v2776
        %v2806 = vpack.c.b16 %v2779, %v2778
        %v2807 = vpack.c.b16 %v2781, %v2780
        %v2808 = vpack.c.b16 %v2783, %v2782
        %v2809 = vpack.c.b16 %v2785, %v2784
        %v2810 = vpack.c.b16 %v2787, %v2786
        %v2811 = vpack.c.b16 %v2789, %v2788
        %v2812 = vpack.c.b16 %v2791, %v2790
        %v2813 = vpack.c.b16 %v2793, %v2792
        %v2814 = vpack.c.b16 %v2795, %v2794
        %v2815 = vpack.c.b16 %v2797, %v2796
        %v2816 = vpack.c.b16 %v2799, %v2798
        %v2817 = vpack.c.b16 %v2801, %v2800
        %2834 = vmatpush.bf16.msra.mxu0 %v2809
        %2835 = vmatpush.bf16.msra.mxu0 %v2808
        %2836 = vmatpush.bf16.msra.mxu0 %v2807
        %2837 = vmatpush.bf16.msra.mxu0 %v2806
        %2838 = vmatpush.bf16.msra.mxu0 %v2805
        %2839 = vmatpush.bf16.msra.mxu0 %v2804
        %2840 = vmatpush.bf16.msra.mxu0 %v2803
        %2841 = vmatpush.bf16.msra.mxu0 %v2802
        %2842 = vmatmul.bf16.gmra.mxu0 %v252
        %v2843 = vpop.f32.mrf.mxu0
        %v2844 = vadd.f32 0.0, %v2843
        %v2845 = vpop.f32.mrf.mxu0
        %v2846 = vadd.f32 0.0, %v2845
        %2847 = vmatmul.bf16.gmra.mxu0 %v254
        %v2848 = vpop.f32.mrf.mxu0
        %v2849 = vadd.f32 0.0, %v2848
        %v2850 = vpop.f32.mrf.mxu0
        %v2851 = vadd.f32 0.0, %v2850
        %2852 = vmatmul.bf16.gmra.mxu0 %v256
        %v2853 = vpop.f32.mrf.mxu0
        %v2854 = vadd.f32 0.0, %v2853
        %v2855 = vpop.f32.mrf.mxu0
        %v2856 = vadd.f32 0.0, %v2855
        %2857 = vmatmul.bf16.gmra.mxu0 %v258
        %v2858 = vpop.f32.mrf.mxu0
        %v2859 = vadd.f32 0.0, %v2858
        %v2860 = vpop.f32.mrf.mxu0
        %v2861 = vadd.f32 0.0, %v2860
        %2862 = vdwg.mxu0
        %2863 = vmatpush.bf16.msra.mxu0 %v2817
        %2864 = vmatpush.bf16.msra.mxu0 %v2816
        %2865 = vmatpush.bf16.msra.mxu0 %v2815
        %2866 = vmatpush.bf16.msra.mxu0 %v2814
        %2867 = vmatpush.bf16.msra.mxu0 %v2813
        %2868 = vmatpush.bf16.msra.mxu0 %v2812
        %2869 = vmatpush.bf16.msra.mxu0 %v2811
        %2870 = vmatpush.bf16.msra.mxu0 %v2810
        %2871 = vmatmul.bf16.gmra.mxu0 %v253
        %v2872 = vpop.f32.mrf.mxu0
        %v2873 = vadd.f32 %v2844, %v2872
        %v2874 = vpop.f32.mrf.mxu0
        %v2875 = vadd.f32 %v2846, %v2874
        %2876 = vmatmul.bf16.gmra.mxu0 %v255
        %v2877 = vpop.f32.mrf.mxu0
        %v2878 = vadd.f32 %v2849, %v2877
        %v2879 = vpop.f32.mrf.mxu0
        %v2880 = vadd.f32 %v2851, %v2879
        %2881 = vmatmul.bf16.gmra.mxu0 %v257
        %v2882 = vpop.f32.mrf.mxu0
        %v2883 = vadd.f32 %v2854, %v2882
        %v2884 = vpop.f32.mrf.mxu0
        %v2885 = vadd.f32 %v2856, %v2884
        %2886 = vmatmul.bf16.gmra.mxu0 %v259
        %v2887 = vpop.f32.mrf.mxu0
        %v2888 = vadd.f32 %v2859, %v2887
        %v2889 = vpop.f32.mrf.mxu0
        %v2890 = vadd.f32 %v2861, %v2889
        %2891 = vdwg.mxu0
        %v2892 = vpack.c.bf16 %v2873, %v2873
        %v2893 = vpack.c.bf16 %v2875, %v2875
        %v2894 = vpack.c.bf16 %v2878, %v2878
        %v2895 = vpack.c.bf16 %v2880, %v2880
        %v2896 = vpack.c.bf16 %v2883, %v2883
        %v2897 = vpack.c.bf16 %v2885, %v2885
        %v2898 = vpack.c.bf16 %v2888, %v2888
        %v2899 = vpack.c.bf16 %v2890, %v2890
        %s2900 = scalar_lea.vmem %s216, 192 [#allocation2]
        %2901 = vst.msk [vmem:[%s2900] sm:$0xf] %vm454, %v2892
        %2902 = vst.msk [vmem:[%s2900 + $0x4] sm:$0xf] %vm454, %v2893
        %2903 = vst.msk [vmem:[%s2900 + $0x8] sm:$0xf] %vm454, %v2894
        %2904 = vst.msk [vmem:[%s2900 + $0xc] sm:$0xf] %vm454, %v2895
        %2905 = vst.msk [vmem:[%s2900 + $0x10] sm:$0xf] %vm454, %v2896
        %2906 = vst.msk [vmem:[%s2900 + $0x14] sm:$0xf] %vm454, %v2897
        %2907 = vst.msk [vmem:[%s2900 + $0x18] sm:$0xf] %vm454, %v2898
        %2908 = vst.msk [vmem:[%s2900 + $0x1c] sm:$0xf] %vm454, %v2899
        %s2909 = scalar_lea.vmem %s2, 768
        %v2910 = vld [vmem:[%s2909] sm:$0xf]
        %v2911 = vld [vmem:[%s2909 + $0x4] sm:$0xf]
        %v2912 = vld [vmem:[%s2909 + $0x8] sm:$0xf]
        %v2913 = vld [vmem:[%s2909 + $0xc] sm:$0xf]
        %v2914 = vld [vmem:[%s2909 + $0x10] sm:$0xf]
        %v2915 = vld [vmem:[%s2909 + $0x14] sm:$0xf]
        %v2916 = vld [vmem:[%s2909 + $0x18] sm:$0xf]
        %v2917 = vld [vmem:[%s2909 + $0x1c] sm:$0xf]
        %v2918 = vld [vmem:[%s2909 + $0x20] sm:$0xf]
        %v2919 = vld [vmem:[%s2909 + $0x24] sm:$0xf]
        %v2920 = vld [vmem:[%s2909 + $0x28] sm:$0xf]
        %v2921 = vld [vmem:[%s2909 + $0x2c] sm:$0xf]
        %v2922 = vld [vmem:[%s2909 + $0x30] sm:$0xf]
        %v2923 = vld [vmem:[%s2909 + $0x34] sm:$0xf]
        %v2924 = vld [vmem:[%s2909 + $0x38] sm:$0xf]
        %v2925 = vld [vmem:[%s2909 + $0x3c] sm:$0xf]
        %v2926 = vld [vmem:[%s2909 + $0x40] sm:$0xf]
        %v2927 = vld [vmem:[%s2909 + $0x44] sm:$0xf]
        %v2928 = vld [vmem:[%s2909 + $0x48] sm:$0xf]
        %v2929 = vld [vmem:[%s2909 + $0x4c] sm:$0xf]
        %v2930 = vld [vmem:[%s2909 + $0x50] sm:$0xf]
        %v2931 = vld [vmem:[%s2909 + $0x54] sm:$0xf]
        %v2932 = vld [vmem:[%s2909 + $0x58] sm:$0xf]
        %v2933 = vld [vmem:[%s2909 + $0x5c] sm:$0xf]
        %v2934 = vld [vmem:[%s2909 + $0x60] sm:$0xf]
        %v2935 = vld [vmem:[%s2909 + $0x64] sm:$0xf]
        %v2936 = vld [vmem:[%s2909 + $0x68] sm:$0xf]
        %v2937 = vld [vmem:[%s2909 + $0x6c] sm:$0xf]
        %v2938 = vld [vmem:[%s2909 + $0x70] sm:$0xf]
        %v2939 = vld [vmem:[%s2909 + $0x74] sm:$0xf]
        %v2940 = vld [vmem:[%s2909 + $0x78] sm:$0xf]
        %v2941 = vld [vmem:[%s2909 + $0x7c] sm:$0xf]
        %v2974 = vunpack.c.l.b16 %v2910
        %v2975 = vunpack.c.l.b16 %v2911
        %v2976 = vunpack.c.l.b16 %v2912
        %v2977 = vunpack.c.l.b16 %v2913
        %v2978 = vunpack.c.l.b16 %v2914
        %v2979 = vunpack.c.l.b16 %v2915
        %v2980 = vunpack.c.l.b16 %v2916
        %v2981 = vunpack.c.l.b16 %v2917
        %v2982 = vunpack.c.l.b16 %v2918
        %v2983 = vunpack.c.l.b16 %v2919
        %v2984 = vunpack.c.l.b16 %v2920
        %v2985 = vunpack.c.l.b16 %v2921
        %v2986 = vunpack.c.l.b16 %v2922
        %v2987 = vunpack.c.l.b16 %v2923
        %v2988 = vunpack.c.l.b16 %v2924
        %v2989 = vunpack.c.l.b16 %v2925
        %v2990 = vunpack.c.l.b16 %v2926
        %v2991 = vunpack.c.l.b16 %v2927
        %v2992 = vunpack.c.l.b16 %v2928
        %v2993 = vunpack.c.l.b16 %v2929
        %v2994 = vunpack.c.l.b16 %v2930
        %v2995 = vunpack.c.l.b16 %v2931
        %v2996 = vunpack.c.l.b16 %v2932
        %v2997 = vunpack.c.l.b16 %v2933
        %v2998 = vunpack.c.l.b16 %v2934
        %v2999 = vunpack.c.l.b16 %v2935
        %v3000 = vunpack.c.l.b16 %v2936
        %v3001 = vunpack.c.l.b16 %v2937
        %v3002 = vunpack.c.l.b16 %v2938
        %v3003 = vunpack.c.l.b16 %v2939
        %v3004 = vunpack.c.l.b16 %v2940
        %v3005 = vunpack.c.l.b16 %v2941
        %v3006 = vpack.c.b16 %v2975, %v2974
        %v3007 = vpack.c.b16 %v2977, %v2976
        %v3008 = vpack.c.b16 %v2979, %v2978
        %v3009 = vpack.c.b16 %v2981, %v2980
        %v3010 = vpack.c.b16 %v2983, %v2982
        %v3011 = vpack.c.b16 %v2985, %v2984
        %v3012 = vpack.c.b16 %v2987, %v2986
        %v3013 = vpack.c.b16 %v2989, %v2988
        %v3014 = vpack.c.b16 %v2991, %v2990
        %v3015 = vpack.c.b16 %v2993, %v2992
        %v3016 = vpack.c.b16 %v2995, %v2994
        %v3017 = vpack.c.b16 %v2997, %v2996
        %v3018 = vpack.c.b16 %v2999, %v2998
        %v3019 = vpack.c.b16 %v3001, %v3000
        %v3020 = vpack.c.b16 %v3003, %v3002
        %v3021 = vpack.c.b16 %v3005, %v3004
        %3038 = vmatpush.bf16.msra.mxu0 %v3013
        %3039 = vmatpush.bf16.msra.mxu0 %v3012
        %3040 = vmatpush.bf16.msra.mxu0 %v3011
        %3041 = vmatpush.bf16.msra.mxu0 %v3010
        %3042 = vmatpush.bf16.msra.mxu0 %v3009
        %3043 = vmatpush.bf16.msra.mxu0 %v3008
        %3044 = vmatpush.bf16.msra.mxu0 %v3007
        %3045 = vmatpush.bf16.msra.mxu0 %v3006
        %3046 = vmatmul.bf16.gmra.mxu0 %v252
        %v3047 = vpop.f32.mrf.mxu0
        %v3048 = vadd.f32 0.0, %v3047
        %v3049 = vpop.f32.mrf.mxu0
        %v3050 = vadd.f32 0.0, %v3049
        %3051 = vmatmul.bf16.gmra.mxu0 %v254
        %v3052 = vpop.f32.mrf.mxu0
        %v3053 = vadd.f32 0.0, %v3052
        %v3054 = vpop.f32.mrf.mxu0
        %v3055 = vadd.f32 0.0, %v3054
        %3056 = vmatmul.bf16.gmra.mxu0 %v256
        %v3057 = vpop.f32.mrf.mxu0
        %v3058 = vadd.f32 0.0, %v3057
        %v3059 = vpop.f32.mrf.mxu0
        %v3060 = vadd.f32 0.0, %v3059
        %3061 = vmatmul.bf16.gmra.mxu0 %v258
        %v3062 = vpop.f32.mrf.mxu0
        %v3063 = vadd.f32 0.0, %v3062
        %v3064 = vpop.f32.mrf.mxu0
        %v3065 = vadd.f32 0.0, %v3064
        %3066 = vdwg.mxu0
        %3067 = vmatpush.bf16.msra.mxu0 %v3021
        %3068 = vmatpush.bf16.msra.mxu0 %v3020
        %3069 = vmatpush.bf16.msra.mxu0 %v3019
        %3070 = vmatpush.bf16.msra.mxu0 %v3018
        %3071 = vmatpush.bf16.msra.mxu0 %v3017
        %3072 = vmatpush.bf16.msra.mxu0 %v3016
        %3073 = vmatpush.bf16.msra.mxu0 %v3015
        %3074 = vmatpush.bf16.msra.mxu0 %v3014
        %3075 = vmatmul.bf16.gmra.mxu0 %v253
        %v3076 = vpop.f32.mrf.mxu0
        %v3077 = vadd.f32 %v3048, %v3076
        %v3078 = vpop.f32.mrf.mxu0
        %v3079 = vadd.f32 %v3050, %v3078
        %3080 = vmatmul.bf16.gmra.mxu0 %v255
        %v3081 = vpop.f32.mrf.mxu0
        %v3082 = vadd.f32 %v3053, %v3081
        %v3083 = vpop.f32.mrf.mxu0
        %v3084 = vadd.f32 %v3055, %v3083
        %3085 = vmatmul.bf16.gmra.mxu0 %v257
        %v3086 = vpop.f32.mrf.mxu0
        %v3087 = vadd.f32 %v3058, %v3086
        %v3088 = vpop.f32.mrf.mxu0
        %v3089 = vadd.f32 %v3060, %v3088
        %3090 = vmatmul.bf16.gmra.mxu0 %v259
        %v3091 = vpop.f32.mrf.mxu0
        %v3092 = vadd.f32 %v3063, %v3091
        %v3093 = vpop.f32.mrf.mxu0
        %v3094 = vadd.f32 %v3065, %v3093
        %3095 = vdwg.mxu0
        %v3096 = vpack.c.bf16 %v3077, %v3077
        %v3097 = vpack.c.bf16 %v3079, %v3079
        %v3098 = vpack.c.bf16 %v3082, %v3082
        %v3099 = vpack.c.bf16 %v3084, %v3084
        %v3100 = vpack.c.bf16 %v3087, %v3087
        %v3101 = vpack.c.bf16 %v3089, %v3089
        %v3102 = vpack.c.bf16 %v3092, %v3092
        %v3103 = vpack.c.bf16 %v3094, %v3094
        %s3104 = scalar_lea.vmem %s222, 192 [#allocation3]
        %3105 = vst.msk [vmem:[%s3104] sm:$0xf] %vm454, %v3096
        %3106 = vst.msk [vmem:[%s3104 + $0x4] sm:$0xf] %vm454, %v3097
        %3107 = vst.msk [vmem:[%s3104 + $0x8] sm:$0xf] %vm454, %v3098
        %3108 = vst.msk [vmem:[%s3104 + $0xc] sm:$0xf] %vm454, %v3099
        %3109 = vst.msk [vmem:[%s3104 + $0x10] sm:$0xf] %vm454, %v3100
        %3110 = vst.msk [vmem:[%s3104 + $0x14] sm:$0xf] %vm454, %v3101
        %3111 = vst.msk [vmem:[%s3104 + $0x18] sm:$0xf] %vm454, %v3102
        %3112 = vst.msk [vmem:[%s3104 + $0x1c] sm:$0xf] %vm454, %v3103
        %s3113 = scalar_lea.vmem %s1, 896
        %v3114 = vld [vmem:[%s3113] sm:$0xf]
        %v3115 = vld [vmem:[%s3113 + $0x4] sm:$0xf]
        %v3116 = vld [vmem:[%s3113 + $0x8] sm:$0xf]
        %v3117 = vld [vmem:[%s3113 + $0xc] sm:$0xf]
        %v3118 = vld [vmem:[%s3113 + $0x10] sm:$0xf]
        %v3119 = vld [vmem:[%s3113 + $0x14] sm:$0xf]
        %v3120 = vld [vmem:[%s3113 + $0x18] sm:$0xf]
        %v3121 = vld [vmem:[%s3113 + $0x1c] sm:$0xf]
        %v3122 = vld [vmem:[%s3113 + $0x20] sm:$0xf]
        %v3123 = vld [vmem:[%s3113 + $0x24] sm:$0xf]
        %v3124 = vld [vmem:[%s3113 + $0x28] sm:$0xf]
        %v3125 = vld [vmem:[%s3113 + $0x2c] sm:$0xf]
        %v3126 = vld [vmem:[%s3113 + $0x30] sm:$0xf]
        %v3127 = vld [vmem:[%s3113 + $0x34] sm:$0xf]
        %v3128 = vld [vmem:[%s3113 + $0x38] sm:$0xf]
        %v3129 = vld [vmem:[%s3113 + $0x3c] sm:$0xf]
        %v3130 = vld [vmem:[%s3113 + $0x40] sm:$0xf]
        %v3131 = vld [vmem:[%s3113 + $0x44] sm:$0xf]
        %v3132 = vld [vmem:[%s3113 + $0x48] sm:$0xf]
        %v3133 = vld [vmem:[%s3113 + $0x4c] sm:$0xf]
        %v3134 = vld [vmem:[%s3113 + $0x50] sm:$0xf]
        %v3135 = vld [vmem:[%s3113 + $0x54] sm:$0xf]
        %v3136 = vld [vmem:[%s3113 + $0x58] sm:$0xf]
        %v3137 = vld [vmem:[%s3113 + $0x5c] sm:$0xf]
        %v3138 = vld [vmem:[%s3113 + $0x60] sm:$0xf]
        %v3139 = vld [vmem:[%s3113 + $0x64] sm:$0xf]
        %v3140 = vld [vmem:[%s3113 + $0x68] sm:$0xf]
        %v3141 = vld [vmem:[%s3113 + $0x6c] sm:$0xf]
        %v3142 = vld [vmem:[%s3113 + $0x70] sm:$0xf]
        %v3143 = vld [vmem:[%s3113 + $0x74] sm:$0xf]
        %v3144 = vld [vmem:[%s3113 + $0x78] sm:$0xf]
        %v3145 = vld [vmem:[%s3113 + $0x7c] sm:$0xf]
        %v3178 = vunpack.c.l.b16 %v3114
        %v3179 = vunpack.c.l.b16 %v3115
        %v3180 = vunpack.c.l.b16 %v3116
        %v3181 = vunpack.c.l.b16 %v3117
        %v3182 = vunpack.c.l.b16 %v3118
        %v3183 = vunpack.c.l.b16 %v3119
        %v3184 = vunpack.c.l.b16 %v3120
        %v3185 = vunpack.c.l.b16 %v3121
        %v3186 = vunpack.c.l.b16 %v3122
        %v3187 = vunpack.c.l.b16 %v3123
        %v3188 = vunpack.c.l.b16 %v3124
        %v3189 = vunpack.c.l.b16 %v3125
        %v3190 = vunpack.c.l.b16 %v3126
        %v3191 = vunpack.c.l.b16 %v3127
        %v3192 = vunpack.c.l.b16 %v3128
        %v3193 = vunpack.c.l.b16 %v3129
        %v3194 = vunpack.c.l.b16 %v3130
        %v3195 = vunpack.c.l.b16 %v3131
        %v3196 = vunpack.c.l.b16 %v3132
        %v3197 = vunpack.c.l.b16 %v3133
        %v3198 = vunpack.c.l.b16 %v3134
        %v3199 = vunpack.c.l.b16 %v3135
        %v3200 = vunpack.c.l.b16 %v3136
        %v3201 = vunpack.c.l.b16 %v3137
        %v3202 = vunpack.c.l.b16 %v3138
        %v3203 = vunpack.c.l.b16 %v3139
        %v3204 = vunpack.c.l.b16 %v3140
        %v3205 = vunpack.c.l.b16 %v3141
        %v3206 = vunpack.c.l.b16 %v3142
        %v3207 = vunpack.c.l.b16 %v3143
        %v3208 = vunpack.c.l.b16 %v3144
        %v3209 = vunpack.c.l.b16 %v3145
        %v3210 = vpack.c.b16 %v3179, %v3178
        %v3211 = vpack.c.b16 %v3181, %v3180
        %v3212 = vpack.c.b16 %v3183, %v3182
        %v3213 = vpack.c.b16 %v3185, %v3184
        %v3214 = vpack.c.b16 %v3187, %v3186
        %v3215 = vpack.c.b16 %v3189, %v3188
        %v3216 = vpack.c.b16 %v3191, %v3190
        %v3217 = vpack.c.b16 %v3193, %v3192
        %v3218 = vpack.c.b16 %v3195, %v3194
        %v3219 = vpack.c.b16 %v3197, %v3196
        %v3220 = vpack.c.b16 %v3199, %v3198
        %v3221 = vpack.c.b16 %v3201, %v3200
        %v3222 = vpack.c.b16 %v3203, %v3202
        %v3223 = vpack.c.b16 %v3205, %v3204
        %v3224 = vpack.c.b16 %v3207, %v3206
        %v3225 = vpack.c.b16 %v3209, %v3208
        %3242 = vmatpush.bf16.msra.mxu0 %v3217
        %3243 = vmatpush.bf16.msra.mxu0 %v3216
        %3244 = vmatpush.bf16.msra.mxu0 %v3215
        %3245 = vmatpush.bf16.msra.mxu0 %v3214
        %3246 = vmatpush.bf16.msra.mxu0 %v3213
        %3247 = vmatpush.bf16.msra.mxu0 %v3212
        %3248 = vmatpush.bf16.msra.mxu0 %v3211
        %3249 = vmatpush.bf16.msra.mxu0 %v3210
        %3250 = vmatmul.bf16.gmra.mxu0 %v252
        %v3251 = vpop.f32.mrf.mxu0
        %v3252 = vadd.f32 0.0, %v3251
        %v3253 = vpop.f32.mrf.mxu0
        %v3254 = vadd.f32 0.0, %v3253
        %3255 = vmatmul.bf16.gmra.mxu0 %v254
        %v3256 = vpop.f32.mrf.mxu0
        %v3257 = vadd.f32 0.0, %v3256
        %v3258 = vpop.f32.mrf.mxu0
        %v3259 = vadd.f32 0.0, %v3258
        %3260 = vmatmul.bf16.gmra.mxu0 %v256
        %v3261 = vpop.f32.mrf.mxu0
        %v3262 = vadd.f32 0.0, %v3261
        %v3263 = vpop.f32.mrf.mxu0
        %v3264 = vadd.f32 0.0, %v3263
        %3265 = vmatmul.bf16.gmra.mxu0 %v258
        %v3266 = vpop.f32.mrf.mxu0
        %v3267 = vadd.f32 0.0, %v3266
        %v3268 = vpop.f32.mrf.mxu0
        %v3269 = vadd.f32 0.0, %v3268
        %3270 = vdwg.mxu0
        %3271 = vmatpush.bf16.msra.mxu0 %v3225
        %3272 = vmatpush.bf16.msra.mxu0 %v3224
        %3273 = vmatpush.bf16.msra.mxu0 %v3223
        %3274 = vmatpush.bf16.msra.mxu0 %v3222
        %3275 = vmatpush.bf16.msra.mxu0 %v3221
        %3276 = vmatpush.bf16.msra.mxu0 %v3220
        %3277 = vmatpush.bf16.msra.mxu0 %v3219
        %3278 = vmatpush.bf16.msra.mxu0 %v3218
        %3279 = vmatmul.bf16.gmra.mxu0 %v253
        %v3280 = vpop.f32.mrf.mxu0
        %v3281 = vadd.f32 %v3252, %v3280
        %v3282 = vpop.f32.mrf.mxu0
        %v3283 = vadd.f32 %v3254, %v3282
        %3284 = vmatmul.bf16.gmra.mxu0 %v255
        %v3285 = vpop.f32.mrf.mxu0
        %v3286 = vadd.f32 %v3257, %v3285
        %v3287 = vpop.f32.mrf.mxu0
        %v3288 = vadd.f32 %v3259, %v3287
        %3289 = vmatmul.bf16.gmra.mxu0 %v257
        %v3290 = vpop.f32.mrf.mxu0
        %v3291 = vadd.f32 %v3262, %v3290
        %v3292 = vpop.f32.mrf.mxu0
        %v3293 = vadd.f32 %v3264, %v3292
        %3294 = vmatmul.bf16.gmra.mxu0 %v259
        %v3295 = vpop.f32.mrf.mxu0
        %v3296 = vadd.f32 %v3267, %v3295
        %v3297 = vpop.f32.mrf.mxu0
        %v3298 = vadd.f32 %v3269, %v3297
        %3299 = vdwg.mxu0
        %v3300 = vpack.c.bf16 %v3281, %v3281
        %v3301 = vpack.c.bf16 %v3283, %v3283
        %v3302 = vpack.c.bf16 %v3286, %v3286
        %v3303 = vpack.c.bf16 %v3288, %v3288
        %v3304 = vpack.c.bf16 %v3291, %v3291
        %v3305 = vpack.c.bf16 %v3293, %v3293
        %v3306 = vpack.c.bf16 %v3296, %v3296
        %v3307 = vpack.c.bf16 %v3298, %v3298
        %s3308 = scalar_lea.vmem %s216, 224 [#allocation2]
        %3309 = vst.msk [vmem:[%s3308] sm:$0xf] %vm454, %v3300
        %3310 = vst.msk [vmem:[%s3308 + $0x4] sm:$0xf] %vm454, %v3301
        %3311 = vst.msk [vmem:[%s3308 + $0x8] sm:$0xf] %vm454, %v3302
        %3312 = vst.msk [vmem:[%s3308 + $0xc] sm:$0xf] %vm454, %v3303
        %3313 = vst.msk [vmem:[%s3308 + $0x10] sm:$0xf] %vm454, %v3304
        %3314 = vst.msk [vmem:[%s3308 + $0x14] sm:$0xf] %vm454, %v3305
        %3315 = vst.msk [vmem:[%s3308 + $0x18] sm:$0xf] %vm454, %v3306
        %3316 = vst.msk [vmem:[%s3308 + $0x1c] sm:$0xf] %vm454, %v3307
        %s3317 = scalar_lea.vmem %s2, 896
        %v3318 = vld [vmem:[%s3317] sm:$0xf]
        %v3319 = vld [vmem:[%s3317 + $0x4] sm:$0xf]
        %v3320 = vld [vmem:[%s3317 + $0x8] sm:$0xf]
        %v3321 = vld [vmem:[%s3317 + $0xc] sm:$0xf]
        %v3322 = vld [vmem:[%s3317 + $0x10] sm:$0xf]
        %v3323 = vld [vmem:[%s3317 + $0x14] sm:$0xf]
        %v3324 = vld [vmem:[%s3317 + $0x18] sm:$0xf]
        %v3325 = vld [vmem:[%s3317 + $0x1c] sm:$0xf]
        %v3326 = vld [vmem:[%s3317 + $0x20] sm:$0xf]
        %v3327 = vld [vmem:[%s3317 + $0x24] sm:$0xf]
        %v3328 = vld [vmem:[%s3317 + $0x28] sm:$0xf]
        %v3329 = vld [vmem:[%s3317 + $0x2c] sm:$0xf]
        %v3330 = vld [vmem:[%s3317 + $0x30] sm:$0xf]
        %v3331 = vld [vmem:[%s3317 + $0x34] sm:$0xf]
        %v3332 = vld [vmem:[%s3317 + $0x38] sm:$0xf]
        %v3333 = vld [vmem:[%s3317 + $0x3c] sm:$0xf]
        %v3334 = vld [vmem:[%s3317 + $0x40] sm:$0xf]
        %v3335 = vld [vmem:[%s3317 + $0x44] sm:$0xf]
        %v3336 = vld [vmem:[%s3317 + $0x48] sm:$0xf]
        %v3337 = vld [vmem:[%s3317 + $0x4c] sm:$0xf]
        %v3338 = vld [vmem:[%s3317 + $0x50] sm:$0xf]
        %v3339 = vld [vmem:[%s3317 + $0x54] sm:$0xf]
        %v3340 = vld [vmem:[%s3317 + $0x58] sm:$0xf]
        %v3341 = vld [vmem:[%s3317 + $0x5c] sm:$0xf]
        %v3342 = vld [vmem:[%s3317 + $0x60] sm:$0xf]
        %v3343 = vld [vmem:[%s3317 + $0x64] sm:$0xf]
        %v3344 = vld [vmem:[%s3317 + $0x68] sm:$0xf]
        %v3345 = vld [vmem:[%s3317 + $0x6c] sm:$0xf]
        %v3346 = vld [vmem:[%s3317 + $0x70] sm:$0xf]
        %v3347 = vld [vmem:[%s3317 + $0x74] sm:$0xf]
        %v3348 = vld [vmem:[%s3317 + $0x78] sm:$0xf]
        %v3349 = vld [vmem:[%s3317 + $0x7c] sm:$0xf]
        %v3382 = vunpack.c.l.b16 %v3318
        %v3383 = vunpack.c.l.b16 %v3319
        %v3384 = vunpack.c.l.b16 %v3320
        %v3385 = vunpack.c.l.b16 %v3321
        %v3386 = vunpack.c.l.b16 %v3322
        %v3387 = vunpack.c.l.b16 %v3323
        %v3388 = vunpack.c.l.b16 %v3324
        %v3389 = vunpack.c.l.b16 %v3325
        %v3390 = vunpack.c.l.b16 %v3326
        %v3391 = vunpack.c.l.b16 %v3327
        %v3392 = vunpack.c.l.b16 %v3328
        %v3393 = vunpack.c.l.b16 %v3329
        %v3394 = vunpack.c.l.b16 %v3330
        %v3395 = vunpack.c.l.b16 %v3331
        %v3396 = vunpack.c.l.b16 %v3332
        %v3397 = vunpack.c.l.b16 %v3333
        %v3398 = vunpack.c.l.b16 %v3334
        %v3399 = vunpack.c.l.b16 %v3335
        %v3400 = vunpack.c.l.b16 %v3336
        %v3401 = vunpack.c.l.b16 %v3337
        %v3402 = vunpack.c.l.b16 %v3338
        %v3403 = vunpack.c.l.b16 %v3339
        %v3404 = vunpack.c.l.b16 %v3340
        %v3405 = vunpack.c.l.b16 %v3341
        %v3406 = vunpack.c.l.b16 %v3342
        %v3407 = vunpack.c.l.b16 %v3343
        %v3408 = vunpack.c.l.b16 %v3344
        %v3409 = vunpack.c.l.b16 %v3345
        %v3410 = vunpack.c.l.b16 %v3346
        %v3411 = vunpack.c.l.b16 %v3347
        %v3412 = vunpack.c.l.b16 %v3348
        %v3413 = vunpack.c.l.b16 %v3349
        %v3414 = vpack.c.b16 %v3383, %v3382
        %v3415 = vpack.c.b16 %v3385, %v3384
        %v3416 = vpack.c.b16 %v3387, %v3386
        %v3417 = vpack.c.b16 %v3389, %v3388
        %v3418 = vpack.c.b16 %v3391, %v3390
        %v3419 = vpack.c.b16 %v3393, %v3392
        %v3420 = vpack.c.b16 %v3395, %v3394
        %v3421 = vpack.c.b16 %v3397, %v3396
        %v3422 = vpack.c.b16 %v3399, %v3398
        %v3423 = vpack.c.b16 %v3401, %v3400
        %v3424 = vpack.c.b16 %v3403, %v3402
        %v3425 = vpack.c.b16 %v3405, %v3404
        %v3426 = vpack.c.b16 %v3407, %v3406
        %v3427 = vpack.c.b16 %v3409, %v3408
        %v3428 = vpack.c.b16 %v3411, %v3410
        %v3429 = vpack.c.b16 %v3413, %v3412
        %3446 = vmatpush.bf16.msra.mxu0 %v3421
        %3447 = vmatpush.bf16.msra.mxu0 %v3420
        %3448 = vmatpush.bf16.msra.mxu0 %v3419
        %3449 = vmatpush.bf16.msra.mxu0 %v3418
        %3450 = vmatpush.bf16.msra.mxu0 %v3417
        %3451 = vmatpush.bf16.msra.mxu0 %v3416
        %3452 = vmatpush.bf16.msra.mxu0 %v3415
        %3453 = vmatpush.bf16.msra.mxu0 %v3414
        %3454 = vmatmul.bf16.gmra.mxu0 %v252
        %v3455 = vpop.f32.mrf.mxu0
        %v3456 = vadd.f32 0.0, %v3455
        %v3457 = vpop.f32.mrf.mxu0
        %v3458 = vadd.f32 0.0, %v3457
        %3459 = vmatmul.bf16.gmra.mxu0 %v254
        %v3460 = vpop.f32.mrf.mxu0
        %v3461 = vadd.f32 0.0, %v3460
        %v3462 = vpop.f32.mrf.mxu0
        %v3463 = vadd.f32 0.0, %v3462
        %3464 = vmatmul.bf16.gmra.mxu0 %v256
        %v3465 = vpop.f32.mrf.mxu0
        %v3466 = vadd.f32 0.0, %v3465
        %v3467 = vpop.f32.mrf.mxu0
        %v3468 = vadd.f32 0.0, %v3467
        %3469 = vmatmul.bf16.gmra.mxu0 %v258
        %v3470 = vpop.f32.mrf.mxu0
        %v3471 = vadd.f32 0.0, %v3470
        %v3472 = vpop.f32.mrf.mxu0
        %v3473 = vadd.f32 0.0, %v3472
        %3474 = vdwg.mxu0
        %3475 = vmatpush.bf16.msra.mxu0 %v3429
        %3476 = vmatpush.bf16.msra.mxu0 %v3428
        %3477 = vmatpush.bf16.msra.mxu0 %v3427
        %3478 = vmatpush.bf16.msra.mxu0 %v3426
        %3479 = vmatpush.bf16.msra.mxu0 %v3425
        %3480 = vmatpush.bf16.msra.mxu0 %v3424
        %3481 = vmatpush.bf16.msra.mxu0 %v3423
        %3482 = vmatpush.bf16.msra.mxu0 %v3422
        %3483 = vmatmul.bf16.gmra.mxu0 %v253
        %v3484 = vpop.f32.mrf.mxu0
        %v3485 = vadd.f32 %v3456, %v3484
        %v3486 = vpop.f32.mrf.mxu0
        %v3487 = vadd.f32 %v3458, %v3486
        %3488 = vmatmul.bf16.gmra.mxu0 %v255
        %v3489 = vpop.f32.mrf.mxu0
        %v3490 = vadd.f32 %v3461, %v3489
        %v3491 = vpop.f32.mrf.mxu0
        %v3492 = vadd.f32 %v3463, %v3491
        %3493 = vmatmul.bf16.gmra.mxu0 %v257
        %v3494 = vpop.f32.mrf.mxu0
        %v3495 = vadd.f32 %v3466, %v3494
        %v3496 = vpop.f32.mrf.mxu0
        %v3497 = vadd.f32 %v3468, %v3496
        %3498 = vmatmul.bf16.gmra.mxu0 %v259
        %v3499 = vpop.f32.mrf.mxu0
        %v3500 = vadd.f32 %v3471, %v3499
        %v3501 = vpop.f32.mrf.mxu0
        %v3502 = vadd.f32 %v3473, %v3501
        %3503 = vdwg.mxu0
        %v3504 = vpack.c.bf16 %v3485, %v3485
        %v3505 = vpack.c.bf16 %v3487, %v3487
        %v3506 = vpack.c.bf16 %v3490, %v3490
        %v3507 = vpack.c.bf16 %v3492, %v3492
        %v3508 = vpack.c.bf16 %v3495, %v3495
        %v3509 = vpack.c.bf16 %v3497, %v3497
        %v3510 = vpack.c.bf16 %v3500, %v3500
        %v3511 = vpack.c.bf16 %v3502, %v3502
        %s3512 = scalar_lea.vmem %s222, 224 [#allocation3]
        %3513 = vst.msk [vmem:[%s3512] sm:$0xf] %vm454, %v3504
        %3514 = vst.msk [vmem:[%s3512 + $0x4] sm:$0xf] %vm454, %v3505
        %3515 = vst.msk [vmem:[%s3512 + $0x8] sm:$0xf] %vm454, %v3506
        %3516 = vst.msk [vmem:[%s3512 + $0xc] sm:$0xf] %vm454, %v3507
        %3517 = vst.msk [vmem:[%s3512 + $0x10] sm:$0xf] %vm454, %v3508
        %3518 = vst.msk [vmem:[%s3512 + $0x14] sm:$0xf] %vm454, %v3509
        %3519 = vst.msk [vmem:[%s3512 + $0x18] sm:$0xf] %vm454, %v3510
        %3520 = vst.msk [vmem:[%s3512 + $0x1c] sm:$0xf] %vm454, %v3511
        %s3521 = sand.u32 %s108, 1
        %s3522 = sand.u32 %s108, 1
        %s3523 = smul.addr %s3522, 256
        %s3524 = scalar_lea.vmem [#allocation2], %s3523
        %s3525 = sand.u32 %s136, 1
        %s3526 = sand.u32 %s136, 1
        %s3527 = smul.addr %s3526, 256
        %s3528 = scalar_lea.vmem [#allocation3], %s3527
        // Predicated region
        $region33: #{tpu_custom_call.1} parent=31 // pred_check
          %p3529 = pneg %p118
        $region34: #{tpu_custom_call.1} parent=31 // pred_check_branch
          %3531 = sbr.rel (%p3529) target = $region36
        $region35: #{tpu_custom_call.1} parent=31 // pred_region
          %s3532 = smul.u32 8, %s21
          %s3533 = smul.addr %s20, 128
          %s3534 = sadd.s32 %s3532, %s3533
          %s3535 = smul.addr %s3534, 4
          %s3536 = scalar_lea.vmem %s3, %s3535
          // Predicated region
          $region37: #{tpu_custom_call.1} parent=35 // pred_check
            _
          $region38: #{tpu_custom_call.1} parent=35 // pred_check_branch
            %3538 = sbr.rel (0) target = $region40
          $region39: #{tpu_custom_call.1} parent=35 // pred_region
            // Predicated region
            $region41: #{tpu_custom_call.1} parent=39 // pred_check
              _
            $region42: #{tpu_custom_call.1} parent=39 // pred_check_branch
              %3540 = sbr.rel target = $region44
            $region43: #{tpu_custom_call.1} parent=39 // pred_region
              // Predicated region
              $region56: #{tpu_custom_call.1} parent=43 // pred_check
                _
              $region57: #{tpu_custom_call.1} parent=43 // pred_check_branch
                %3682 = sbr.rel (0) target = $region59
              $region58: #{tpu_custom_call.1} parent=43 // pred_region
                loop: start=0, step=1, limit=1
                $region60: #{tpu_custom_call.1} parent=58 // loop_pre_header
                  _
                $region61: #{tpu_custom_call.1} parent=58 // loop_header
                  %s3684 = sphi 0, %s3688
                  %p3685 = scmp.ge.s32.totalorder %s3684, 1
                  %s3689 = sphi %s3524, %s3524
                  %s3690 = sphi %s3536, %s3536
                $region62: #{tpu_custom_call.1} parent=58 // loop_header_branch
                  %3687 = sbr.rel (%p3685) target = $region66
                $region63: #{tpu_custom_call.1} parent=58 // loop_body
                  _
                $region64: #{tpu_custom_call.1} parent=58 // loop_footer
                  %s3688 = sadd.s32 1, %s3684
                $region65: #{tpu_custom_call.1} parent=58 // loop_footer_branch
                  %3683 = sbr.rel target = $region61
                $region66: #{tpu_custom_call.1} parent=58 // loop_exit
                  _
                %s3692 = ssub.s32 16, 1
                loop: start=0, step=1, limit=1
                $region67: #{tpu_custom_call.1} parent=58 // loop_pre_header
                  _
                $region68: #{tpu_custom_call.1} parent=58 // loop_header
                  %s3694 = sphi 0, %s3698
                  %p3695 = scmp.ge.s32.totalorder %s3694, 1
                  %s3699 = sphi %s3524, %s3524
                  %s3700 = sphi %s3536, %s3536
                $region69: #{tpu_custom_call.1} parent=58 // loop_header_branch
                  %3697 = sbr.rel (%p3695) target = $region73
                $region70: #{tpu_custom_call.1} parent=58 // loop_body
                  %v3701 = vld [vmem:[%s3699] sm:%s3692]
                  %3702 = vst [vmem:[%s3700] sm:%s3692] %v3701
                  %v3703 = vld [vmem:[%s3699 + $0x4] sm:%s3692]
                  %3704 = vst [vmem:[%s3700 + $0x4] sm:%s3692] %v3703
                  %v3705 = vld [vmem:[%s3699 + $0x8] sm:%s3692]
                  %3706 = vst [vmem:[%s3700 + $0x8] sm:%s3692] %v3705
                  %v3707 = vld [vmem:[%s3699 + $0xc] sm:%s3692]
                  %3708 = vst [vmem:[%s3700 + $0xc] sm:%s3692] %v3707
                  %v3709 = vld [vmem:[%s3699 + $0x10] sm:%s3692]
                  %3710 = vst [vmem:[%s3700 + $0x10] sm:%s3692] %v3709
                  %v3711 = vld [vmem:[%s3699 + $0x14] sm:%s3692]
                  %3712 = vst [vmem:[%s3700 + $0x14] sm:%s3692] %v3711
                  %v3713 = vld [vmem:[%s3699 + $0x18] sm:%s3692]
                  %3714 = vst [vmem:[%s3700 + $0x18] sm:%s3692] %v3713
                  %v3715 = vld [vmem:[%s3699 + $0x1c] sm:%s3692]
                  %3716 = vst [vmem:[%s3700 + $0x1c] sm:%s3692] %v3715
                  %v3717 = vld [vmem:[%s3699 + $0x20] sm:%s3692]
                  %3718 = vst [vmem:[%s3700 + $0x40] sm:%s3692] %v3717
                  %v3719 = vld [vmem:[%s3699 + $0x24] sm:%s3692]
                  %3720 = vst [vmem:[%s3700 + $0x44] sm:%s3692] %v3719
                  %v3721 = vld [vmem:[%s3699 + $0x28] sm:%s3692]
                  %3722 = vst [vmem:[%s3700 + $0x48] sm:%s3692] %v3721
                  %v3723 = vld [vmem:[%s3699 + $0x2c] sm:%s3692]
                  %3724 = vst [vmem:[%s3700 + $0x4c] sm:%s3692] %v3723
                  %v3725 = vld [vmem:[%s3699 + $0x30] sm:%s3692]
                  %3726 = vst [vmem:[%s3700 + $0x50] sm:%s3692] %v3725
                  %v3727 = vld [vmem:[%s3699 + $0x34] sm:%s3692]
                  %3728 = vst [vmem:[%s3700 + $0x54] sm:%s3692] %v3727
                  %v3729 = vld [vmem:[%s3699 + $0x38] sm:%s3692]
                  %3730 = vst [vmem:[%s3700 + $0x58] sm:%s3692] %v3729
                  %v3731 = vld [vmem:[%s3699 + $0x3c] sm:%s3692]
                  %3732 = vst [vmem:[%s3700 + $0x5c] sm:%s3692] %v3731
                  %v3733 = vld [vmem:[%s3699 + $0x40] sm:%s3692]
                  %3734 = vst [vmem:[%s3700 + $0x80] sm:%s3692] %v3733
                  %v3735 = vld [vmem:[%s3699 + $0x44] sm:%s3692]
                  %3736 = vst [vmem:[%s3700 + $0x84] sm:%s3692] %v3735
                  %v3737 = vld [vmem:[%s3699 + $0x48] sm:%s3692]
                  %3738 = vst [vmem:[%s3700 + $0x88] sm:%s3692] %v3737
                  %v3739 = vld [vmem:[%s3699 + $0x4c] sm:%s3692]
                  %3740 = vst [vmem:[%s3700 + $0x8c] sm:%s3692] %v3739
                  %v3741 = vld [vmem:[%s3699 + $0x50] sm:%s3692]
                  %3742 = vst [vmem:[%s3700 + $0x90] sm:%s3692] %v3741
                  %v3743 = vld [vmem:[%s3699 + $0x54] sm:%s3692]
                  %3744 = vst [vmem:[%s3700 + $0x94] sm:%s3692] %v3743
                  %v3745 = vld [vmem:[%s3699 + $0x58] sm:%s3692]
                  %3746 = vst [vmem:[%s3700 + $0x98] sm:%s3692] %v3745
                  %v3747 = vld [vmem:[%s3699 + $0x5c] sm:%s3692]
                  %3748 = vst [vmem:[%s3700 + $0x9c] sm:%s3692] %v3747
                  %v3749 = vld [vmem:[%s3699 + $0x60] sm:%s3692]
                  %3750 = vst [vmem:[%s3700 + $0xc0] sm:%s3692] %v3749
                  %v3751 = vld [vmem:[%s3699 + $0x64] sm:%s3692]
                  %3752 = vst [vmem:[%s3700 + $0xc4] sm:%s3692] %v3751
                  %v3753 = vld [vmem:[%s3699 + $0x68] sm:%s3692]
                  %3754 = vst [vmem:[%s3700 + $0xc8] sm:%s3692] %v3753
                  %v3755 = vld [vmem:[%s3699 + $0x6c] sm:%s3692]
                  %3756 = vst [vmem:[%s3700 + $0xcc] sm:%s3692] %v3755
                  %v3757 = vld [vmem:[%s3699 + $0x70] sm:%s3692]
                  %3758 = vst [vmem:[%s3700 + $0xd0] sm:%s3692] %v3757
                  %v3759 = vld [vmem:[%s3699 + $0x74] sm:%s3692]
                  %3760 = vst [vmem:[%s3700 + $0xd4] sm:%s3692] %v3759
                  %v3761 = vld [vmem:[%s3699 + $0x78] sm:%s3692]
                  %3762 = vst [vmem:[%s3700 + $0xd8] sm:%s3692] %v3761
                  %v3763 = vld [vmem:[%s3699 + $0x7c] sm:%s3692]
                  %3764 = vst [vmem:[%s3700 + $0xdc] sm:%s3692] %v3763
                  %v3765 = vld [vmem:[%s3699 + $0x80] sm:%s3692]
                  %3766 = vst [vmem:[%s3700 + $0x100] sm:%s3692] %v3765
                  %v3767 = vld [vmem:[%s3699 + $0x84] sm:%s3692]
                  %3768 = vst [vmem:[%s3700 + $0x104] sm:%s3692] %v3767
                  %v3769 = vld [vmem:[%s3699 + $0x88] sm:%s3692]
                  %3770 = vst [vmem:[%s3700 + $0x108] sm:%s3692] %v3769
                  %v3771 = vld [vmem:[%s3699 + $0x8c] sm:%s3692]
                  %3772 = vst [vmem:[%s3700 + $0x10c] sm:%s3692] %v3771
                  %v3773 = vld [vmem:[%s3699 + $0x90] sm:%s3692]
                  %3774 = vst [vmem:[%s3700 + $0x110] sm:%s3692] %v3773
                  %v3775 = vld [vmem:[%s3699 + $0x94] sm:%s3692]
                  %3776 = vst [vmem:[%s3700 + $0x114] sm:%s3692] %v3775
                  %v3777 = vld [vmem:[%s3699 + $0x98] sm:%s3692]
                  %3778 = vst [vmem:[%s3700 + $0x118] sm:%s3692] %v3777
                  %v3779 = vld [vmem:[%s3699 + $0x9c] sm:%s3692]
                  %3780 = vst [vmem:[%s3700 + $0x11c] sm:%s3692] %v3779
                  %v3781 = vld [vmem:[%s3699 + $0xa0] sm:%s3692]
                  %3782 = vst [vmem:[%s3700 + $0x140] sm:%s3692] %v3781
                  %v3783 = vld [vmem:[%s3699 + $0xa4] sm:%s3692]
                  %3784 = vst [vmem:[%s3700 + $0x144] sm:%s3692] %v3783
                  %v3785 = vld [vmem:[%s3699 + $0xa8] sm:%s3692]
                  %3786 = vst [vmem:[%s3700 + $0x148] sm:%s3692] %v3785
                  %v3787 = vld [vmem:[%s3699 + $0xac] sm:%s3692]
                  %3788 = vst [vmem:[%s3700 + $0x14c] sm:%s3692] %v3787
                  %v3789 = vld [vmem:[%s3699 + $0xb0] sm:%s3692]
                  %3790 = vst [vmem:[%s3700 + $0x150] sm:%s3692] %v3789
                  %v3791 = vld [vmem:[%s3699 + $0xb4] sm:%s3692]
                  %3792 = vst [vmem:[%s3700 + $0x154] sm:%s3692] %v3791
                  %v3793 = vld [vmem:[%s3699 + $0xb8] sm:%s3692]
                  %3794 = vst [vmem:[%s3700 + $0x158] sm:%s3692] %v3793
                  %v3795 = vld [vmem:[%s3699 + $0xbc] sm:%s3692]
                  %3796 = vst [vmem:[%s3700 + $0x15c] sm:%s3692] %v3795
                  %v3797 = vld [vmem:[%s3699 + $0xc0] sm:%s3692]
                  %3798 = vst [vmem:[%s3700 + $0x180] sm:%s3692] %v3797
                  %v3799 = vld [vmem:[%s3699 + $0xc4] sm:%s3692]
                  %3800 = vst [vmem:[%s3700 + $0x184] sm:%s3692] %v3799
                  %v3801 = vld [vmem:[%s3699 + $0xc8] sm:%s3692]
                  %3802 = vst [vmem:[%s3700 + $0x188] sm:%s3692] %v3801
                  %v3803 = vld [vmem:[%s3699 + $0xcc] sm:%s3692]
                  %3804 = vst [vmem:[%s3700 + $0x18c] sm:%s3692] %v3803
                  %v3805 = vld [vmem:[%s3699 + $0xd0] sm:%s3692]
                  %3806 = vst [vmem:[%s3700 + $0x190] sm:%s3692] %v3805
                  %v3807 = vld [vmem:[%s3699 + $0xd4] sm:%s3692]
                  %3808 = vst [vmem:[%s3700 + $0x194] sm:%s3692] %v3807
                  %v3809 = vld [vmem:[%s3699 + $0xd8] sm:%s3692]
                  %3810 = vst [vmem:[%s3700 + $0x198] sm:%s3692] %v3809
                  %v3811 = vld [vmem:[%s3699 + $0xdc] sm:%s3692]
                  %3812 = vst [vmem:[%s3700 + $0x19c] sm:%s3692] %v3811
                  %v3813 = vld [vmem:[%s3699 + $0xe0] sm:%s3692]
                  %3814 = vst [vmem:[%s3700 + $0x1c0] sm:%s3692] %v3813
                  %v3815 = vld [vmem:[%s3699 + $0xe4] sm:%s3692]
                  %3816 = vst [vmem:[%s3700 + $0x1c4] sm:%s3692] %v3815
                  %v3817 = vld [vmem:[%s3699 + $0xe8] sm:%s3692]
                  %3818 = vst [vmem:[%s3700 + $0x1c8] sm:%s3692] %v3817
                  %v3819 = vld [vmem:[%s3699 + $0xec] sm:%s3692]
                  %3820 = vst [vmem:[%s3700 + $0x1cc] sm:%s3692] %v3819
                  %v3821 = vld [vmem:[%s3699 + $0xf0] sm:%s3692]
                  %3822 = vst [vmem:[%s3700 + $0x1d0] sm:%s3692] %v3821
                  %v3823 = vld [vmem:[%s3699 + $0xf4] sm:%s3692]
                  %3824 = vst [vmem:[%s3700 + $0x1d4] sm:%s3692] %v3823
                  %v3825 = vld [vmem:[%s3699 + $0xf8] sm:%s3692]
                  %3826 = vst [vmem:[%s3700 + $0x1d8] sm:%s3692] %v3825
                  %v3827 = vld [vmem:[%s3699 + $0xfc] sm:%s3692]
                  %3828 = vst [vmem:[%s3700 + $0x1dc] sm:%s3692] %v3827
                $region71: #{tpu_custom_call.1} parent=58 // loop_footer
                  %s3698 = sadd.s32 1, %s3694
                $region72: #{tpu_custom_call.1} parent=58 // loop_footer_branch
                  %3693 = sbr.rel target = $region68
                $region73: #{tpu_custom_call.1} parent=58 // loop_exit
                  _
              $region59: #{tpu_custom_call.1} parent=43 // pred_fallthru
                _
            $region44: #{tpu_custom_call.1} parent=39 // pred_fallthru
              _
            // Predicated region
            $region45: #{tpu_custom_call.1} parent=39 // pred_check
              _
            $region46: #{tpu_custom_call.1} parent=39 // pred_check_branch
              %3542 = sbr.rel (0) target = $region48
            $region47: #{tpu_custom_call.1} parent=39 // pred_region
              %s3544 = ssub.s32 16, 1
              loop: start=0, step=1, limit=1
              $region49: #{tpu_custom_call.1} parent=47 // loop_pre_header
                _
              $region50: #{tpu_custom_call.1} parent=47 // loop_header
                %s3546 = sphi 0, %s3550
                %p3547 = scmp.ge.s32.totalorder %s3546, 1
                %s3551 = sphi %s3524, %s3524
                %s3552 = sphi %s3536, %s3536
              $region51: #{tpu_custom_call.1} parent=47 // loop_header_branch
                %3549 = sbr.rel (%p3547) target = $region55
              $region52: #{tpu_custom_call.1} parent=47 // loop_body
                %v3553 = vld [vmem:[%s3551] sm:%s3544]
                %3554 = vst [vmem:[%s3552] sm:%s3544] %v3553
                %v3555 = vld [vmem:[%s3551 + $0x4] sm:%s3544]
                %3556 = vst [vmem:[%s3552 + $0x4] sm:%s3544] %v3555
                %v3557 = vld [vmem:[%s3551 + $0x8] sm:%s3544]
                %3558 = vst [vmem:[%s3552 + $0x8] sm:%s3544] %v3557
                %v3559 = vld [vmem:[%s3551 + $0xc] sm:%s3544]
                %3560 = vst [vmem:[%s3552 + $0xc] sm:%s3544] %v3559
                %v3561 = vld [vmem:[%s3551 + $0x10] sm:%s3544]
                %3562 = vst [vmem:[%s3552 + $0x10] sm:%s3544] %v3561
                %v3563 = vld [vmem:[%s3551 + $0x14] sm:%s3544]
                %3564 = vst [vmem:[%s3552 + $0x14] sm:%s3544] %v3563
                %v3565 = vld [vmem:[%s3551 + $0x18] sm:%s3544]
                %3566 = vst [vmem:[%s3552 + $0x18] sm:%s3544] %v3565
                %v3567 = vld [vmem:[%s3551 + $0x1c] sm:%s3544]
                %3568 = vst [vmem:[%s3552 + $0x1c] sm:%s3544] %v3567
                %v3569 = vld [vmem:[%s3551 + $0x20] sm:%s3544]
                %3570 = vst [vmem:[%s3552 + $0x40] sm:%s3544] %v3569
                %v3571 = vld [vmem:[%s3551 + $0x24] sm:%s3544]
                %3572 = vst [vmem:[%s3552 + $0x44] sm:%s3544] %v3571
                %v3573 = vld [vmem:[%s3551 + $0x28] sm:%s3544]
                %3574 = vst [vmem:[%s3552 + $0x48] sm:%s3544] %v3573
                %v3575 = vld [vmem:[%s3551 + $0x2c] sm:%s3544]
                %3576 = vst [vmem:[%s3552 + $0x4c] sm:%s3544] %v3575
                %v3577 = vld [vmem:[%s3551 + $0x30] sm:%s3544]
                %3578 = vst [vmem:[%s3552 + $0x50] sm:%s3544] %v3577
                %v3579 = vld [vmem:[%s3551 + $0x34] sm:%s3544]
                %3580 = vst [vmem:[%s3552 + $0x54] sm:%s3544] %v3579
                %v3581 = vld [vmem:[%s3551 + $0x38] sm:%s3544]
                %3582 = vst [vmem:[%s3552 + $0x58] sm:%s3544] %v3581
                %v3583 = vld [vmem:[%s3551 + $0x3c] sm:%s3544]
                %3584 = vst [vmem:[%s3552 + $0x5c] sm:%s3544] %v3583
                %v3585 = vld [vmem:[%s3551 + $0x40] sm:%s3544]
                %3586 = vst [vmem:[%s3552 + $0x80] sm:%s3544] %v3585
                %v3587 = vld [vmem:[%s3551 + $0x44] sm:%s3544]
                %3588 = vst [vmem:[%s3552 + $0x84] sm:%s3544] %v3587
                %v3589 = vld [vmem:[%s3551 + $0x48] sm:%s3544]
                %3590 = vst [vmem:[%s3552 + $0x88] sm:%s3544] %v3589
                %v3591 = vld [vmem:[%s3551 + $0x4c] sm:%s3544]
                %3592 = vst [vmem:[%s3552 + $0x8c] sm:%s3544] %v3591
                %v3593 = vld [vmem:[%s3551 + $0x50] sm:%s3544]
                %3594 = vst [vmem:[%s3552 + $0x90] sm:%s3544] %v3593
                %v3595 = vld [vmem:[%s3551 + $0x54] sm:%s3544]
                %3596 = vst [vmem:[%s3552 + $0x94] sm:%s3544] %v3595
                %v3597 = vld [vmem:[%s3551 + $0x58] sm:%s3544]
                %3598 = vst [vmem:[%s3552 + $0x98] sm:%s3544] %v3597
                %v3599 = vld [vmem:[%s3551 + $0x5c] sm:%s3544]
                %3600 = vst [vmem:[%s3552 + $0x9c] sm:%s3544] %v3599
                %v3601 = vld [vmem:[%s3551 + $0x60] sm:%s3544]
                %3602 = vst [vmem:[%s3552 + $0xc0] sm:%s3544] %v3601
                %v3603 = vld [vmem:[%s3551 + $0x64] sm:%s3544]
                %3604 = vst [vmem:[%s3552 + $0xc4] sm:%s3544] %v3603
                %v3605 = vld [vmem:[%s3551 + $0x68] sm:%s3544]
                %3606 = vst [vmem:[%s3552 + $0xc8] sm:%s3544] %v3605
                %v3607 = vld [vmem:[%s3551 + $0x6c] sm:%s3544]
                %3608 = vst [vmem:[%s3552 + $0xcc] sm:%s3544] %v3607
                %v3609 = vld [vmem:[%s3551 + $0x70] sm:%s3544]
                %3610 = vst [vmem:[%s3552 + $0xd0] sm:%s3544] %v3609
                %v3611 = vld [vmem:[%s3551 + $0x74] sm:%s3544]
                %3612 = vst [vmem:[%s3552 + $0xd4] sm:%s3544] %v3611
                %v3613 = vld [vmem:[%s3551 + $0x78] sm:%s3544]
                %3614 = vst [vmem:[%s3552 + $0xd8] sm:%s3544] %v3613
                %v3615 = vld [vmem:[%s3551 + $0x7c] sm:%s3544]
                %3616 = vst [vmem:[%s3552 + $0xdc] sm:%s3544] %v3615
                %v3617 = vld [vmem:[%s3551 + $0x80] sm:%s3544]
                %3618 = vst [vmem:[%s3552 + $0x100] sm:%s3544] %v3617
                %v3619 = vld [vmem:[%s3551 + $0x84] sm:%s3544]
                %3620 = vst [vmem:[%s3552 + $0x104] sm:%s3544] %v3619
                %v3621 = vld [vmem:[%s3551 + $0x88] sm:%s3544]
                %3622 = vst [vmem:[%s3552 + $0x108] sm:%s3544] %v3621
                %v3623 = vld [vmem:[%s3551 + $0x8c] sm:%s3544]
                %3624 = vst [vmem:[%s3552 + $0x10c] sm:%s3544] %v3623
                %v3625 = vld [vmem:[%s3551 + $0x90] sm:%s3544]
                %3626 = vst [vmem:[%s3552 + $0x110] sm:%s3544] %v3625
                %v3627 = vld [vmem:[%s3551 + $0x94] sm:%s3544]
                %3628 = vst [vmem:[%s3552 + $0x114] sm:%s3544] %v3627
                %v3629 = vld [vmem:[%s3551 + $0x98] sm:%s3544]
                %3630 = vst [vmem:[%s3552 + $0x118] sm:%s3544] %v3629
                %v3631 = vld [vmem:[%s3551 + $0x9c] sm:%s3544]
                %3632 = vst [vmem:[%s3552 + $0x11c] sm:%s3544] %v3631
                %v3633 = vld [vmem:[%s3551 + $0xa0] sm:%s3544]
                %3634 = vst [vmem:[%s3552 + $0x140] sm:%s3544] %v3633
                %v3635 = vld [vmem:[%s3551 + $0xa4] sm:%s3544]
                %3636 = vst [vmem:[%s3552 + $0x144] sm:%s3544] %v3635
                %v3637 = vld [vmem:[%s3551 + $0xa8] sm:%s3544]
                %3638 = vst [vmem:[%s3552 + $0x148] sm:%s3544] %v3637
                %v3639 = vld [vmem:[%s3551 + $0xac] sm:%s3544]
                %3640 = vst [vmem:[%s3552 + $0x14c] sm:%s3544] %v3639
                %v3641 = vld [vmem:[%s3551 + $0xb0] sm:%s3544]
                %3642 = vst [vmem:[%s3552 + $0x150] sm:%s3544] %v3641
                %v3643 = vld [vmem:[%s3551 + $0xb4] sm:%s3544]
                %3644 = vst [vmem:[%s3552 + $0x154] sm:%s3544] %v3643
                %v3645 = vld [vmem:[%s3551 + $0xb8] sm:%s3544]
                %3646 = vst [vmem:[%s3552 + $0x158] sm:%s3544] %v3645
                %v3647 = vld [vmem:[%s3551 + $0xbc] sm:%s3544]
                %3648 = vst [vmem:[%s3552 + $0x15c] sm:%s3544] %v3647
                %v3649 = vld [vmem:[%s3551 + $0xc0] sm:%s3544]
                %3650 = vst [vmem:[%s3552 + $0x180] sm:%s3544] %v3649
                %v3651 = vld [vmem:[%s3551 + $0xc4] sm:%s3544]
                %3652 = vst [vmem:[%s3552 + $0x184] sm:%s3544] %v3651
                %v3653 = vld [vmem:[%s3551 + $0xc8] sm:%s3544]
                %3654 = vst [vmem:[%s3552 + $0x188] sm:%s3544] %v3653
                %v3655 = vld [vmem:[%s3551 + $0xcc] sm:%s3544]
                %3656 = vst [vmem:[%s3552 + $0x18c] sm:%s3544] %v3655
                %v3657 = vld [vmem:[%s3551 + $0xd0] sm:%s3544]
                %3658 = vst [vmem:[%s3552 + $0x190] sm:%s3544] %v3657
                %v3659 = vld [vmem:[%s3551 + $0xd4] sm:%s3544]
                %3660 = vst [vmem:[%s3552 + $0x194] sm:%s3544] %v3659
                %v3661 = vld [vmem:[%s3551 + $0xd8] sm:%s3544]
                %3662 = vst [vmem:[%s3552 + $0x198] sm:%s3544] %v3661
                %v3663 = vld [vmem:[%s3551 + $0xdc] sm:%s3544]
                %3664 = vst [vmem:[%s3552 + $0x19c] sm:%s3544] %v3663
                %v3665 = vld [vmem:[%s3551 + $0xe0] sm:%s3544]
                %3666 = vst [vmem:[%s3552 + $0x1c0] sm:%s3544] %v3665
                %v3667 = vld [vmem:[%s3551 + $0xe4] sm:%s3544]
                %3668 = vst [vmem:[%s3552 + $0x1c4] sm:%s3544] %v3667
                %v3669 = vld [vmem:[%s3551 + $0xe8] sm:%s3544]
                %3670 = vst [vmem:[%s3552 + $0x1c8] sm:%s3544] %v3669
                %v3671 = vld [vmem:[%s3551 + $0xec] sm:%s3544]
                %3672 = vst [vmem:[%s3552 + $0x1cc] sm:%s3544] %v3671
                %v3673 = vld [vmem:[%s3551 + $0xf0] sm:%s3544]
                %3674 = vst [vmem:[%s3552 + $0x1d0] sm:%s3544] %v3673
                %v3675 = vld [vmem:[%s3551 + $0xf4] sm:%s3544]
                %3676 = vst [vmem:[%s3552 + $0x1d4] sm:%s3544] %v3675
                %v3677 = vld [vmem:[%s3551 + $0xf8] sm:%s3544]
                %3678 = vst [vmem:[%s3552 + $0x1d8] sm:%s3544] %v3677
                %v3679 = vld [vmem:[%s3551 + $0xfc] sm:%s3544]
                %3680 = vst [vmem:[%s3552 + $0x1dc] sm:%s3544] %v3679
              $region53: #{tpu_custom_call.1} parent=47 // loop_footer
                %s3550 = sadd.s32 1, %s3546
              $region54: #{tpu_custom_call.1} parent=47 // loop_footer_branch
                %3545 = sbr.rel target = $region50
              $region55: #{tpu_custom_call.1} parent=47 // loop_exit
                _
            $region48: #{tpu_custom_call.1} parent=39 // pred_fallthru
              _
          $region40: #{tpu_custom_call.1} parent=35 // pred_fallthru
            _
          %3829 = vnop
        $region36: #{tpu_custom_call.1} parent=31 // pred_fallthru
          _
        // Predicated region
        $region74: #{tpu_custom_call.1} parent=31 // pred_check
          %p3830 = pneg %p146
        $region75: #{tpu_custom_call.1} parent=31 // pred_check_branch
          %3832 = sbr.rel (%p3830) target = $region77
        $region76: #{tpu_custom_call.1} parent=31 // pred_region
          %s3833 = smul.u32 8, %s21
          %s3834 = smul.addr %s20, 128
          %s3835 = sadd.s32 %s3833, %s3834
          %s3836 = smul.addr %s3835, 4
          %s3837 = scalar_lea.vmem %s4, %s3836
          // Predicated region
          $region78: #{tpu_custom_call.1} parent=76 // pred_check
            _
          $region79: #{tpu_custom_call.1} parent=76 // pred_check_branch
            %3839 = sbr.rel (0) target = $region81
          $region80: #{tpu_custom_call.1} parent=76 // pred_region
            // Predicated region
            $region82: #{tpu_custom_call.1} parent=80 // pred_check
              _
            $region83: #{tpu_custom_call.1} parent=80 // pred_check_branch
              %3841 = sbr.rel target = $region85
            $region84: #{tpu_custom_call.1} parent=80 // pred_region
              // Predicated region
              $region97: #{tpu_custom_call.1} parent=84 // pred_check
                _
              $region98: #{tpu_custom_call.1} parent=84 // pred_check_branch
                %3983 = sbr.rel (0) target = $region100
              $region99: #{tpu_custom_call.1} parent=84 // pred_region
                loop: start=0, step=1, limit=1
                $region101: #{tpu_custom_call.1} parent=99 // loop_pre_header
                  _
                $region102: #{tpu_custom_call.1} parent=99 // loop_header
                  %s3985 = sphi 0, %s3989
                  %p3986 = scmp.ge.s32.totalorder %s3985, 1
                  %s3990 = sphi %s3528, %s3528
                  %s3991 = sphi %s3837, %s3837
                $region103: #{tpu_custom_call.1} parent=99 // loop_header_branch
                  %3988 = sbr.rel (%p3986) target = $region107
                $region104: #{tpu_custom_call.1} parent=99 // loop_body
                  _
                $region105: #{tpu_custom_call.1} parent=99 // loop_footer
                  %s3989 = sadd.s32 1, %s3985
                $region106: #{tpu_custom_call.1} parent=99 // loop_footer_branch
                  %3984 = sbr.rel target = $region102
                $region107: #{tpu_custom_call.1} parent=99 // loop_exit
                  _
                %s3993 = ssub.s32 16, 1
                loop: start=0, step=1, limit=1
                $region108: #{tpu_custom_call.1} parent=99 // loop_pre_header
                  _
                $region109: #{tpu_custom_call.1} parent=99 // loop_header
                  %s3995 = sphi 0, %s3999
                  %p3996 = scmp.ge.s32.totalorder %s3995, 1
                  %s4000 = sphi %s3528, %s3528
                  %s4001 = sphi %s3837, %s3837
                $region110: #{tpu_custom_call.1} parent=99 // loop_header_branch
                  %3998 = sbr.rel (%p3996) target = $region114
                $region111: #{tpu_custom_call.1} parent=99 // loop_body
                  %v4002 = vld [vmem:[%s4000] sm:%s3993]
                  %4003 = vst [vmem:[%s4001] sm:%s3993] %v4002
                  %v4004 = vld [vmem:[%s4000 + $0x4] sm:%s3993]
                  %4005 = vst [vmem:[%s4001 + $0x4] sm:%s3993] %v4004
                  %v4006 = vld [vmem:[%s4000 + $0x8] sm:%s3993]
                  %4007 = vst [vmem:[%s4001 + $0x8] sm:%s3993] %v4006
                  %v4008 = vld [vmem:[%s4000 + $0xc] sm:%s3993]
                  %4009 = vst [vmem:[%s4001 + $0xc] sm:%s3993] %v4008
                  %v4010 = vld [vmem:[%s4000 + $0x10] sm:%s3993]
                  %4011 = vst [vmem:[%s4001 + $0x10] sm:%s3993] %v4010
                  %v4012 = vld [vmem:[%s4000 + $0x14] sm:%s3993]
                  %4013 = vst [vmem:[%s4001 + $0x14] sm:%s3993] %v4012
                  %v4014 = vld [vmem:[%s4000 + $0x18] sm:%s3993]
                  %4015 = vst [vmem:[%s4001 + $0x18] sm:%s3993] %v4014
                  %v4016 = vld [vmem:[%s4000 + $0x1c] sm:%s3993]
                  %4017 = vst [vmem:[%s4001 + $0x1c] sm:%s3993] %v4016
                  %v4018 = vld [vmem:[%s4000 + $0x20] sm:%s3993]
                  %4019 = vst [vmem:[%s4001 + $0x40] sm:%s3993] %v4018
                  %v4020 = vld [vmem:[%s4000 + $0x24] sm:%s3993]
                  %4021 = vst [vmem:[%s4001 + $0x44] sm:%s3993] %v4020
                  %v4022 = vld [vmem:[%s4000 + $0x28] sm:%s3993]
                  %4023 = vst [vmem:[%s4001 + $0x48] sm:%s3993] %v4022
                  %v4024 = vld [vmem:[%s4000 + $0x2c] sm:%s3993]
                  %4025 = vst [vmem:[%s4001 + $0x4c] sm:%s3993] %v4024
                  %v4026 = vld [vmem:[%s4000 + $0x30] sm:%s3993]
                  %4027 = vst [vmem:[%s4001 + $0x50] sm:%s3993] %v4026
                  %v4028 = vld [vmem:[%s4000 + $0x34] sm:%s3993]
                  %4029 = vst [vmem:[%s4001 + $0x54] sm:%s3993] %v4028
                  %v4030 = vld [vmem:[%s4000 + $0x38] sm:%s3993]
                  %4031 = vst [vmem:[%s4001 + $0x58] sm:%s3993] %v4030
                  %v4032 = vld [vmem:[%s4000 + $0x3c] sm:%s3993]
                  %4033 = vst [vmem:[%s4001 + $0x5c] sm:%s3993] %v4032
                  %v4034 = vld [vmem:[%s4000 + $0x40] sm:%s3993]
                  %4035 = vst [vmem:[%s4001 + $0x80] sm:%s3993] %v4034
                  %v4036 = vld [vmem:[%s4000 + $0x44] sm:%s3993]
                  %4037 = vst [vmem:[%s4001 + $0x84] sm:%s3993] %v4036
                  %v4038 = vld [vmem:[%s4000 + $0x48] sm:%s3993]
                  %4039 = vst [vmem:[%s4001 + $0x88] sm:%s3993] %v4038
                  %v4040 = vld [vmem:[%s4000 + $0x4c] sm:%s3993]
                  %4041 = vst [vmem:[%s4001 + $0x8c] sm:%s3993] %v4040
                  %v4042 = vld [vmem:[%s4000 + $0x50] sm:%s3993]
                  %4043 = vst [vmem:[%s4001 + $0x90] sm:%s3993] %v4042
                  %v4044 = vld [vmem:[%s4000 + $0x54] sm:%s3993]
                  %4045 = vst [vmem:[%s4001 + $0x94] sm:%s3993] %v4044
                  %v4046 = vld [vmem:[%s4000 + $0x58] sm:%s3993]
                  %4047 = vst [vmem:[%s4001 + $0x98] sm:%s3993] %v4046
                  %v4048 = vld [vmem:[%s4000 + $0x5c] sm:%s3993]
                  %4049 = vst [vmem:[%s4001 + $0x9c] sm:%s3993] %v4048
                  %v4050 = vld [vmem:[%s4000 + $0x60] sm:%s3993]
                  %4051 = vst [vmem:[%s4001 + $0xc0] sm:%s3993] %v4050
                  %v4052 = vld [vmem:[%s4000 + $0x64] sm:%s3993]
                  %4053 = vst [vmem:[%s4001 + $0xc4] sm:%s3993] %v4052
                  %v4054 = vld [vmem:[%s4000 + $0x68] sm:%s3993]
                  %4055 = vst [vmem:[%s4001 + $0xc8] sm:%s3993] %v4054
                  %v4056 = vld [vmem:[%s4000 + $0x6c] sm:%s3993]
                  %4057 = vst [vmem:[%s4001 + $0xcc] sm:%s3993] %v4056
                  %v4058 = vld [vmem:[%s4000 + $0x70] sm:%s3993]
                  %4059 = vst [vmem:[%s4001 + $0xd0] sm:%s3993] %v4058
                  %v4060 = vld [vmem:[%s4000 + $0x74] sm:%s3993]
                  %4061 = vst [vmem:[%s4001 + $0xd4] sm:%s3993] %v4060
                  %v4062 = vld [vmem:[%s4000 + $0x78] sm:%s3993]
                  %4063 = vst [vmem:[%s4001 + $0xd8] sm:%s3993] %v4062
                  %v4064 = vld [vmem:[%s4000 + $0x7c] sm:%s3993]
                  %4065 = vst [vmem:[%s4001 + $0xdc] sm:%s3993] %v4064
                  %v4066 = vld [vmem:[%s4000 + $0x80] sm:%s3993]
                  %4067 = vst [vmem:[%s4001 + $0x100] sm:%s3993] %v4066
                  %v4068 = vld [vmem:[%s4000 + $0x84] sm:%s3993]
                  %4069 = vst [vmem:[%s4001 + $0x104] sm:%s3993] %v4068
                  %v4070 = vld [vmem:[%s4000 + $0x88] sm:%s3993]
                  %4071 = vst [vmem:[%s4001 + $0x108] sm:%s3993] %v4070
                  %v4072 = vld [vmem:[%s4000 + $0x8c] sm:%s3993]
                  %4073 = vst [vmem:[%s4001 + $0x10c] sm:%s3993] %v4072
                  %v4074 = vld [vmem:[%s4000 + $0x90] sm:%s3993]
                  %4075 = vst [vmem:[%s4001 + $0x110] sm:%s3993] %v4074
                  %v4076 = vld [vmem:[%s4000 + $0x94] sm:%s3993]
                  %4077 = vst [vmem:[%s4001 + $0x114] sm:%s3993] %v4076
                  %v4078 = vld [vmem:[%s4000 + $0x98] sm:%s3993]
                  %4079 = vst [vmem:[%s4001 + $0x118] sm:%s3993] %v4078
                  %v4080 = vld [vmem:[%s4000 + $0x9c] sm:%s3993]
                  %4081 = vst [vmem:[%s4001 + $0x11c] sm:%s3993] %v4080
                  %v4082 = vld [vmem:[%s4000 + $0xa0] sm:%s3993]
                  %4083 = vst [vmem:[%s4001 + $0x140] sm:%s3993] %v4082
                  %v4084 = vld [vmem:[%s4000 + $0xa4] sm:%s3993]
                  %4085 = vst [vmem:[%s4001 + $0x144] sm:%s3993] %v4084
                  %v4086 = vld [vmem:[%s4000 + $0xa8] sm:%s3993]
                  %4087 = vst [vmem:[%s4001 + $0x148] sm:%s3993] %v4086
                  %v4088 = vld [vmem:[%s4000 + $0xac] sm:%s3993]
                  %4089 = vst [vmem:[%s4001 + $0x14c] sm:%s3993] %v4088
                  %v4090 = vld [vmem:[%s4000 + $0xb0] sm:%s3993]
                  %4091 = vst [vmem:[%s4001 + $0x150] sm:%s3993] %v4090
                  %v4092 = vld [vmem:[%s4000 + $0xb4] sm:%s3993]
                  %4093 = vst [vmem:[%s4001 + $0x154] sm:%s3993] %v4092
                  %v4094 = vld [vmem:[%s4000 + $0xb8] sm:%s3993]
                  %4095 = vst [vmem:[%s4001 + $0x158] sm:%s3993] %v4094
                  %v4096 = vld [vmem:[%s4000 + $0xbc] sm:%s3993]
                  %4097 = vst [vmem:[%s4001 + $0x15c] sm:%s3993] %v4096
                  %v4098 = vld [vmem:[%s4000 + $0xc0] sm:%s3993]
                  %4099 = vst [vmem:[%s4001 + $0x180] sm:%s3993] %v4098
                  %v4100 = vld [vmem:[%s4000 + $0xc4] sm:%s3993]
                  %4101 = vst [vmem:[%s4001 + $0x184] sm:%s3993] %v4100
                  %v4102 = vld [vmem:[%s4000 + $0xc8] sm:%s3993]
                  %4103 = vst [vmem:[%s4001 + $0x188] sm:%s3993] %v4102
                  %v4104 = vld [vmem:[%s4000 + $0xcc] sm:%s3993]
                  %4105 = vst [vmem:[%s4001 + $0x18c] sm:%s3993] %v4104
                  %v4106 = vld [vmem:[%s4000 + $0xd0] sm:%s3993]
                  %4107 = vst [vmem:[%s4001 + $0x190] sm:%s3993] %v4106
                  %v4108 = vld [vmem:[%s4000 + $0xd4] sm:%s3993]
                  %4109 = vst [vmem:[%s4001 + $0x194] sm:%s3993] %v4108
                  %v4110 = vld [vmem:[%s4000 + $0xd8] sm:%s3993]
                  %4111 = vst [vmem:[%s4001 + $0x198] sm:%s3993] %v4110
                  %v4112 = vld [vmem:[%s4000 + $0xdc] sm:%s3993]
                  %4113 = vst [vmem:[%s4001 + $0x19c] sm:%s3993] %v4112
                  %v4114 = vld [vmem:[%s4000 + $0xe0] sm:%s3993]
                  %4115 = vst [vmem:[%s4001 + $0x1c0] sm:%s3993] %v4114
                  %v4116 = vld [vmem:[%s4000 + $0xe4] sm:%s3993]
                  %4117 = vst [vmem:[%s4001 + $0x1c4] sm:%s3993] %v4116
                  %v4118 = vld [vmem:[%s4000 + $0xe8] sm:%s3993]
                  %4119 = vst [vmem:[%s4001 + $0x1c8] sm:%s3993] %v4118
                  %v4120 = vld [vmem:[%s4000 + $0xec] sm:%s3993]
                  %4121 = vst [vmem:[%s4001 + $0x1cc] sm:%s3993] %v4120
                  %v4122 = vld [vmem:[%s4000 + $0xf0] sm:%s3993]
                  %4123 = vst [vmem:[%s4001 + $0x1d0] sm:%s3993] %v4122
                  %v4124 = vld [vmem:[%s4000 + $0xf4] sm:%s3993]
                  %4125 = vst [vmem:[%s4001 + $0x1d4] sm:%s3993] %v4124
                  %v4126 = vld [vmem:[%s4000 + $0xf8] sm:%s3993]
                  %4127 = vst [vmem:[%s4001 + $0x1d8] sm:%s3993] %v4126
                  %v4128 = vld [vmem:[%s4000 + $0xfc] sm:%s3993]
                  %4129 = vst [vmem:[%s4001 + $0x1dc] sm:%s3993] %v4128
                $region112: #{tpu_custom_call.1} parent=99 // loop_footer
                  %s3999 = sadd.s32 1, %s3995
                $region113: #{tpu_custom_call.1} parent=99 // loop_footer_branch
                  %3994 = sbr.rel target = $region109
                $region114: #{tpu_custom_call.1} parent=99 // loop_exit
                  _
              $region100: #{tpu_custom_call.1} parent=84 // pred_fallthru
                _
            $region85: #{tpu_custom_call.1} parent=80 // pred_fallthru
              _
            // Predicated region
            $region86: #{tpu_custom_call.1} parent=80 // pred_check
              _
            $region87: #{tpu_custom_call.1} parent=80 // pred_check_branch
              %3843 = sbr.rel (0) target = $region89
            $region88: #{tpu_custom_call.1} parent=80 // pred_region
              %s3845 = ssub.s32 16, 1
              loop: start=0, step=1, limit=1
              $region90: #{tpu_custom_call.1} parent=88 // loop_pre_header
                _
              $region91: #{tpu_custom_call.1} parent=88 // loop_header
                %s3847 = sphi 0, %s3851
                %p3848 = scmp.ge.s32.totalorder %s3847, 1
                %s3852 = sphi %s3528, %s3528
                %s3853 = sphi %s3837, %s3837
              $region92: #{tpu_custom_call.1} parent=88 // loop_header_branch
                %3850 = sbr.rel (%p3848) target = $region96
              $region93: #{tpu_custom_call.1} parent=88 // loop_body
                %v3854 = vld [vmem:[%s3852] sm:%s3845]
                %3855 = vst [vmem:[%s3853] sm:%s3845] %v3854
                %v3856 = vld [vmem:[%s3852 + $0x4] sm:%s3845]
                %3857 = vst [vmem:[%s3853 + $0x4] sm:%s3845] %v3856
                %v3858 = vld [vmem:[%s3852 + $0x8] sm:%s3845]
                %3859 = vst [vmem:[%s3853 + $0x8] sm:%s3845] %v3858
                %v3860 = vld [vmem:[%s3852 + $0xc] sm:%s3845]
                %3861 = vst [vmem:[%s3853 + $0xc] sm:%s3845] %v3860
                %v3862 = vld [vmem:[%s3852 + $0x10] sm:%s3845]
                %3863 = vst [vmem:[%s3853 + $0x10] sm:%s3845] %v3862
                %v3864 = vld [vmem:[%s3852 + $0x14] sm:%s3845]
                %3865 = vst [vmem:[%s3853 + $0x14] sm:%s3845] %v3864
                %v3866 = vld [vmem:[%s3852 + $0x18] sm:%s3845]
                %3867 = vst [vmem:[%s3853 + $0x18] sm:%s3845] %v3866
                %v3868 = vld [vmem:[%s3852 + $0x1c] sm:%s3845]
                %3869 = vst [vmem:[%s3853 + $0x1c] sm:%s3845] %v3868
                %v3870 = vld [vmem:[%s3852 + $0x20] sm:%s3845]
                %3871 = vst [vmem:[%s3853 + $0x40] sm:%s3845] %v3870
                %v3872 = vld [vmem:[%s3852 + $0x24] sm:%s3845]
                %3873 = vst [vmem:[%s3853 + $0x44] sm:%s3845] %v3872
                %v3874 = vld [vmem:[%s3852 + $0x28] sm:%s3845]
                %3875 = vst [vmem:[%s3853 + $0x48] sm:%s3845] %v3874
                %v3876 = vld [vmem:[%s3852 + $0x2c] sm:%s3845]
                %3877 = vst [vmem:[%s3853 + $0x4c] sm:%s3845] %v3876
                %v3878 = vld [vmem:[%s3852 + $0x30] sm:%s3845]
                %3879 = vst [vmem:[%s3853 + $0x50] sm:%s3845] %v3878
                %v3880 = vld [vmem:[%s3852 + $0x34] sm:%s3845]
                %3881 = vst [vmem:[%s3853 + $0x54] sm:%s3845] %v3880
                %v3882 = vld [vmem:[%s3852 + $0x38] sm:%s3845]
                %3883 = vst [vmem:[%s3853 + $0x58] sm:%s3845] %v3882
                %v3884 = vld [vmem:[%s3852 + $0x3c] sm:%s3845]
                %3885 = vst [vmem:[%s3853 + $0x5c] sm:%s3845] %v3884
                %v3886 = vld [vmem:[%s3852 + $0x40] sm:%s3845]
                %3887 = vst [vmem:[%s3853 + $0x80] sm:%s3845] %v3886
                %v3888 = vld [vmem:[%s3852 + $0x44] sm:%s3845]
                %3889 = vst [vmem:[%s3853 + $0x84] sm:%s3845] %v3888
                %v3890 = vld [vmem:[%s3852 + $0x48] sm:%s3845]
                %3891 = vst [vmem:[%s3853 + $0x88] sm:%s3845] %v3890
                %v3892 = vld [vmem:[%s3852 + $0x4c] sm:%s3845]
                %3893 = vst [vmem:[%s3853 + $0x8c] sm:%s3845] %v3892
                %v3894 = vld [vmem:[%s3852 + $0x50] sm:%s3845]
                %3895 = vst [vmem:[%s3853 + $0x90] sm:%s3845] %v3894
                %v3896 = vld [vmem:[%s3852 + $0x54] sm:%s3845]
                %3897 = vst [vmem:[%s3853 + $0x94] sm:%s3845] %v3896
                %v3898 = vld [vmem:[%s3852 + $0x58] sm:%s3845]
                %3899 = vst [vmem:[%s3853 + $0x98] sm:%s3845] %v3898
                %v3900 = vld [vmem:[%s3852 + $0x5c] sm:%s3845]
                %3901 = vst [vmem:[%s3853 + $0x9c] sm:%s3845] %v3900
                %v3902 = vld [vmem:[%s3852 + $0x60] sm:%s3845]
                %3903 = vst [vmem:[%s3853 + $0xc0] sm:%s3845] %v3902
                %v3904 = vld [vmem:[%s3852 + $0x64] sm:%s3845]
                %3905 = vst [vmem:[%s3853 + $0xc4] sm:%s3845] %v3904
                %v3906 = vld [vmem:[%s3852 + $0x68] sm:%s3845]
                %3907 = vst [vmem:[%s3853 + $0xc8] sm:%s3845] %v3906
                %v3908 = vld [vmem:[%s3852 + $0x6c] sm:%s3845]
                %3909 = vst [vmem:[%s3853 + $0xcc] sm:%s3845] %v3908
                %v3910 = vld [vmem:[%s3852 + $0x70] sm:%s3845]
                %3911 = vst [vmem:[%s3853 + $0xd0] sm:%s3845] %v3910
                %v3912 = vld [vmem:[%s3852 + $0x74] sm:%s3845]
                %3913 = vst [vmem:[%s3853 + $0xd4] sm:%s3845] %v3912
                %v3914 = vld [vmem:[%s3852 + $0x78] sm:%s3845]
                %3915 = vst [vmem:[%s3853 + $0xd8] sm:%s3845] %v3914
                %v3916 = vld [vmem:[%s3852 + $0x7c] sm:%s3845]
                %3917 = vst [vmem:[%s3853 + $0xdc] sm:%s3845] %v3916
                %v3918 = vld [vmem:[%s3852 + $0x80] sm:%s3845]
                %3919 = vst [vmem:[%s3853 + $0x100] sm:%s3845] %v3918
                %v3920 = vld [vmem:[%s3852 + $0x84] sm:%s3845]
                %3921 = vst [vmem:[%s3853 + $0x104] sm:%s3845] %v3920
                %v3922 = vld [vmem:[%s3852 + $0x88] sm:%s3845]
                %3923 = vst [vmem:[%s3853 + $0x108] sm:%s3845] %v3922
                %v3924 = vld [vmem:[%s3852 + $0x8c] sm:%s3845]
                %3925 = vst [vmem:[%s3853 + $0x10c] sm:%s3845] %v3924
                %v3926 = vld [vmem:[%s3852 + $0x90] sm:%s3845]
                %3927 = vst [vmem:[%s3853 + $0x110] sm:%s3845] %v3926
                %v3928 = vld [vmem:[%s3852 + $0x94] sm:%s3845]
                %3929 = vst [vmem:[%s3853 + $0x114] sm:%s3845] %v3928
                %v3930 = vld [vmem:[%s3852 + $0x98] sm:%s3845]
                %3931 = vst [vmem:[%s3853 + $0x118] sm:%s3845] %v3930
                %v3932 = vld [vmem:[%s3852 + $0x9c] sm:%s3845]
                %3933 = vst [vmem:[%s3853 + $0x11c] sm:%s3845] %v3932
                %v3934 = vld [vmem:[%s3852 + $0xa0] sm:%s3845]
                %3935 = vst [vmem:[%s3853 + $0x140] sm:%s3845] %v3934
                %v3936 = vld [vmem:[%s3852 + $0xa4] sm:%s3845]
                %3937 = vst [vmem:[%s3853 + $0x144] sm:%s3845] %v3936
                %v3938 = vld [vmem:[%s3852 + $0xa8] sm:%s3845]
                %3939 = vst [vmem:[%s3853 + $0x148] sm:%s3845] %v3938
                %v3940 = vld [vmem:[%s3852 + $0xac] sm:%s3845]
                %3941 = vst [vmem:[%s3853 + $0x14c] sm:%s3845] %v3940
                %v3942 = vld [vmem:[%s3852 + $0xb0] sm:%s3845]
                %3943 = vst [vmem:[%s3853 + $0x150] sm:%s3845] %v3942
                %v3944 = vld [vmem:[%s3852 + $0xb4] sm:%s3845]
                %3945 = vst [vmem:[%s3853 + $0x154] sm:%s3845] %v3944
                %v3946 = vld [vmem:[%s3852 + $0xb8] sm:%s3845]
                %3947 = vst [vmem:[%s3853 + $0x158] sm:%s3845] %v3946
                %v3948 = vld [vmem:[%s3852 + $0xbc] sm:%s3845]
                %3949 = vst [vmem:[%s3853 + $0x15c] sm:%s3845] %v3948
                %v3950 = vld [vmem:[%s3852 + $0xc0] sm:%s3845]
                %3951 = vst [vmem:[%s3853 + $0x180] sm:%s3845] %v3950
                %v3952 = vld [vmem:[%s3852 + $0xc4] sm:%s3845]
                %3953 = vst [vmem:[%s3853 + $0x184] sm:%s3845] %v3952
                %v3954 = vld [vmem:[%s3852 + $0xc8] sm:%s3845]
                %3955 = vst [vmem:[%s3853 + $0x188] sm:%s3845] %v3954
                %v3956 = vld [vmem:[%s3852 + $0xcc] sm:%s3845]
                %3957 = vst [vmem:[%s3853 + $0x18c] sm:%s3845] %v3956
                %v3958 = vld [vmem:[%s3852 + $0xd0] sm:%s3845]
                %3959 = vst [vmem:[%s3853 + $0x190] sm:%s3845] %v3958
                %v3960 = vld [vmem:[%s3852 + $0xd4] sm:%s3845]
                %3961 = vst [vmem:[%s3853 + $0x194] sm:%s3845] %v3960
                %v3962 = vld [vmem:[%s3852 + $0xd8] sm:%s3845]
                %3963 = vst [vmem:[%s3853 + $0x198] sm:%s3845] %v3962
                %v3964 = vld [vmem:[%s3852 + $0xdc] sm:%s3845]
                %3965 = vst [vmem:[%s3853 + $0x19c] sm:%s3845] %v3964
                %v3966 = vld [vmem:[%s3852 + $0xe0] sm:%s3845]
                %3967 = vst [vmem:[%s3853 + $0x1c0] sm:%s3845] %v3966
                %v3968 = vld [vmem:[%s3852 + $0xe4] sm:%s3845]
                %3969 = vst [vmem:[%s3853 + $0x1c4] sm:%s3845] %v3968
                %v3970 = vld [vmem:[%s3852 + $0xe8] sm:%s3845]
                %3971 = vst [vmem:[%s3853 + $0x1c8] sm:%s3845] %v3970
                %v3972 = vld [vmem:[%s3852 + $0xec] sm:%s3845]
                %3973 = vst [vmem:[%s3853 + $0x1cc] sm:%s3845] %v3972
                %v3974 = vld [vmem:[%s3852 + $0xf0] sm:%s3845]
                %3975 = vst [vmem:[%s3853 + $0x1d0] sm:%s3845] %v3974
                %v3976 = vld [vmem:[%s3852 + $0xf4] sm:%s3845]
                %3977 = vst [vmem:[%s3853 + $0x1d4] sm:%s3845] %v3976
                %v3978 = vld [vmem:[%s3852 + $0xf8] sm:%s3845]
                %3979 = vst [vmem:[%s3853 + $0x1d8] sm:%s3845] %v3978
                %v3980 = vld [vmem:[%s3852 + $0xfc] sm:%s3845]
                %3981 = vst [vmem:[%s3853 + $0x1dc] sm:%s3845] %v3980
              $region94: #{tpu_custom_call.1} parent=88 // loop_footer
                %s3851 = sadd.s32 1, %s3847
              $region95: #{tpu_custom_call.1} parent=88 // loop_footer_branch
                %3846 = sbr.rel target = $region91
              $region96: #{tpu_custom_call.1} parent=88 // loop_exit
                _
            $region89: #{tpu_custom_call.1} parent=80 // pred_fallthru
              _
          $region81: #{tpu_custom_call.1} parent=76 // pred_fallthru
            _
          %4130 = vnop
        $region77: #{tpu_custom_call.1} parent=31 // pred_fallthru
          _
      $region32: #{tpu_custom_call.1} parent=5 // pred_fallthru
        _
      %p4131 = scmp.le.s32.totalorder 2, %s11
      // Predicated region
      $region115: #{tpu_custom_call.1} parent=5 // pred_check
        %p4132 = pneg %p4131
      $region116: #{tpu_custom_call.1} parent=5 // pred_check_branch
        %4134 = sbr.rel (%p4132) target = $region118
      $region117: #{tpu_custom_call.1} parent=5 // pred_region
        %s4135 = ssub.s32 %s11, 2
        // Predicated region
        $region119: #{tpu_custom_call.1} parent=117 // pred_check
          %p4136 = pneg %p124
        $region120: #{tpu_custom_call.1} parent=117 // pred_check_branch
          %4138 = sbr.rel (%p4136) target = $region122
        $region121: #{tpu_custom_call.1} parent=117 // pred_region
          %s4139 = sand.u32 %s109, 1
          %s4140 = sand.u32 %s109, 1
          %s4141 = smul.addr %s4140, 256
          %s4142 = scalar_lea.vmem [#allocation2], %s4141
        $region122: #{tpu_custom_call.1} parent=117 // pred_fallthru
          _
        // Predicated region
        $region123: #{tpu_custom_call.1} parent=117 // pred_check
          %p4143 = pneg %p152
        $region124: #{tpu_custom_call.1} parent=117 // pred_check_branch
          %4145 = sbr.rel (%p4143) target = $region126
        $region125: #{tpu_custom_call.1} parent=117 // pred_region
          %s4146 = sand.u32 %s137, 1
          %s4147 = sand.u32 %s137, 1
          %s4148 = smul.addr %s4147, 256
          %s4149 = scalar_lea.vmem [#allocation3], %s4148
        $region126: #{tpu_custom_call.1} parent=117 // pred_fallthru
          _
      $region118: #{tpu_custom_call.1} parent=5 // pred_fallthru
        _
    $region6: #{tpu_custom_call.1} parent=1 // loop_footer
      %s15 = sadd.s32 1, %s11
    $region7: #{tpu_custom_call.1} parent=1 // loop_footer_branch
      %10 = sbr.rel target = $region3
    $region8: #{tpu_custom_call.1} parent=1 // loop_exit
      _

</llo_original>
